<compile_context>
chip_gen: v5e
topology: v5e:2x2
jax: 0.10.0
libtpu: 0.0.40
codegen_flags: <defaults>
</compile_context>

<pallas_src>
import math

import numpy as np
import jax
import jax.numpy as jnp
from jax import lax
from jax.experimental import pallas as pl
from jax.experimental.pallas import tpu as pltpu

NEG_SLOPE = 0.2
_NEG = -(2.0 ** 100)   # "minus infinity" exactly representable in bf16 and f32


def _edgegat_kernel(ts_ref, nt_ref,                           # scalar prefetch (SMEM)
                    dst_ref, esrc_ref, edst_ref, eedge_ref,   # per-edge streams
                    hsrc_ref, hedge_ref,                      # per-edge messages (bf16)
                    hdst_ref, expand_ref,                     # per-node-tile / constant
                    out_ref,
                    m_n_sc, den_n_sc, acc_n_sc,
                    m_e_sc, den_e_sc, acc_e_sc):
    f32 = jnp.float32
    bf16 = jnp.bfloat16
    NEG = f32(_NEG)
    slope = f32(NEG_SLOPE)
    hp = lax.Precision.HIGHEST

    H = expand_ref.shape[0]
    E_T = dst_ref.shape[0]
    N_T = out_ref.shape[0]

    n_id = pl.program_id(0)           # dst-node tile  ("parallel" -> megacore on v7x)
    e_id = pl.program_id(1)           # edge tile within this node tile's sorted range

    # ---- per node-tile init of the online-softmax state -----------------------------
    @pl.when(e_id == 0)
    def _init():
        m_n_sc[...] = jnp.full_like(m_n_sc, NEG)
        m_e_sc[...] = jnp.full_like(m_e_sc, NEG)
        den_n_sc[...] = jnp.zeros_like(den_n_sc)
        den_e_sc[...] = jnp.zeros_like(den_e_sc)
        acc_n_sc[...] = jnp.zeros_like(acc_n_sc)
        acc_e_sc[...] = jnp.zeros_like(acc_e_sc)

    # ---- one edge tile of this node tile's dst-sorted range -------------------------
    @pl.when(e_id < nt_ref[n_id])
    def _step():
        expand_f = expand_ref[...]                             # (H, OUT_P) one-hot, f32
        expand_bf = expand_f.astype(bf16)

        # Local dst one-hot built from streamed int32 dst ids (no dense (E,N) incidence).
        dst_local = dst_ref[...] - n_id * N_T                  # (E_T, 1)
        lane = lax.broadcasted_iota(jnp.int32, (E_T, N_T), 1)
        dmask = lane == dst_local                              # (E_T, N_T) bool
        d_bf = dmask.astype(bf16)                              # exact 0/1
        in_tile = (dst_local >= 0) & (dst_local < N_T)         # (E_T, 1)

        def leaky(v):
            return jnp.where(v >= 0, v, slope * v)

        e_dst_e = edst_ref[...]                                # (E_T, H)
        logit_node = leaky(esrc_ref[...] + e_dst_e)            # u_add_v path
        logit_edge = leaky(eedge_ref[...] + e_dst_e)           # e_add_v path

        head_ids = lax.broadcasted_iota(jnp.int32, (H, 1), 0)

        def online_update(logit, values_bf, m_sc, den_sc, acc_sc):
            # Flash-style online edge-softmax + weighted scatter-add for one edge tile.
            m_old = m_sc[...]                                  # (H, N_T)
            m_new = m_old
            for h in range(H):                                 # H is tiny and static
                row_max = jnp.max(jnp.where(dmask, logit[:, h:h + 1], NEG),
                                  axis=0, keepdims=True)       # (1, N_T)
                m_new = jnp.where(head_ids == h,
                                  jnp.maximum(m_new, row_max), m_new)
            # Quantize the shift to bf16 so the one-hot gather below is exact;
            # m_old is already bf16-representable, hence rescale <= 1.
            m_new = m_new.astype(bf16).astype(f32)
            m_sc[...] = m_new
            rescale = jnp.exp(m_old - m_new)                   # (H, N_T)

            shift_e = lax.dot_general(                         # m_new[dst(e)] per head
                d_bf, m_new.astype(bf16),
                dimension_numbers=(((1,), (1,)), ((), ())),
                preferred_element_type=f32)                    # (E_T, H)
            num = jnp.exp(jnp.where(in_tile, logit - shift_e, NEG))   # (E_T, H), bounded
            num_bf = num.astype(bf16)

            # Denominator stays in lane-dense (H, N_T) layout (expanded only at finalize).
            den_tile = lax.dot_general(
                num_bf, d_bf, dimension_numbers=(((0,), (0,)), ((), ())),
                preferred_element_type=f32)                    # (H, N_T)
            den_sc[...] = rescale * den_sc[...] + den_tile

            # Weighted messages: expand per-head numerators over feature columns (MXU),
            # weight, and scatter-add onto destination rows (bf16 MXU, f32 accumulate).
            num_c = jnp.dot(num_bf, expand_bf,
                            preferred_element_type=f32)        # (E_T, OUT_P)
            msg_bf = (num_c * values_bf.astype(f32)).astype(bf16)
            acc_tile = lax.dot_general(
                d_bf, msg_bf, dimension_numbers=(((0,), (0,)), ((), ())),
                preferred_element_type=f32)                    # (N_T, OUT_P)
            rescale_c = lax.dot_general(                       # tiny exact one-hot expand
                rescale, expand_f, dimension_numbers=(((0,), (0,)), ((), ())),
                precision=hp, preferred_element_type=f32)      # (N_T, OUT_P)
            acc_sc[...] = rescale_c * acc_sc[...] + acc_tile

        online_update(logit_node, hsrc_ref[...], m_n_sc, den_n_sc, acc_n_sc)   # aggregate_src
        online_update(logit_edge, hedge_ref[...], m_e_sc, den_e_sc, acc_e_sc)  # aggregate_edge

    # ---- finalize: normalize and add the destination residual -----------------------
    @pl.when(e_id == pl.num_programs(1) - 1)
    def _finalize():
        expand_f = expand_ref[...]

        def normalize(den_sc, acc_sc):
            den = den_sc[...]                                  # (H, N_T)
            inv = jnp.where(den > 0, 1.0 / den, 0.0)           # zero in-degree -> 0
            inv_c = lax.dot_general(                           # expand 1/den once
                inv, expand_f, dimension_numbers=(((0,), (0,)), ((), ())),
                precision=hp, preferred_element_type=f32)      # (N_T, OUT_P)
            return acc_sc[...] * inv_c

        out_ref[...] = (hdst_ref[...]
                        + normalize(den_n_sc, acc_n_sc)
                        + normalize(den_e_sc, acc_e_sc))


def edgegat_forward(X, X_edge, src_idx, dst_idx, params, *,
                    edge_tile=256, node_tile=None):
    """EdgeGATConv forward for a graph given as an edge list (src_idx -> dst_idx)."""
    N, _ = X.shape
    E = X_edge.shape[0]
    H, Dh = params["attn_src"].shape
    OUT = H * Dh

    # ---- lane-dense feature padding: OUT_P is a multiple of 128 ---------------------
    step = 128 // math.gcd(H, 128)
    Dh_pad = ((Dh + step - 1) // step) * step
    OUT_P = H * Dh_pad

    # ---- node / edge projections + attention logits (hoisted out of the kernel) -----
    h_src = jnp.dot(X, params["W_src"])                        # (N, OUT)
    h_dst = jnp.dot(X, params["W_dst"])                        # (N, OUT)
    h_edge = jnp.dot(X_edge, params["W_edge"])                 # (E, OUT)
    e_src = (h_src.reshape(N, H, Dh) * params["attn_src"]).sum(-1)      # (N, H)
    e_dst = (h_dst.reshape(N, H, Dh) * params["attn_dst"]).sum(-1)      # (N, H)
    e_edge = (h_edge.reshape(E, H, Dh) * params["attn_edge"]).sum(-1)   # (E, H)

    def pad_feat(h):                                           # (M, OUT) -> (M, OUT_P)
        m = h.shape[0]
        return jnp.pad(h.reshape(m, H, Dh),
                       ((0, 0), (0, 0), (0, Dh_pad - Dh))).reshape(m, OUT_P)

    h_src_p, h_dst_p, h_edge_p = pad_feat(h_src), pad_feat(h_dst), pad_feat(h_edge)

    # ---- dst-sorted per-edge streams (gathers are cheap XLA ops, O(E*OUT) bytes) ----
    order = jnp.argsort(dst_idx)
    src_s = src_idx[order]
    dst_s = dst_idx[order]
    esrc_e = jnp.take(e_src, src_s, axis=0)                    # (E, H) f32
    edst_e = jnp.take(e_dst, dst_s, axis=0)                    # (E, H) f32
    eedge_e = jnp.take(e_edge, order, axis=0)                  # (E, H) f32
    hsrc_e = jnp.take(h_src_p, src_s, axis=0).astype(jnp.bfloat16)     # (E, OUT_P)
    hedge_e = jnp.take(h_edge_p, order, axis=0).astype(jnp.bfloat16)   # (E, OUT_P)
    dst_col = dst_s.astype(jnp.int32)[:, None]                 # (E, 1)

    # ---- tiling ----------------------------------------------------------------------
    if node_tile is None:
        # 128-wide node tiles give lane-dense (H, N_T) softmax state and >=2 "parallel"
        # tiles (both v7x TensorCores) once N >= 256.
        N_T = N if (N <= 128 or N % 128 != 0) else 128
    else:
        N_T = node_tile
    assert N % N_T == 0 and (N_T == N or N_T % 8 == 0), "bad node tile"
    E_T = edge_tile
    assert E_T % 16 == 0, "edge tile must be a multiple of the bf16 sublane tile"

    n_e_tiles = pl.cdiv(E, E_T)
    E_pad = n_e_tiles * E_T
    if E_pad != E:
        pe = E_pad - E
        # phantom edges: dst = N lies outside every node tile -> contributes nothing
        dst_col = jnp.pad(dst_col, ((0, pe), (0, 0)), constant_values=N)
        esrc_e = jnp.pad(esrc_e, ((0, pe), (0, 0)))
        edst_e = jnp.pad(edst_e, ((0, pe), (0, 0)))
        eedge_e = jnp.pad(eedge_e, ((0, pe), (0, 0)))
        hsrc_e = jnp.pad(hsrc_e, ((0, pe), (0, 0)))
        hedge_e = jnp.pad(hedge_e, ((0, pe), (0, 0)))

    # ---- per-node-tile edge-tile ranges (scalar prefetched) --------------------------
    # TODO(synk): under jit these ranges must come from a static bound + device-side
    #             offsets instead of host-side numpy on concrete index arrays.
    n_n_tiles = N // N_T
    dst_np = np.asarray(dst_s)                                 # sorted ascending
    starts = np.searchsorted(dst_np, np.arange(n_n_tiles) * N_T, side="left")
    stops = np.searchsorted(dst_np, (np.arange(n_n_tiles) + 1) * N_T, side="left")
    tile_start = starts // E_T
    tile_stop = np.where(stops > starts, -(-stops // E_T), tile_start)
    num_tiles = tile_stop - tile_start                         # 0 for empty node tiles
    tile_start = np.minimum(tile_start, n_e_tiles - 1)         # keep block index in range
    max_tiles = int(max(1, num_tiles.max()))
    tile_start = jnp.asarray(tile_start, jnp.int32)
    num_tiles = jnp.asarray(num_tiles, jnp.int32)

    # one-hot head -> feature-column expansion (exact); built once, streamed as constant
    expand = (jnp.arange(OUT_P)[None, :] // Dh_pad
              == jnp.arange(H)[:, None]).astype(jnp.float32)   # (H, OUT_P)

    # ---- BlockSpecs ------------------------------------------------------------------
    def edge_map(n, e, ts, nt):
        # Step e of node tile n reads edge tile ts[n]+e; trailing skipped steps are
        # clamped to the last valid tile so they revisit the same block (no extra DMA).
        t = jnp.minimum(ts[n] + e, ts[n] + jnp.maximum(nt[n], 1) - 1)
        return (jnp.minimum(t, n_e_tiles - 1), 0)

    def node_map(n, e, ts, nt):
        return (n, 0)

    def const_map(n, e, ts, nt):
        return (0, 0)

    in_specs = [
        pl.BlockSpec((E_T, 1), edge_map),            # dst ids (int32)
        pl.BlockSpec((E_T, H), edge_map),            # e_src[src(e)]
        pl.BlockSpec((E_T, H), edge_map),            # e_dst[dst(e)]
        pl.BlockSpec((E_T, H), edge_map),            # e_edge[e]
        pl.BlockSpec((E_T, OUT_P), edge_map),        # h_src[src(e)]   (bf16 messages)
        pl.BlockSpec((E_T, OUT_P), edge_map),        # h_edge[e]       (bf16 messages)
        pl.BlockSpec((N_T, OUT_P), node_map),        # h_dst residual  (per node tile)
        pl.BlockSpec((H, OUT_P), const_map),         # head -> column expansion
    ]
    out_spec = pl.BlockSpec((N_T, OUT_P), node_map)

    scratch = [
        pltpu.VMEM((H, N_T), jnp.float32),           # running max   (node path)
        pltpu.VMEM((H, N_T), jnp.float32),           # denominator   (node path)
        pltpu.VMEM((N_T, OUT_P), jnp.float32),       # weighted sum  (node path)
        pltpu.VMEM((H, N_T), jnp.float32),           # running max   (edge path)
        pltpu.VMEM((H, N_T), jnp.float32),           # denominator   (edge path)
        pltpu.VMEM((N_T, OUT_P), jnp.float32),       # weighted sum  (edge path)
    ]

    # ---- generation-aware VMEM budget -------------------------------------------------
    try:
        vmem_cap = getattr(pltpu.get_tpu_info(), "vmem_capacity_bytes", 64 << 20)
    except Exception:
        vmem_cap = 64 << 20                           # conservative v7x default
    est = (2 * E_T * (4 + 3 * H * 4 + 2 * OUT_P * 2)  # double-buffered edge stream
           + 2 * 2 * N_T * OUT_P * 4                  # h_dst block + output block
           + 2 * H * OUT_P * 4                        # expansion matrix
           + 2 * (2 * H * N_T * 4 + N_T * OUT_P * 4)) # scratch, both paths
    vmem_limit = int(min(vmem_cap * 3 // 4, max(8 << 20, 2 * est)))

    out_pad = pl.pallas_call(
        _edgegat_kernel,
        out_shape=jax.ShapeDtypeStruct((N, OUT_P), jnp.float32),
        grid_spec=pltpu.PrefetchScalarGridSpec(
            num_scalar_prefetch=2,
            grid=(n_n_tiles, max_tiles),
            in_specs=in_specs,
            out_specs=out_spec,
            scratch_shapes=scratch),
        compiler_params=pltpu.CompilerParams(
            dimension_semantics=("parallel", "arbitrary"),
            vmem_limit_bytes=vmem_limit),
    )(tile_start, num_tiles,
      dst_col, esrc_e, edst_e, eedge_e, hsrc_e, hedge_e, h_dst_p, expand)

    # drop the lane-padding columns
    return out_pad.reshape(N, H, Dh_pad)[:, :, :Dh].reshape(N, OUT)


def edgegat_reference(X, X_edge, src_idx, dst_idx, params):
    """Pure-JAX edge-list reference mirroring the DGL semantics (exact f32 matmuls)."""
    N = X.shape[0]
    H, Dh = params["attn_src"].shape
    hp = lax.Precision.HIGHEST

    def leaky(v):
        return jnp.where(v >= 0, v, NEG_SLOPE * v)

    h_src = jnp.dot(X, params["W_src"], precision=hp).reshape(N, H, Dh)
    h_dst = jnp.dot(X, params["W_dst"], precision=hp).reshape(N, H, Dh)
    e_src = (h_src * params["attn_src"]).sum(-1)               # (N, H)
    e_dst = (h_dst * params["attn_dst"]).sum(-1)               # (N, H)

    def edge_softmax(e):
        mx = jax.ops.segment_max(e, dst_idx, num_segments=N)
        num = jnp.exp(e - mx[dst_idx])
        den = jax.ops.segment_sum(num, dst_idx, num_segments=N)
        return num / den[dst_idx]

    e_node = leaky(e_src[src_idx] + e_dst[dst_idx])            # (E, H)
    a = edge_softmax(e_node)
    h_neigh = jax.ops.segment_sum(h_src[src_idx] * a[..., None],
                                  dst_idx, num_segments=N)     # (N, H, Dh)

    h_edge = jnp.dot(X_edge, params["W_edge"], precision=hp).reshape(-1, H, Dh)
    e_edge = leaky((h_edge * params["attn_edge"]).sum(-1) + e_dst[dst_idx])
    a_e = edge_softmax(e_edge)
    h_eagg = jax.ops.segment_sum(a_e[..., None] * h_edge, dst_idx, num_segments=N)

    return (h_dst + h_neigh + h_eagg).reshape(N, H * Dh)


if __name__ == "__main__":
    # Small synthetic problem consistent with the module.
    N = 16          # nodes
    E = 48          # edges
    F_IN = 8        # node in_size
    F_EDGE = 6      # edge_in_size
    H = 4           # num_heads
    OUT = 32        # out_size
    Dh = OUT // H   # head_size

    key = jax.random.PRNGKey(0)
    ks = jax.random.split(key, 10)

    gain = math.sqrt(2.0)  # nn.init.calculate_gain('relu')

    def xavier(k, shape, fan_in, fan_out):
        std = gain * math.sqrt(2.0 / (fan_in + fan_out))
        return std * jax.random.normal(k, shape, dtype=jnp.float32)

    params = {
        # stored as (in, out) == fc_*.weight.T, so forward is X @ W
        "W_src": xavier(ks[0], (F_IN, OUT), F_IN, OUT),
        "W_dst": xavier(ks[1], (F_IN, OUT), F_IN, OUT),
        "W_edge": xavier(ks[2], (F_EDGE, OUT), F_EDGE, OUT),
        # attn parameters (1, H, Dh) stored squeezed as (H, Dh)
        "attn_src": xavier(ks[3], (H, Dh), H * Dh, Dh),
        "attn_dst": xavier(ks[4], (H, Dh), H * Dh, Dh),
        "attn_edge": xavier(ks[5], (H, Dh), H * Dh, Dh),
    }

    X = jax.random.normal(ks[6], (N, F_IN), dtype=jnp.float32)
    X_edge = jax.random.normal(ks[7], (E, F_EDGE), dtype=jnp.float32)
    src_idx = jax.random.randint(ks[8], (E,), 0, N)
    dst_idx = jax.random.randint(ks[9], (E,), 0, N)

    out = jax.block_until_ready(
        edgegat_forward(X, X_edge, src_idx, dst_idx, params))
    ref = jax.block_until_ready(
        edgegat_reference(X, X_edge, src_idx, dst_idx, params))

    assert out.shape == (N, OUT)
    # bf16 MXU scatter path vs exact f32 reference -> allow ~1% deviation
    assert jnp.allclose(out, ref, rtol=2e-2, atol=2e-2), (
        f"max abs err {jnp.max(jnp.abs(out - ref))}")

    print("KERNEL_OK")
</pallas_src>

<mosaic_0001>
module attributes {stable_mosaic.version = 11 : i64} {
  func.func @_edgegat_kernel(%arg0: i32, %arg1: i32, %arg2: memref<1xi32, #tpu.memory_space<smem>>, %arg3: memref<1xi32, #tpu.memory_space<smem>>, %arg4: memref<256x1xi32, #tpu.memory_space<vmem>>, %arg5: memref<256x4xf32, #tpu.memory_space<vmem>>, %arg6: memref<256x4xf32, #tpu.memory_space<vmem>>, %arg7: memref<256x4xf32, #tpu.memory_space<vmem>>, %arg8: memref<256x128xbf16, #tpu.memory_space<vmem>>, %arg9: memref<256x128xbf16, #tpu.memory_space<vmem>>, %arg10: memref<16x128xf32, #tpu.memory_space<vmem>>, %arg11: memref<4x128xf32, #tpu.memory_space<vmem>>, %arg12: memref<16x128xf32, #tpu.memory_space<vmem>>, %arg13: memref<4x16xf32, #tpu.memory_space<vmem>>, %arg14: memref<4x16xf32, #tpu.memory_space<vmem>>, %arg15: memref<16x128xf32, #tpu.memory_space<vmem>>, %arg16: memref<4x16xf32, #tpu.memory_space<vmem>>, %arg17: memref<4x16xf32, #tpu.memory_space<vmem>>, %arg18: memref<16x128xf32, #tpu.memory_space<vmem>>) attributes {dimension_semantics = [#tpu.dimension_semantics<parallel>, #tpu.dimension_semantics<arbitrary>], iteration_bounds = array<i64: 1, 1>, scalar_prefetch = 2 : i64, scratch_operands = 6 : i64, tpu.core_type = #tpu.core_type<tc>, window_params = [{transform_indices = @transform_0, window_bounds = array<i64: 256, 1>}, {transform_indices = @transform_1, window_bounds = array<i64: 256, 4>}, {transform_indices = @transform_2, window_bounds = array<i64: 256, 4>}, {transform_indices = @transform_3, window_bounds = array<i64: 256, 4>}, {transform_indices = @transform_4, window_bounds = array<i64: 256, 128>}, {transform_indices = @transform_5, window_bounds = array<i64: 256, 128>}, {transform_indices = @transform_6, window_bounds = array<i64: 16, 128>}, {pipeline_mode = #tpu.pipeline_mode<synchronous>, transform_indices = @transform_7, window_bounds = array<i64: 4, 128>}, {transform_indices = @transform_8, window_bounds = array<i64: 16, 128>}]} {
    %c0_i32 = arith.constant 0 : i32
    %0 = arith.cmpi eq, %arg1, %c0_i32 : i32
    %1 = arith.extui %0 : i1 to i32
    %cst = arith.constant -1.2676506E+30 : f32
    %c0_i32_0 = arith.constant 0 : i32
    %2 = arith.cmpi ne, %1, %c0_i32_0 : i32
    scf.if %2 {
      %11 = vector.broadcast %cst : f32 to vector<4x16xf32>
      %c0 = arith.constant 0 : index
      %c0_6 = arith.constant 0 : index
      %12 = vector.load %arg13[%c0, %c0_6] : memref<4x16xf32, #tpu.memory_space<vmem>>, vector<4x16xf32>
      tpu.vector_store %arg13[%c0, %c0_6], %11 {strides = array<i32>} : memref<4x16xf32, #tpu.memory_space<vmem>>, vector<4x16xf32>,
      %13 = vector.broadcast %cst : f32 to vector<4x16xf32>
      %c0_7 = arith.constant 0 : index
      %c0_8 = arith.constant 0 : index
      %14 = vector.load %arg16[%c0_7, %c0_8] : memref<4x16xf32, #tpu.memory_space<vmem>>, vector<4x16xf32>
      tpu.vector_store %arg16[%c0_7, %c0_8], %13 {strides = array<i32>} : memref<4x16xf32, #tpu.memory_space<vmem>>, vector<4x16xf32>,
      %cst_9 = arith.constant 0.000000e+00 : f32
      %15 = vector.broadcast %cst_9 : f32 to vector<4x16xf32>
      %c0_10 = arith.constant 0 : index
      %c0_11 = arith.constant 0 : index
      %16 = vector.load %arg14[%c0_10, %c0_11] : memref<4x16xf32, #tpu.memory_space<vmem>>, vector<4x16xf32>
      tpu.vector_store %arg14[%c0_10, %c0_11], %15 {strides = array<i32>} : memref<4x16xf32, #tpu.memory_space<vmem>>, vector<4x16xf32>,
      %cst_12 = arith.constant 0.000000e+00 : f32
      %17 = vector.broadcast %cst_12 : f32 to vector<4x16xf32>
      %c0_13 = arith.constant 0 : index
      %c0_14 = arith.constant 0 : index
      %18 = vector.load %arg17[%c0_13, %c0_14] : memref<4x16xf32, #tpu.memory_space<vmem>>, vector<4x16xf32>
      tpu.vector_store %arg17[%c0_13, %c0_14], %17 {strides = array<i32>} : memref<4x16xf32, #tpu.memory_space<vmem>>, vector<4x16xf32>,
      %cst_15 = arith.constant 0.000000e+00 : f32
      %19 = vector.broadcast %cst_15 : f32 to vector<16x128xf32>
      %c0_16 = arith.constant 0 : index
      %c0_17 = arith.constant 0 : index
      %20 = vector.load %arg15[%c0_16, %c0_17] : memref<16x128xf32, #tpu.memory_space<vmem>>, vector<16x128xf32>
      tpu.vector_store %arg15[%c0_16, %c0_17], %19 {strides = array<i32>} : memref<16x128xf32, #tpu.memory_space<vmem>>, vector<16x128xf32>,
      %cst_18 = arith.constant 0.000000e+00 : f32
      %21 = vector.broadcast %cst_18 : f32 to vector<16x128xf32>
      %c0_19 = arith.constant 0 : index
      %c0_20 = arith.constant 0 : index
      %22 = vector.load %arg18[%c0_19, %c0_20] : memref<16x128xf32, #tpu.memory_space<vmem>>, vector<16x128xf32>
      tpu.vector_store %arg18[%c0_19, %c0_20], %21 {strides = array<i32>} : memref<16x128xf32, #tpu.memory_space<vmem>>, vector<16x128xf32>,
    } else {
    }
    %3 = arith.index_cast %arg0 : i32 to index
    %4 = memref.load %arg3[%3] : memref<1xi32, #tpu.memory_space<smem>>
    %5 = arith.cmpi slt, %arg1, %4 : i32
    %6 = arith.extui %5 : i1 to i32
    %cst_1 = arith.constant 2.000000e-01 : f32
    %cst_2 = arith.constant -1.2676506E+30 : f32
    %c0_i32_3 = arith.constant 0 : i32
    %7 = arith.cmpi ne, %6, %c0_i32_3 : i32
    scf.if %7 {
      %c0 = arith.constant 0 : index
      %c0_6 = arith.constant 0 : index
      %11 = vector.load %arg11[%c0, %c0_6] : memref<4x128xf32, #tpu.memory_space<vmem>>, vector<4x128xf32>
      %12 = arith.truncf %11 : vector<4x128xf32> to vector<4x128xbf16>
      %c0_7 = arith.constant 0 : index
      %c0_8 = arith.constant 0 : index
      %13 = vector.load %arg4[%c0_7, %c0_8] : memref<256x1xi32, #tpu.memory_space<vmem>>, vector<256x1xi32>
      %c16_i32 = arith.constant 16 : i32
      %14 = arith.muli %arg0, %c16_i32 : i32
      %15 = vector.broadcast %14 : i32 to vector<256x1xi32>
      %16 = arith.subi %13, %15 : vector<256x1xi32>
      %17 = tpu.iota {dimensions = array<i32: 1>} : vector<256x16xi32>
      %18 = vector.broadcast %16 : vector<256x1xi32> to vector<256x16xi32>
      %19 = arith.cmpi eq, %17, %18 : vector<256x16xi32>
      %20 = arith.extui %19 : vector<256x16xi1> to vector<256x16xi32>
      %21 = arith.sitofp %20 : vector<256x16xi32> to vector<256x16xf32>
      %22 = arith.truncf %21 : vector<256x16xf32> to vector<256x16xbf16>
      %c0_i32_9 = arith.constant 0 : i32
      %23 = vector.broadcast %c0_i32_9 : i32 to vector<256x1xi32>
      %24 = arith.cmpi sge, %16, %23 : vector<256x1xi32>
      %c16_i32_10 = arith.constant 16 : i32
      %25 = vector.broadcast %c16_i32_10 : i32 to vector<256x1xi32>
      %26 = arith.cmpi slt, %16, %25 : vector<256x1xi32>
      %27 = arith.andi %24, %26 : vector<256x1xi1>
      %c0_11 = arith.constant 0 : index
      %c0_12 = arith.constant 0 : index
      %28 = vector.load %arg6[%c0_11, %c0_12] : memref<256x4xf32, #tpu.memory_space<vmem>>, vector<256x4xf32>
      %c0_13 = arith.constant 0 : index
      %c0_14 = arith.constant 0 : index
      %29 = vector.load %arg5[%c0_13, %c0_14] : memref<256x4xf32, #tpu.memory_space<vmem>>, vector<256x4xf32>
      %30 = arith.addf %29, %28 : vector<256x4xf32>
      %cst_15 = arith.constant 0.000000e+00 : f32
      %31 = vector.broadcast %cst_15 : f32 to vector<256x4xf32>
      %32 = arith.cmpf oge, %30, %31 : vector<256x4xf32>
      %33 = vector.broadcast %cst_1 : f32 to vector<256x4xf32>
      %34 = arith.mulf %33, %30 : vector<256x4xf32>
      %35 = arith.select %32, %30, %34 : vector<256x4xi1>, vector<256x4xf32>
      %c0_16 = arith.constant 0 : index
      %c0_17 = arith.constant 0 : index
      %36 = vector.load %arg7[%c0_16, %c0_17] : memref<256x4xf32, #tpu.memory_space<vmem>>, vector<256x4xf32>
      %37 = arith.addf %36, %28 : vector<256x4xf32>
      %cst_18 = arith.constant 0.000000e+00 : f32
      %38 = vector.broadcast %cst_18 : f32 to vector<256x4xf32>
      %39 = arith.cmpf oge, %37, %38 : vector<256x4xf32>
      %40 = vector.broadcast %cst_1 : f32 to vector<256x4xf32>
      %41 = arith.mulf %40, %37 : vector<256x4xf32>
      %42 = arith.select %39, %37, %41 : vector<256x4xi1>, vector<256x4xf32>
      %43 = tpu.iota {dimensions = array<i32: 0>} : vector<4x1xi32>
      %c0_19 = arith.constant 0 : index
      %c0_20 = arith.constant 0 : index
      %44 = vector.load %arg8[%c0_19, %c0_20] : memref<256x128xbf16, #tpu.memory_space<vmem>>, vector<256x128xbf16>
      %c0_21 = arith.constant 0 : index
      %c0_22 = arith.constant 0 : index
      %45 = vector.load %arg13[%c0_21, %c0_22] : memref<4x16xf32, #tpu.memory_space<vmem>>, vector<4x16xf32>
      %46 = vector.extract_strided_slice %35 {offsets = [0, 0], sizes = [256, 1], strides = [1, 1]} : vector<256x4xf32> to vector<256x1xf32>
      %47 = vector.shape_cast %46 : vector<256x1xf32> to vector<256x1xf32>
      %48 = vector.broadcast %47 : vector<256x1xf32> to vector<256x16xf32>
      %49 = vector.broadcast %cst_2 : f32 to vector<256x16xf32>
      %50 = arith.select %19, %48, %49 : vector<256x16xi1>, vector<256x16xf32>
      %cst_23 = arith.constant dense<0xFF800000> : vector<16xf32>
      %51 = vector.multi_reduction <maximumf>, %50, %cst_23 [0] : vector<256x16xf32> to vector<16xf32>
      %52 = vector.shape_cast %51 : vector<16xf32> to vector<1x16xf32>
      %c0_i32_24 = arith.constant 0 : i32
      %53 = vector.broadcast %c0_i32_24 : i32 to vector<4x1xi32>
      %54 = arith.cmpi eq, %43, %53 : vector<4x1xi32>
      %55 = vector.broadcast %52 : vector<1x16xf32> to vector<4x16xf32>
      %56 = arith.maximumf %45, %55 : vector<4x16xf32>
      %57 = vector.shape_cast %54 : vector<4x1xi1> to vector<4x1xi1>
      %58 = vector.broadcast %57 : vector<4x1xi1> to vector<4x16xi1>
      %59 = arith.select %58, %56, %45 : vector<4x16xi1>, vector<4x16xf32>
      %60 = vector.extract_strided_slice %35 {offsets = [0, 1], sizes = [256, 1], strides = [1, 1]} : vector<256x4xf32> to vector<256x1xf32>
      %61 = vector.shape_cast %60 : vector<256x1xf32> to vector<256x1xf32>
      %62 = vector.broadcast %61 : vector<256x1xf32> to vector<256x16xf32>
      %63 = vector.broadcast %cst_2 : f32 to vector<256x16xf32>
      %64 = arith.select %19, %62, %63 : vector<256x16xi1>, vector<256x16xf32>
      %cst_25 = arith.constant dense<0xFF800000> : vector<16xf32>
      %65 = vector.multi_reduction <maximumf>, %64, %cst_25 [0] : vector<256x16xf32> to vector<16xf32>
      %66 = vector.shape_cast %65 : vector<16xf32> to vector<1x16xf32>
      %c1_i32 = arith.constant 1 : i32
      %67 = vector.broadcast %c1_i32 : i32 to vector<4x1xi32>
      %68 = arith.cmpi eq, %43, %67 : vector<4x1xi32>
      %69 = vector.broadcast %66 : vector<1x16xf32> to vector<4x16xf32>
      %70 = arith.maximumf %59, %69 : vector<4x16xf32>
      %71 = vector.shape_cast %68 : vector<4x1xi1> to vector<4x1xi1>
      %72 = vector.broadcast %71 : vector<4x1xi1> to vector<4x16xi1>
      %73 = arith.select %72, %70, %59 : vector<4x16xi1>, vector<4x16xf32>
      %74 = vector.extract_strided_slice %35 {offsets = [0, 2], sizes = [256, 1], strides = [1, 1]} : vector<256x4xf32> to vector<256x1xf32>
      %75 = vector.shape_cast %74 : vector<256x1xf32> to vector<256x1xf32>
      %76 = vector.broadcast %75 : vector<256x1xf32> to vector<256x16xf32>
      %77 = vector.broadcast %cst_2 : f32 to vector<256x16xf32>
      %78 = arith.select %19, %76, %77 : vector<256x16xi1>, vector<256x16xf32>
      %cst_26 = arith.constant dense<0xFF800000> : vector<16xf32>
      %79 = vector.multi_reduction <maximumf>, %78, %cst_26 [0] : vector<256x16xf32> to vector<16xf32>
      %80 = vector.shape_cast %79 : vector<16xf32> to vector<1x16xf32>
      %c2_i32 = arith.constant 2 : i32
      %81 = vector.broadcast %c2_i32 : i32 to vector<4x1xi32>
      %82 = arith.cmpi eq, %43, %81 : vector<4x1xi32>
      %83 = vector.broadcast %80 : vector<1x16xf32> to vector<4x16xf32>
      %84 = arith.maximumf %73, %83 : vector<4x16xf32>
      %85 = vector.shape_cast %82 : vector<4x1xi1> to vector<4x1xi1>
      %86 = vector.broadcast %85 : vector<4x1xi1> to vector<4x16xi1>
      %87 = arith.select %86, %84, %73 : vector<4x16xi1>, vector<4x16xf32>
      %88 = vector.extract_strided_slice %35 {offsets = [0, 3], sizes = [256, 1], strides = [1, 1]} : vector<256x4xf32> to vector<256x1xf32>
      %89 = vector.shape_cast %88 : vector<256x1xf32> to vector<256x1xf32>
      %90 = vector.broadcast %89 : vector<256x1xf32> to vector<256x16xf32>
      %91 = vector.broadcast %cst_2 : f32 to vector<256x16xf32>
      %92 = arith.select %19, %90, %91 : vector<256x16xi1>, vector<256x16xf32>
      %cst_27 = arith.constant dense<0xFF800000> : vector<16xf32>
      %93 = vector.multi_reduction <maximumf>, %92, %cst_27 [0] : vector<256x16xf32> to vector<16xf32>
      %94 = vector.shape_cast %93 : vector<16xf32> to vector<1x16xf32>
      %c3_i32 = arith.constant 3 : i32
      %95 = vector.broadcast %c3_i32 : i32 to vector<4x1xi32>
      %96 = arith.cmpi eq, %43, %95 : vector<4x1xi32>
      %97 = vector.broadcast %94 : vector<1x16xf32> to vector<4x16xf32>
      %98 = arith.maximumf %87, %97 : vector<4x16xf32>
      %99 = vector.shape_cast %96 : vector<4x1xi1> to vector<4x1xi1>
      %100 = vector.broadcast %99 : vector<4x1xi1> to vector<4x16xi1>
      %101 = arith.select %100, %98, %87 : vector<4x16xi1>, vector<4x16xf32>
      %102 = arith.truncf %101 : vector<4x16xf32> to vector<4x16xbf16>
      %103 = arith.extf %102 : vector<4x16xbf16> to vector<4x16xf32>
      %c0_28 = arith.constant 0 : index
      %c0_29 = arith.constant 0 : index
      %104 = vector.load %arg13[%c0_28, %c0_29] : memref<4x16xf32, #tpu.memory_space<vmem>>, vector<4x16xf32>
      tpu.vector_store %arg13[%c0_28, %c0_29], %103 {strides = array<i32>} : memref<4x16xf32, #tpu.memory_space<vmem>>, vector<4x16xf32>,
      %105 = arith.subf %45, %103 : vector<4x16xf32>
      %106 = math.exp %105 : vector<4x16xf32>
      %107 = arith.truncf %103 : vector<4x16xf32> to vector<4x16xbf16>
      %cst_30 = arith.constant dense<0.000000e+00> : vector<256x4xf32>
      %108 = tpu.matmul %22, %107, %cst_30 {dimension_numbers = #tpu.dot_dimension_numbers<[1], [1], [0], [0], [0, 0, 1, 0], [], []>} : vector<256x16xbf16>, vector<4x16xbf16>, vector<256x4xf32> -> vector<256x4xf32>
      %109 = arith.subf %35, %108 : vector<256x4xf32>
      %110 = vector.shape_cast %27 : vector<256x1xi1> to vector<256x1xi1>
      %111 = vector.broadcast %110 : vector<256x1xi1> to vector<256x4xi1>
      %112 = vector.broadcast %cst_2 : f32 to vector<256x4xf32>
      %113 = arith.select %111, %109, %112 : vector<256x4xi1>, vector<256x4xf32>
      %114 = math.exp %113 : vector<256x4xf32>
      %115 = arith.truncf %114 : vector<256x4xf32> to vector<256x4xbf16>
      %cst_31 = arith.constant dense<0.000000e+00> : vector<4x16xf32>
      %116 = tpu.matmul %115, %22, %cst_31 {dimension_numbers = #tpu.dot_dimension_numbers<[0], [0], [1], [1], [0, 1, 1, 1], [], []>} : vector<256x4xbf16>, vector<256x16xbf16>, vector<4x16xf32> -> vector<4x16xf32>
      %c0_32 = arith.constant 0 : index
      %c0_33 = arith.constant 0 : index
      %117 = vector.load %arg14[%c0_32, %c0_33] : memref<4x16xf32, #tpu.memory_space<vmem>>, vector<4x16xf32>
      %118 = arith.mulf %106, %117 : vector<4x16xf32>
      %119 = arith.addf %118, %116 : vector<4x16xf32>
      %c0_34 = arith.constant 0 : index
      %c0_35 = arith.constant 0 : index
      %120 = vector.load %arg14[%c0_34, %c0_35] : memref<4x16xf32, #tpu.memory_space<vmem>>, vector<4x16xf32>
      tpu.vector_store %arg14[%c0_34, %c0_35], %119 {strides = array<i32>} : memref<4x16xf32, #tpu.memory_space<vmem>>, vector<4x16xf32>,
      %cst_36 = arith.constant dense<0.000000e+00> : vector<256x128xf32>
      %121 = tpu.matmul %115, %12, %cst_36 {dimension_numbers = #tpu.dot_dimension_numbers<[1], [0], [0], [1], [0, 0, 1, 1], [], []>} : vector<256x4xbf16>, vector<4x128xbf16>, vector<256x128xf32> -> vector<256x128xf32>
      %122 = arith.extf %44 : vector<256x128xbf16> to vector<256x128xf32>
      %123 = arith.mulf %121, %122 : vector<256x128xf32>
      %124 = arith.truncf %123 : vector<256x128xf32> to vector<256x128xbf16>
      %cst_37 = arith.constant dense<0.000000e+00> : vector<16x128xf32>
      %125 = tpu.matmul %22, %124, %cst_37 {dimension_numbers = #tpu.dot_dimension_numbers<[0], [0], [1], [1], [0, 1, 1, 1], [], []>} : vector<256x16xbf16>, vector<256x128xbf16>, vector<16x128xf32> -> vector<16x128xf32>
      %cst_38 = arith.constant dense<0.000000e+00> : vector<16x128xf32>
      %126 = tpu.matmul %106, %11, %cst_38 {dimension_numbers = #tpu.dot_dimension_numbers<[0], [0], [1], [1], [0, 1, 1, 1], [], []>, precision = #tpu.contract_precision<fp32>} : vector<4x16xf32>, vector<4x128xf32>, vector<16x128xf32> -> vector<16x128xf32>
      %c0_39 = arith.constant 0 : index
      %c0_40 = arith.constant 0 : index
      %127 = vector.load %arg15[%c0_39, %c0_40] : memref<16x128xf32, #tpu.memory_space<vmem>>, vector<16x128xf32>
      %128 = arith.mulf %126, %127 : vector<16x128xf32>
      %129 = arith.addf %128, %125 : vector<16x128xf32>
      %c0_41 = arith.constant 0 : index
      %c0_42 = arith.constant 0 : index
      %130 = vector.load %arg15[%c0_41, %c0_42] : memref<16x128xf32, #tpu.memory_space<vmem>>, vector<16x128xf32>
      tpu.vector_store %arg15[%c0_41, %c0_42], %129 {strides = array<i32>} : memref<16x128xf32, #tpu.memory_space<vmem>>, vector<16x128xf32>,
      %c0_43 = arith.constant 0 : index
      %c0_44 = arith.constant 0 : index
      %131 = vector.load %arg9[%c0_43, %c0_44] : memref<256x128xbf16, #tpu.memory_space<vmem>>, vector<256x128xbf16>
      %c0_45 = arith.constant 0 : index
      %c0_46 = arith.constant 0 : index
      %132 = vector.load %arg16[%c0_45, %c0_46] : memref<4x16xf32, #tpu.memory_space<vmem>>, vector<4x16xf32>
      %133 = vector.extract_strided_slice %42 {offsets = [0, 0], sizes = [256, 1], strides = [1, 1]} : vector<256x4xf32> to vector<256x1xf32>
      %134 = vector.shape_cast %133 : vector<256x1xf32> to vector<256x1xf32>
      %135 = vector.broadcast %134 : vector<256x1xf32> to vector<256x16xf32>
      %136 = vector.broadcast %cst_2 : f32 to vector<256x16xf32>
      %137 = arith.select %19, %135, %136 : vector<256x16xi1>, vector<256x16xf32>
      %cst_47 = arith.constant dense<0xFF800000> : vector<16xf32>
      %138 = vector.multi_reduction <maximumf>, %137, %cst_47 [0] : vector<256x16xf32> to vector<16xf32>
      %139 = vector.shape_cast %138 : vector<16xf32> to vector<1x16xf32>
      %c0_i32_48 = arith.constant 0 : i32
      %140 = vector.broadcast %c0_i32_48 : i32 to vector<4x1xi32>
      %141 = arith.cmpi eq, %43, %140 : vector<4x1xi32>
      %142 = vector.broadcast %139 : vector<1x16xf32> to vector<4x16xf32>
      %143 = arith.maximumf %132, %142 : vector<4x16xf32>
      %144 = vector.shape_cast %141 : vector<4x1xi1> to vector<4x1xi1>
      %145 = vector.broadcast %144 : vector<4x1xi1> to vector<4x16xi1>
      %146 = arith.select %145, %143, %132 : vector<4x16xi1>, vector<4x16xf32>
      %147 = vector.extract_strided_slice %42 {offsets = [0, 1], sizes = [256, 1], strides = [1, 1]} : vector<256x4xf32> to vector<256x1xf32>
      %148 = vector.shape_cast %147 : vector<256x1xf32> to vector<256x1xf32>
      %149 = vector.broadcast %148 : vector<256x1xf32> to vector<256x16xf32>
      %150 = vector.broadcast %cst_2 : f32 to vector<256x16xf32>
      %151 = arith.select %19, %149, %150 : vector<256x16xi1>, vector<256x16xf32>
      %cst_49 = arith.constant dense<0xFF800000> : vector<16xf32>
      %152 = vector.multi_reduction <maximumf>, %151, %cst_49 [0] : vector<256x16xf32> to vector<16xf32>
      %153 = vector.shape_cast %152 : vector<16xf32> to vector<1x16xf32>
      %c1_i32_50 = arith.constant 1 : i32
      %154 = vector.broadcast %c1_i32_50 : i32 to vector<4x1xi32>
      %155 = arith.cmpi eq, %43, %154 : vector<4x1xi32>
      %156 = vector.broadcast %153 : vector<1x16xf32> to vector<4x16xf32>
      %157 = arith.maximumf %146, %156 : vector<4x16xf32>
      %158 = vector.shape_cast %155 : vector<4x1xi1> to vector<4x1xi1>
      %159 = vector.broadcast %158 : vector<4x1xi1> to vector<4x16xi1>
      %160 = arith.select %159, %157, %146 : vector<4x16xi1>, vector<4x16xf32>
      %161 = vector.extract_strided_slice %42 {offsets = [0, 2], sizes = [256, 1], strides = [1, 1]} : vector<256x4xf32> to vector<256x1xf32>
      %162 = vector.shape_cast %161 : vector<256x1xf32> to vector<256x1xf32>
      %163 = vector.broadcast %162 : vector<256x1xf32> to vector<256x16xf32>
      %164 = vector.broadcast %cst_2 : f32 to vector<256x16xf32>
      %165 = arith.select %19, %163, %164 : vector<256x16xi1>, vector<256x16xf32>
      %cst_51 = arith.constant dense<0xFF800000> : vector<16xf32>
      %166 = vector.multi_reduction <maximumf>, %165, %cst_51 [0] : vector<256x16xf32> to vector<16xf32>
      %167 = vector.shape_cast %166 : vector<16xf32> to vector<1x16xf32>
      %c2_i32_52 = arith.constant 2 : i32
      %168 = vector.broadcast %c2_i32_52 : i32 to vector<4x1xi32>
      %169 = arith.cmpi eq, %43, %168 : vector<4x1xi32>
      %170 = vector.broadcast %167 : vector<1x16xf32> to vector<4x16xf32>
      %171 = arith.maximumf %160, %170 : vector<4x16xf32>
      %172 = vector.shape_cast %169 : vector<4x1xi1> to vector<4x1xi1>
      %173 = vector.broadcast %172 : vector<4x1xi1> to vector<4x16xi1>
      %174 = arith.select %173, %171, %160 : vector<4x16xi1>, vector<4x16xf32>
      %175 = vector.extract_strided_slice %42 {offsets = [0, 3], sizes = [256, 1], strides = [1, 1]} : vector<256x4xf32> to vector<256x1xf32>
      %176 = vector.shape_cast %175 : vector<256x1xf32> to vector<256x1xf32>
      %177 = vector.broadcast %176 : vector<256x1xf32> to vector<256x16xf32>
      %178 = vector.broadcast %cst_2 : f32 to vector<256x16xf32>
      %179 = arith.select %19, %177, %178 : vector<256x16xi1>, vector<256x16xf32>
      %cst_53 = arith.constant dense<0xFF800000> : vector<16xf32>
      %180 = vector.multi_reduction <maximumf>, %179, %cst_53 [0] : vector<256x16xf32> to vector<16xf32>
      %181 = vector.shape_cast %180 : vector<16xf32> to vector<1x16xf32>
      %c3_i32_54 = arith.constant 3 : i32
      %182 = vector.broadcast %c3_i32_54 : i32 to vector<4x1xi32>
      %183 = arith.cmpi eq, %43, %182 : vector<4x1xi32>
      %184 = vector.broadcast %181 : vector<1x16xf32> to vector<4x16xf32>
      %185 = arith.maximumf %174, %184 : vector<4x16xf32>
      %186 = vector.shape_cast %183 : vector<4x1xi1> to vector<4x1xi1>
      %187 = vector.broadcast %186 : vector<4x1xi1> to vector<4x16xi1>
      %188 = arith.select %187, %185, %174 : vector<4x16xi1>, vector<4x16xf32>
      %189 = arith.truncf %188 : vector<4x16xf32> to vector<4x16xbf16>
      %190 = arith.extf %189 : vector<4x16xbf16> to vector<4x16xf32>
      %c0_55 = arith.constant 0 : index
      %c0_56 = arith.constant 0 : index
      %191 = vector.load %arg16[%c0_55, %c0_56] : memref<4x16xf32, #tpu.memory_space<vmem>>, vector<4x16xf32>
      tpu.vector_store %arg16[%c0_55, %c0_56], %190 {strides = array<i32>} : memref<4x16xf32, #tpu.memory_space<vmem>>, vector<4x16xf32>,
      %192 = arith.subf %132, %190 : vector<4x16xf32>
      %193 = math.exp %192 : vector<4x16xf32>
      %194 = arith.truncf %190 : vector<4x16xf32> to vector<4x16xbf16>
      %cst_57 = arith.constant dense<0.000000e+00> : vector<256x4xf32>
      %195 = tpu.matmul %22, %194, %cst_57 {dimension_numbers = #tpu.dot_dimension_numbers<[1], [1], [0], [0], [0, 0, 1, 0], [], []>} : vector<256x16xbf16>, vector<4x16xbf16>, vector<256x4xf32> -> vector<256x4xf32>
      %196 = arith.subf %42, %195 : vector<256x4xf32>
      %197 = vector.shape_cast %27 : vector<256x1xi1> to vector<256x1xi1>
      %198 = vector.broadcast %197 : vector<256x1xi1> to vector<256x4xi1>
      %199 = vector.broadcast %cst_2 : f32 to vector<256x4xf32>
      %200 = arith.select %198, %196, %199 : vector<256x4xi1>, vector<256x4xf32>
      %201 = math.exp %200 : vector<256x4xf32>
      %202 = arith.truncf %201 : vector<256x4xf32> to vector<256x4xbf16>
      %cst_58 = arith.constant dense<0.000000e+00> : vector<4x16xf32>
      %203 = tpu.matmul %202, %22, %cst_58 {dimension_numbers = #tpu.dot_dimension_numbers<[0], [0], [1], [1], [0, 1, 1, 1], [], []>} : vector<256x4xbf16>, vector<256x16xbf16>, vector<4x16xf32> -> vector<4x16xf32>
      %c0_59 = arith.constant 0 : index
      %c0_60 = arith.constant 0 : index
      %204 = vector.load %arg17[%c0_59, %c0_60] : memref<4x16xf32, #tpu.memory_space<vmem>>, vector<4x16xf32>
      %205 = arith.mulf %193, %204 : vector<4x16xf32>
      %206 = arith.addf %205, %203 : vector<4x16xf32>
      %c0_61 = arith.constant 0 : index
      %c0_62 = arith.constant 0 : index
      %207 = vector.load %arg17[%c0_61, %c0_62] : memref<4x16xf32, #tpu.memory_space<vmem>>, vector<4x16xf32>
      tpu.vector_store %arg17[%c0_61, %c0_62], %206 {strides = array<i32>} : memref<4x16xf32, #tpu.memory_space<vmem>>, vector<4x16xf32>,
      %cst_63 = arith.constant dense<0.000000e+00> : vector<256x128xf32>
      %208 = tpu.matmul %202, %12, %cst_63 {dimension_numbers = #tpu.dot_dimension_numbers<[1], [0], [0], [1], [0, 0, 1, 1], [], []>} : vector<256x4xbf16>, vector<4x128xbf16>, vector<256x128xf32> -> vector<256x128xf32>
      %209 = arith.extf %131 : vector<256x128xbf16> to vector<256x128xf32>
      %210 = arith.mulf %208, %209 : vector<256x128xf32>
      %211 = arith.truncf %210 : vector<256x128xf32> to vector<256x128xbf16>
      %cst_64 = arith.constant dense<0.000000e+00> : vector<16x128xf32>
      %212 = tpu.matmul %22, %211, %cst_64 {dimension_numbers = #tpu.dot_dimension_numbers<[0], [0], [1], [1], [0, 1, 1, 1], [], []>} : vector<256x16xbf16>, vector<256x128xbf16>, vector<16x128xf32> -> vector<16x128xf32>
      %cst_65 = arith.constant dense<0.000000e+00> : vector<16x128xf32>
      %213 = tpu.matmul %193, %11, %cst_65 {dimension_numbers = #tpu.dot_dimension_numbers<[0], [0], [1], [1], [0, 1, 1, 1], [], []>, precision = #tpu.contract_precision<fp32>} : vector<4x16xf32>, vector<4x128xf32>, vector<16x128xf32> -> vector<16x128xf32>
      %c0_66 = arith.constant 0 : index
      %c0_67 = arith.constant 0 : index
      %214 = vector.load %arg18[%c0_66, %c0_67] : memref<16x128xf32, #tpu.memory_space<vmem>>, vector<16x128xf32>
      %215 = arith.mulf %213, %214 : vector<16x128xf32>
      %216 = arith.addf %215, %212 : vector<16x128xf32>
      %c0_68 = arith.constant 0 : index
      %c0_69 = arith.constant 0 : index
      %217 = vector.load %arg18[%c0_68, %c0_69] : memref<16x128xf32, #tpu.memory_space<vmem>>, vector<16x128xf32>
      tpu.vector_store %arg18[%c0_68, %c0_69], %216 {strides = array<i32>} : memref<16x128xf32, #tpu.memory_space<vmem>>, vector<16x128xf32>,
    } else {
    }
    %c0_i32_4 = arith.constant 0 : i32
    %8 = arith.cmpi eq, %arg1, %c0_i32_4 : i32
    %9 = arith.extui %8 : i1 to i32
    %c0_i32_5 = arith.constant 0 : i32
    %10 = arith.cmpi ne, %9, %c0_i32_5 : i32
    scf.if %10 {
      %c0 = arith.constant 0 : index
      %c0_6 = arith.constant 0 : index
      %11 = vector.load %arg11[%c0, %c0_6] : memref<4x128xf32, #tpu.memory_space<vmem>>, vector<4x128xf32>
      %c0_7 = arith.constant 0 : index
      %c0_8 = arith.constant 0 : index
      %12 = vector.load %arg10[%c0_7, %c0_8] : memref<16x128xf32, #tpu.memory_space<vmem>>, vector<16x128xf32>
      %c0_9 = arith.constant 0 : index
      %c0_10 = arith.constant 0 : index
      %13 = vector.load %arg14[%c0_9, %c0_10] : memref<4x16xf32, #tpu.memory_space<vmem>>, vector<4x16xf32>
      %cst_11 = arith.constant 0.000000e+00 : f32
      %14 = vector.broadcast %cst_11 : f32 to vector<4x16xf32>
      %15 = arith.cmpf ogt, %13, %14 : vector<4x16xf32>
      %cst_12 = arith.constant 1.000000e+00 : f32
      %16 = vector.broadcast %cst_12 : f32 to vector<4x16xf32>
      %17 = arith.divf %16, %13 : vector<4x16xf32>
      %cst_13 = arith.constant 0.000000e+00 : f32
      %18 = vector.broadcast %cst_13 : f32 to vector<4x16xf32>
      %19 = arith.select %15, %17, %18 : vector<4x16xi1>, vector<4x16xf32>
      %cst_14 = arith.constant dense<0.000000e+00> : vector<16x128xf32>
      %20 = tpu.matmul %19, %11, %cst_14 {dimension_numbers = #tpu.dot_dimension_numbers<[0], [0], [1], [1], [0, 1, 1, 1], [], []>, precision = #tpu.contract_precision<fp32>} : vector<4x16xf32>, vector<4x128xf32>, vector<16x128xf32> -> vector<16x128xf32>
      %c0_15 = arith.constant 0 : index
      %c0_16 = arith.constant 0 : index
      %21 = vector.load %arg15[%c0_15, %c0_16] : memref<16x128xf32, #tpu.memory_space<vmem>>, vector<16x128xf32>
      %22 = arith.mulf %21, %20 : vector<16x128xf32>
      %23 = arith.addf %12, %22 : vector<16x128xf32>
      %c0_17 = arith.constant 0 : index
      %c0_18 = arith.constant 0 : index
      %24 = vector.load %arg17[%c0_17, %c0_18] : memref<4x16xf32, #tpu.memory_space<vmem>>, vector<4x16xf32>
      %cst_19 = arith.constant 0.000000e+00 : f32
      %25 = vector.broadcast %cst_19 : f32 to vector<4x16xf32>
      %26 = arith.cmpf ogt, %24, %25 : vector<4x16xf32>
      %cst_20 = arith.constant 1.000000e+00 : f32
      %27 = vector.broadcast %cst_20 : f32 to vector<4x16xf32>
      %28 = arith.divf %27, %24 : vector<4x16xf32>
      %cst_21 = arith.constant 0.000000e+00 : f32
      %29 = vector.broadcast %cst_21 : f32 to vector<4x16xf32>
      %30 = arith.select %26, %28, %29 : vector<4x16xi1>, vector<4x16xf32>
      %cst_22 = arith.constant dense<0.000000e+00> : vector<16x128xf32>
      %31 = tpu.matmul %30, %11, %cst_22 {dimension_numbers = #tpu.dot_dimension_numbers<[0], [0], [1], [1], [0, 1, 1, 1], [], []>, precision = #tpu.contract_precision<fp32>} : vector<4x16xf32>, vector<4x128xf32>, vector<16x128xf32> -> vector<16x128xf32>
      %c0_23 = arith.constant 0 : index
      %c0_24 = arith.constant 0 : index
      %32 = vector.load %arg18[%c0_23, %c0_24] : memref<16x128xf32, #tpu.memory_space<vmem>>, vector<16x128xf32>
      %33 = arith.mulf %32, %31 : vector<16x128xf32>
      %34 = arith.addf %23, %33 : vector<16x128xf32>
      %c0_25 = arith.constant 0 : index
      %c0_26 = arith.constant 0 : index
      %35 = vector.load %arg12[%c0_25, %c0_26] : memref<16x128xf32, #tpu.memory_space<vmem>>, vector<16x128xf32>
      tpu.vector_store %arg12[%c0_25, %c0_26], %34 {strides = array<i32>} : memref<16x128xf32, #tpu.memory_space<vmem>>, vector<16x128xf32>,
    } else {
    }
    return
  }
  func.func @transform_0(%arg0: i32, %arg1: i32, %arg2: memref<1xi32, #tpu.memory_space<smem>>, %arg3: memref<1xi32, #tpu.memory_space<smem>>) -> (i32, i32) {
    %0 = arith.index_cast %arg0 : i32 to index
    %1 = memref.load %arg2[%0] : memref<1xi32, #tpu.memory_space<smem>>
    %2 = arith.addi %1, %arg1 : i32
    %3 = arith.index_cast %arg0 : i32 to index
    %4 = memref.load %arg2[%3] : memref<1xi32, #tpu.memory_space<smem>>
    %5 = arith.index_cast %arg0 : i32 to index
    %6 = memref.load %arg3[%5] : memref<1xi32, #tpu.memory_space<smem>>
    %c1_i32 = arith.constant 1 : i32
    %7 = arith.maxsi %6, %c1_i32 : i32
    %8 = arith.addi %4, %7 : i32
    %c1_i32_0 = arith.constant 1 : i32
    %9 = arith.subi %8, %c1_i32_0 : i32
    %10 = arith.minsi %2, %9 : i32
    %c0_i32 = arith.constant 0 : i32
    %11 = arith.minsi %10, %c0_i32 : i32
    %c0_i32_1 = arith.constant 0 : i32
    %c0_i32_2 = arith.constant 0 : i32
    return %11, %c0_i32_1 : i32, i32
  }
  func.func @transform_1(%arg0: i32, %arg1: i32, %arg2: memref<1xi32, #tpu.memory_space<smem>>, %arg3: memref<1xi32, #tpu.memory_space<smem>>) -> (i32, i32) {
    %0 = arith.index_cast %arg0 : i32 to index
    %1 = memref.load %arg2[%0] : memref<1xi32, #tpu.memory_space<smem>>
    %2 = arith.addi %1, %arg1 : i32
    %3 = arith.index_cast %arg0 : i32 to index
    %4 = memref.load %arg2[%3] : memref<1xi32, #tpu.memory_space<smem>>
    %5 = arith.index_cast %arg0 : i32 to index
    %6 = memref.load %arg3[%5] : memref<1xi32, #tpu.memory_space<smem>>
    %c1_i32 = arith.constant 1 : i32
    %7 = arith.maxsi %6, %c1_i32 : i32
    %8 = arith.addi %4, %7 : i32
    %c1_i32_0 = arith.constant 1 : i32
    %9 = arith.subi %8, %c1_i32_0 : i32
    %10 = arith.minsi %2, %9 : i32
    %c0_i32 = arith.constant 0 : i32
    %11 = arith.minsi %10, %c0_i32 : i32
    %c0_i32_1 = arith.constant 0 : i32
    %c0_i32_2 = arith.constant 0 : i32
    return %11, %c0_i32_1 : i32, i32
  }
  func.func @transform_2(%arg0: i32, %arg1: i32, %arg2: memref<1xi32, #tpu.memory_space<smem>>, %arg3: memref<1xi32, #tpu.memory_space<smem>>) -> (i32, i32) {
    %0 = arith.index_cast %arg0 : i32 to index
    %1 = memref.load %arg2[%0] : memref<1xi32, #tpu.memory_space<smem>>
    %2 = arith.addi %1, %arg1 : i32
    %3 = arith.index_cast %arg0 : i32 to index
    %4 = memref.load %arg2[%3] : memref<1xi32, #tpu.memory_space<smem>>
    %5 = arith.index_cast %arg0 : i32 to index
    %6 = memref.load %arg3[%5] : memref<1xi32, #tpu.memory_space<smem>>
    %c1_i32 = arith.constant 1 : i32
    %7 = arith.maxsi %6, %c1_i32 : i32
    %8 = arith.addi %4, %7 : i32
    %c1_i32_0 = arith.constant 1 : i32
    %9 = arith.subi %8, %c1_i32_0 : i32
    %10 = arith.minsi %2, %9 : i32
    %c0_i32 = arith.constant 0 : i32
    %11 = arith.minsi %10, %c0_i32 : i32
    %c0_i32_1 = arith.constant 0 : i32
    %c0_i32_2 = arith.constant 0 : i32
    return %11, %c0_i32_1 : i32, i32
  }
  func.func @transform_3(%arg0: i32, %arg1: i32, %arg2: memref<1xi32, #tpu.memory_space<smem>>, %arg3: memref<1xi32, #tpu.memory_space<smem>>) -> (i32, i32) {
    %0 = arith.index_cast %arg0 : i32 to index
    %1 = memref.load %arg2[%0] : memref<1xi32, #tpu.memory_space<smem>>
    %2 = arith.addi %1, %arg1 : i32
    %3 = arith.index_cast %arg0 : i32 to index
    %4 = memref.load %arg2[%3] : memref<1xi32, #tpu.memory_space<smem>>
    %5 = arith.index_cast %arg0 : i32 to index
    %6 = memref.load %arg3[%5] : memref<1xi32, #tpu.memory_space<smem>>
    %c1_i32 = arith.constant 1 : i32
    %7 = arith.maxsi %6, %c1_i32 : i32
    %8 = arith.addi %4, %7 : i32
    %c1_i32_0 = arith.constant 1 : i32
    %9 = arith.subi %8, %c1_i32_0 : i32
    %10 = arith.minsi %2, %9 : i32
    %c0_i32 = arith.constant 0 : i32
    %11 = arith.minsi %10, %c0_i32 : i32
    %c0_i32_1 = arith.constant 0 : i32
    %c0_i32_2 = arith.constant 0 : i32
    return %11, %c0_i32_1 : i32, i32
  }
  func.func @transform_4(%arg0: i32, %arg1: i32, %arg2: memref<1xi32, #tpu.memory_space<smem>>, %arg3: memref<1xi32, #tpu.memory_space<smem>>) -> (i32, i32) {
    %0 = arith.index_cast %arg0 : i32 to index
    %1 = memref.load %arg2[%0] : memref<1xi32, #tpu.memory_space<smem>>
    %2 = arith.addi %1, %arg1 : i32
    %3 = arith.index_cast %arg0 : i32 to index
    %4 = memref.load %arg2[%3] : memref<1xi32, #tpu.memory_space<smem>>
    %5 = arith.index_cast %arg0 : i32 to index
    %6 = memref.load %arg3[%5] : memref<1xi32, #tpu.memory_space<smem>>
    %c1_i32 = arith.constant 1 : i32
    %7 = arith.maxsi %6, %c1_i32 : i32
    %8 = arith.addi %4, %7 : i32
    %c1_i32_0 = arith.constant 1 : i32
    %9 = arith.subi %8, %c1_i32_0 : i32
    %10 = arith.minsi %2, %9 : i32
    %c0_i32 = arith.constant 0 : i32
    %11 = arith.minsi %10, %c0_i32 : i32
    %c0_i32_1 = arith.constant 0 : i32
    %c0_i32_2 = arith.constant 0 : i32
    return %11, %c0_i32_1 : i32, i32
  }
  func.func @transform_5(%arg0: i32, %arg1: i32, %arg2: memref<1xi32, #tpu.memory_space<smem>>, %arg3: memref<1xi32, #tpu.memory_space<smem>>) -> (i32, i32) {
    %0 = arith.index_cast %arg0 : i32 to index
    %1 = memref.load %arg2[%0] : memref<1xi32, #tpu.memory_space<smem>>
    %2 = arith.addi %1, %arg1 : i32
    %3 = arith.index_cast %arg0 : i32 to index
    %4 = memref.load %arg2[%3] : memref<1xi32, #tpu.memory_space<smem>>
    %5 = arith.index_cast %arg0 : i32 to index
    %6 = memref.load %arg3[%5] : memref<1xi32, #tpu.memory_space<smem>>
    %c1_i32 = arith.constant 1 : i32
    %7 = arith.maxsi %6, %c1_i32 : i32
    %8 = arith.addi %4, %7 : i32
    %c1_i32_0 = arith.constant 1 : i32
    %9 = arith.subi %8, %c1_i32_0 : i32
    %10 = arith.minsi %2, %9 : i32
    %c0_i32 = arith.constant 0 : i32
    %11 = arith.minsi %10, %c0_i32 : i32
    %c0_i32_1 = arith.constant 0 : i32
    %c0_i32_2 = arith.constant 0 : i32
    return %11, %c0_i32_1 : i32, i32
  }
  func.func @transform_6(%arg0: i32, %arg1: i32, %arg2: memref<1xi32, #tpu.memory_space<smem>>, %arg3: memref<1xi32, #tpu.memory_space<smem>>) -> (i32, i32) {
    %c0_i32 = arith.constant 0 : i32
    %c0_i32_0 = arith.constant 0 : i32
    return %arg0, %c0_i32 : i32, i32
  }
  func.func @transform_7(%arg0: i32, %arg1: i32, %arg2: memref<1xi32, #tpu.memory_space<smem>>, %arg3: memref<1xi32, #tpu.memory_space<smem>>) -> (i32, i32) {
    %c0_i32 = arith.constant 0 : i32
    %c0_i32_0 = arith.constant 0 : i32
    %c0_i32_1 = arith.constant 0 : i32
    return %c0_i32, %c0_i32_0 : i32, i32
  }
  func.func @transform_8(%arg0: i32, %arg1: i32, %arg2: memref<1xi32, #tpu.memory_space<smem>>, %arg3: memref<1xi32, #tpu.memory_space<smem>>) -> (i32, i32) {
    %c0_i32 = arith.constant 0 : i32
    %c0_i32_0 = arith.constant 0 : i32
    return %arg0, %c0_i32 : i32, i32
  }
}

</mosaic_0001>

<llo_original>
// kernel: tpu_custom_call.1
$region0: #{tpu_custom_call.1}
  #allocation0 [shape = 'u32[]', space=smem, size = 0x4, offset = 0x4, fixed_abs, tag = 'smem constant byte address 0x4 - core index']
  #allocation1 [shape = 'u32[72,128]{1,0:T(1,128)}', space=vmem, size = 0x9000, scoped, tag = 'internal scratch']
  #allocation2 [shape = 'f32[4,16]{1,0:T(4,128)}', space=vmem, size = 0x800, scoped, tag = 'scratch operand']
  #allocation3 [shape = 'f32[4,16]{1,0:T(4,128)}', space=vmem, size = 0x800, scoped, tag = 'scratch operand']
  #allocation4 [shape = 'f32[16,128]{1,0:T(8,128)}', space=vmem, size = 0x2000, scoped, tag = 'scratch operand']
  #allocation5 [shape = 'f32[4,16]{1,0:T(4,128)}', space=vmem, size = 0x800, scoped, tag = 'scratch operand']
  #allocation6 [shape = 'f32[4,16]{1,0:T(4,128)}', space=vmem, size = 0x800, scoped, tag = 'scratch operand']
  #allocation7 [shape = 'f32[16,128]{1,0:T(8,128)}', space=vmem, size = 0x2000, scoped, tag = 'scratch operand']
  #allocation8 [shape = 's32[1]{0}', space=sflag, size = 0x4, scoped, tag = 'scoped memory for tpu_custom_call.1']
  #allocation9 [shape = 's32[1]{0:T(128)S(6)}', space=smem, size = 0x200, scoped, tag = 'prefetched SMEM operand 0']
  #allocation10 [shape = 's32[1]{0:T(128)S(6)}', space=smem, size = 0x200, scoped, tag = 'prefetched SMEM operand 1']
  %s0 = inlined_call_operand.<no memory space> [shape: s32[1], index: 0, kind: input, shape index: {}]
  %s1 = inlined_call_operand.<no memory space> [shape: s32[1], index: 1, kind: input, shape index: {}]
  %s2 = inlined_call_operand.vmem [shape: s32[256,1], index: 2, kind: input, shape index: {}]
  %s3 = inlined_call_operand.vmem [shape: f32[256,4], index: 3, kind: input, shape index: {}]
  %s4 = inlined_call_operand.vmem [shape: f32[256,4], index: 4, kind: input, shape index: {}]
  %s5 = inlined_call_operand.vmem [shape: f32[256,4], index: 5, kind: input, shape index: {}]
  %s6 = inlined_call_operand.vmem [shape: bf16[256,128], index: 6, kind: input, shape index: {}]
  %s7 = inlined_call_operand.vmem [shape: bf16[256,128], index: 7, kind: input, shape index: {}]
  %s8 = inlined_call_operand.vmem [shape: f32[16,128], index: 8, kind: input, shape index: {}]
  %s9 = inlined_call_operand.vmem [shape: f32[4,128], index: 9, kind: input, shape index: {}]
  %s10 = inlined_call_operand.hbm [shape: f32[16,128], index: 10, kind: output, shape index: {}]
  %s11 = sld [smem:[#allocation0]]
  $region54: #{tpu_custom_call.1} parent=0
    _
  %s13 = ssub.s32 1, %s11
  %s14 = scalar_select 0, %s13, %s11
  %15 = sst [smem:[#allocation9]] %s0
  %16 = sst [smem:[#allocation10]] %s1
  $region1: #{tpu_custom_call.1} parent=0
    #allocation11 [shape = 'u8[8192]{0}', space=vmem, size = 0x2000, scoped, tag = 'output window, operand 0, single buffered']
    #allocation12 [shape = 's32[1]{0}', space=sflag, size = 0x4, scoped, tag = 'scoped memory for tpu_custom_call.1']
    %17 = vsyncpa [#allocation12], 0
    // Predicated region
    $region2: #{tpu_custom_call.1} parent=1 // pred_check
      _
    $region3: #{tpu_custom_call.1} parent=1 // pred_check_branch
      %19 = sbr.rel (0) target = $region5
    $region4: #{tpu_custom_call.1} parent=1 // pred_region
      %s20 = sld [smem:[#allocation9]]
      %s21 = sadd.s32 %s20, 0
      %s22 = sld [smem:[#allocation10]]
      %p23 = scmp.gt.s32.totalorder %s22, 1
      %s24 = scalar_select %p23, %s22, 1
      %s25 = sadd.s32 %s20, %s24
      %s26 = ssub.s32 %s25, 1
      %p27 = scmp.lt.s32.totalorder %s21, %s26
      %s28 = scalar_select %p27, %s21, %s26
      %p29 = scmp.lt.s32.totalorder %s28, 0
      %s30 = scalar_select %p29, %s28, 0
      %s31 = smul.u32 32, %s30
      %p32 = scmp.lt.s32.totalorder %s31, 31
      %s33 = scalar_select %p32, %s31, 31
      %s34 = smul.addr %s33, 8
      %s35 = scalar_lea.vmem %s2, %s34
      %s36 = sld [smem:[#allocation9]]
      %s37 = sadd.s32 %s36, 0
      %s38 = sld [smem:[#allocation10]]
      %p39 = scmp.gt.s32.totalorder %s38, 1
      %s40 = scalar_select %p39, %s38, 1
      %s41 = sadd.s32 %s36, %s40
      %s42 = ssub.s32 %s41, 1
      %p43 = scmp.lt.s32.totalorder %s37, %s42
      %s44 = scalar_select %p43, %s37, %s42
      %p45 = scmp.lt.s32.totalorder %s44, 0
      %s46 = scalar_select %p45, %s44, 0
      %s47 = smul.u32 32, %s46
    $region5: #{tpu_custom_call.1} parent=1 // pred_fallthru
      _
    // Predicated region
    $region6: #{tpu_custom_call.1} parent=1 // pred_check
      _
    $region7: #{tpu_custom_call.1} parent=1 // pred_check_branch
      %49 = sbr.rel (0) target = $region9
    $region8: #{tpu_custom_call.1} parent=1 // pred_region
      %s50 = sld [smem:[#allocation9]]
      %s51 = sadd.s32 %s50, 0
      %s52 = sld [smem:[#allocation10]]
      %p53 = scmp.gt.s32.totalorder %s52, 1
      %s54 = scalar_select %p53, %s52, 1
      %s55 = sadd.s32 %s50, %s54
      %s56 = ssub.s32 %s55, 1
      %p57 = scmp.lt.s32.totalorder %s51, %s56
      %s58 = scalar_select %p57, %s51, %s56
      %p59 = scmp.lt.s32.totalorder %s58, 0
      %s60 = scalar_select %p59, %s58, 0
      %s61 = smul.u32 32, %s60
      %p62 = scmp.lt.s32.totalorder %s61, 31
      %s63 = scalar_select %p62, %s61, 31
      %s64 = smul.addr %s63, 8
      %s65 = scalar_lea.vmem %s3, %s64
      %s66 = sld [smem:[#allocation9]]
      %s67 = sadd.s32 %s66, 0
      %s68 = sld [smem:[#allocation10]]
      %p69 = scmp.gt.s32.totalorder %s68, 1
      %s70 = scalar_select %p69, %s68, 1
      %s71 = sadd.s32 %s66, %s70
      %s72 = ssub.s32 %s71, 1
      %p73 = scmp.lt.s32.totalorder %s67, %s72
      %s74 = scalar_select %p73, %s67, %s72
      %p75 = scmp.lt.s32.totalorder %s74, 0
      %s76 = scalar_select %p75, %s74, 0
      %s77 = smul.u32 32, %s76
    $region9: #{tpu_custom_call.1} parent=1 // pred_fallthru
      _
    // Predicated region
    $region10: #{tpu_custom_call.1} parent=1 // pred_check
      _
    $region11: #{tpu_custom_call.1} parent=1 // pred_check_branch
      %79 = sbr.rel (0) target = $region13
    $region12: #{tpu_custom_call.1} parent=1 // pred_region
      %s80 = sld [smem:[#allocation9]]
      %s81 = sadd.s32 %s80, 0
      %s82 = sld [smem:[#allocation10]]
      %p83 = scmp.gt.s32.totalorder %s82, 1
      %s84 = scalar_select %p83, %s82, 1
      %s85 = sadd.s32 %s80, %s84
      %s86 = ssub.s32 %s85, 1
      %p87 = scmp.lt.s32.totalorder %s81, %s86
      %s88 = scalar_select %p87, %s81, %s86
      %p89 = scmp.lt.s32.totalorder %s88, 0
      %s90 = scalar_select %p89, %s88, 0
      %s91 = smul.u32 32, %s90
      %p92 = scmp.lt.s32.totalorder %s91, 31
      %s93 = scalar_select %p92, %s91, 31
      %s94 = smul.addr %s93, 8
      %s95 = scalar_lea.vmem %s4, %s94
      %s96 = sld [smem:[#allocation9]]
      %s97 = sadd.s32 %s96, 0
      %s98 = sld [smem:[#allocation10]]
      %p99 = scmp.gt.s32.totalorder %s98, 1
      %s100 = scalar_select %p99, %s98, 1
      %s101 = sadd.s32 %s96, %s100
      %s102 = ssub.s32 %s101, 1
      %p103 = scmp.lt.s32.totalorder %s97, %s102
      %s104 = scalar_select %p103, %s97, %s102
      %p105 = scmp.lt.s32.totalorder %s104, 0
      %s106 = scalar_select %p105, %s104, 0
      %s107 = smul.u32 32, %s106
    $region13: #{tpu_custom_call.1} parent=1 // pred_fallthru
      _
    // Predicated region
    $region14: #{tpu_custom_call.1} parent=1 // pred_check
      _
    $region15: #{tpu_custom_call.1} parent=1 // pred_check_branch
      %109 = sbr.rel (0) target = $region17
    $region16: #{tpu_custom_call.1} parent=1 // pred_region
      %s110 = sld [smem:[#allocation9]]
      %s111 = sadd.s32 %s110, 0
      %s112 = sld [smem:[#allocation10]]
      %p113 = scmp.gt.s32.totalorder %s112, 1
      %s114 = scalar_select %p113, %s112, 1
      %s115 = sadd.s32 %s110, %s114
      %s116 = ssub.s32 %s115, 1
      %p117 = scmp.lt.s32.totalorder %s111, %s116
      %s118 = scalar_select %p117, %s111, %s116
      %p119 = scmp.lt.s32.totalorder %s118, 0
      %s120 = scalar_select %p119, %s118, 0
      %s121 = smul.u32 32, %s120
      %p122 = scmp.lt.s32.totalorder %s121, 31
      %s123 = scalar_select %p122, %s121, 31
      %s124 = smul.addr %s123, 8
      %s125 = scalar_lea.vmem %s5, %s124
      %s126 = sld [smem:[#allocation9]]
      %s127 = sadd.s32 %s126, 0
      %s128 = sld [smem:[#allocation10]]
      %p129 = scmp.gt.s32.totalorder %s128, 1
      %s130 = scalar_select %p129, %s128, 1
      %s131 = sadd.s32 %s126, %s130
      %s132 = ssub.s32 %s131, 1
      %p133 = scmp.lt.s32.totalorder %s127, %s132
      %s134 = scalar_select %p133, %s127, %s132
      %p135 = scmp.lt.s32.totalorder %s134, 0
      %s136 = scalar_select %p135, %s134, 0
      %s137 = smul.u32 32, %s136
    $region17: #{tpu_custom_call.1} parent=1 // pred_fallthru
      _
    // Predicated region
    $region18: #{tpu_custom_call.1} parent=1 // pred_check
      _
    $region19: #{tpu_custom_call.1} parent=1 // pred_check_branch
      %139 = sbr.rel (0) target = $region21
    $region20: #{tpu_custom_call.1} parent=1 // pred_region
      %s140 = sld [smem:[#allocation9]]
      %s141 = sadd.s32 %s140, 0
      %s142 = sld [smem:[#allocation10]]
      %p143 = scmp.gt.s32.totalorder %s142, 1
      %s144 = scalar_select %p143, %s142, 1
      %s145 = sadd.s32 %s140, %s144
      %s146 = ssub.s32 %s145, 1
      %p147 = scmp.lt.s32.totalorder %s141, %s146
      %s148 = scalar_select %p147, %s141, %s146
      %p149 = scmp.lt.s32.totalorder %s148, 0
      %s150 = scalar_select %p149, %s148, 0
      %s151 = smul.u32 32, %s150
      %p152 = scmp.lt.s32.totalorder %s151, 31
      %s153 = scalar_select %p152, %s151, 31
      %s154 = smul.addr %s153, 4
      %s155 = scalar_lea.vmem %s6, %s154
      %s156 = sld [smem:[#allocation9]]
      %s157 = sadd.s32 %s156, 0
      %s158 = sld [smem:[#allocation10]]
      %p159 = scmp.gt.s32.totalorder %s158, 1
      %s160 = scalar_select %p159, %s158, 1
      %s161 = sadd.s32 %s156, %s160
      %s162 = ssub.s32 %s161, 1
      %p163 = scmp.lt.s32.totalorder %s157, %s162
      %s164 = scalar_select %p163, %s157, %s162
      %p165 = scmp.lt.s32.totalorder %s164, 0
      %s166 = scalar_select %p165, %s164, 0
      %s167 = smul.u32 32, %s166
    $region21: #{tpu_custom_call.1} parent=1 // pred_fallthru
      _
    // Predicated region
    $region22: #{tpu_custom_call.1} parent=1 // pred_check
      _
    $region23: #{tpu_custom_call.1} parent=1 // pred_check_branch
      %169 = sbr.rel (0) target = $region25
    $region24: #{tpu_custom_call.1} parent=1 // pred_region
      %s170 = sld [smem:[#allocation9]]
      %s171 = sadd.s32 %s170, 0
      %s172 = sld [smem:[#allocation10]]
      %p173 = scmp.gt.s32.totalorder %s172, 1
      %s174 = scalar_select %p173, %s172, 1
      %s175 = sadd.s32 %s170, %s174
      %s176 = ssub.s32 %s175, 1
      %p177 = scmp.lt.s32.totalorder %s171, %s176
      %s178 = scalar_select %p177, %s171, %s176
      %p179 = scmp.lt.s32.totalorder %s178, 0
      %s180 = scalar_select %p179, %s178, 0
      %s181 = smul.u32 32, %s180
      %p182 = scmp.lt.s32.totalorder %s181, 31
      %s183 = scalar_select %p182, %s181, 31
      %s184 = smul.addr %s183, 4
      %s185 = scalar_lea.vmem %s7, %s184
      %s186 = sld [smem:[#allocation9]]
      %s187 = sadd.s32 %s186, 0
      %s188 = sld [smem:[#allocation10]]
      %p189 = scmp.gt.s32.totalorder %s188, 1
      %s190 = scalar_select %p189, %s188, 1
      %s191 = sadd.s32 %s186, %s190
      %s192 = ssub.s32 %s191, 1
      %p193 = scmp.lt.s32.totalorder %s187, %s192
      %s194 = scalar_select %p193, %s187, %s192
      %p195 = scmp.lt.s32.totalorder %s194, 0
      %s196 = scalar_select %p195, %s194, 0
      %s197 = smul.u32 32, %s196
    $region25: #{tpu_custom_call.1} parent=1 // pred_fallthru
      _
    // Predicated region
    $region26: #{tpu_custom_call.1} parent=1 // pred_check
      _
    $region27: #{tpu_custom_call.1} parent=1 // pred_check_branch
      %199 = sbr.rel (0) target = $region29
    $region28: #{tpu_custom_call.1} parent=1 // pred_region
      _
    $region29: #{tpu_custom_call.1} parent=1 // pred_fallthru
      _
    // Predicated region
    $region30: #{tpu_custom_call.1} parent=1 // pred_check
      _
    $region31: #{tpu_custom_call.1} parent=1 // pred_check_branch
      %201 = sbr.rel (0) target = $region33
    $region32: #{tpu_custom_call.1} parent=1 // pred_region
      _
    $region33: #{tpu_custom_call.1} parent=1 // pred_fallthru
      _
    %s202 = sld [smem:[#allocation9]]
    %s203 = sadd.s32 %s202, 0
    %s204 = sld [smem:[#allocation10]]
    %p205 = scmp.gt.s32.totalorder %s204, 1
    %s206 = scalar_select %p205, %s204, 1
    %s207 = sadd.s32 %s202, %s206
    %s208 = ssub.s32 %s207, 1
    %p209 = scmp.lt.s32.totalorder %s203, %s208
    %s210 = scalar_select %p209, %s203, %s208
    %p211 = scmp.lt.s32.totalorder %s210, 0
    %s212 = scalar_select %p211, %s210, 0
    %s213 = smul.u32 32, %s212
    %p214 = scmp.lt.s32.totalorder %s213, 31
    %s215 = scalar_select %p214, %s213, 31
    %s216 = smul.addr %s215, 8
    %s217 = scalar_lea.vmem %s2, %s216
    %s218 = sld [smem:[#allocation9]]
    %s219 = sadd.s32 %s218, 0
    %s220 = sld [smem:[#allocation10]]
    %p221 = scmp.gt.s32.totalorder %s220, 1
    %s222 = scalar_select %p221, %s220, 1
    %s223 = sadd.s32 %s218, %s222
    %s224 = ssub.s32 %s223, 1
    %p225 = scmp.lt.s32.totalorder %s219, %s224
    %s226 = scalar_select %p225, %s219, %s224
    %p227 = scmp.lt.s32.totalorder %s226, 0
    %s228 = scalar_select %p227, %s226, 0
    %s229 = smul.u32 32, %s228
    %p230 = scmp.lt.s32.totalorder %s229, 31
    %s231 = scalar_select %p230, %s229, 31
    %s232 = smul.addr %s231, 8
    %s233 = scalar_lea.vmem %s3, %s232
    %s234 = sld [smem:[#allocation9]]
    %s235 = sadd.s32 %s234, 0
    %s236 = sld [smem:[#allocation10]]
    %p237 = scmp.gt.s32.totalorder %s236, 1
    %s238 = scalar_select %p237, %s236, 1
    %s239 = sadd.s32 %s234, %s238
    %s240 = ssub.s32 %s239, 1
    %p241 = scmp.lt.s32.totalorder %s235, %s240
    %s242 = scalar_select %p241, %s235, %s240
    %p243 = scmp.lt.s32.totalorder %s242, 0
    %s244 = scalar_select %p243, %s242, 0
    %s245 = smul.u32 32, %s244
    %p246 = scmp.lt.s32.totalorder %s245, 31
    %s247 = scalar_select %p246, %s245, 31
    %s248 = smul.addr %s247, 8
    %s249 = scalar_lea.vmem %s4, %s248
    %s250 = sld [smem:[#allocation9]]
    %s251 = sadd.s32 %s250, 0
    %s252 = sld [smem:[#allocation10]]
    %p253 = scmp.gt.s32.totalorder %s252, 1
    %s254 = scalar_select %p253, %s252, 1
    %s255 = sadd.s32 %s250, %s254
    %s256 = ssub.s32 %s255, 1
    %p257 = scmp.lt.s32.totalorder %s251, %s256
    %s258 = scalar_select %p257, %s251, %s256
    %p259 = scmp.lt.s32.totalorder %s258, 0
    %s260 = scalar_select %p259, %s258, 0
    %s261 = smul.u32 32, %s260
    %p262 = scmp.lt.s32.totalorder %s261, 31
    %s263 = scalar_select %p262, %s261, 31
    %s264 = smul.addr %s263, 8
    %s265 = scalar_lea.vmem %s5, %s264
    %s266 = sld [smem:[#allocation9]]
    %s267 = sadd.s32 %s266, 0
    %s268 = sld [smem:[#allocation10]]
    %p269 = scmp.gt.s32.totalorder %s268, 1
    %s270 = scalar_select %p269, %s268, 1
    %s271 = sadd.s32 %s266, %s270
    %s272 = ssub.s32 %s271, 1
    %p273 = scmp.lt.s32.totalorder %s267, %s272
    %s274 = scalar_select %p273, %s267, %s272
    %p275 = scmp.lt.s32.totalorder %s274, 0
    %s276 = scalar_select %p275, %s274, 0
    %s277 = smul.u32 32, %s276
    %p278 = scmp.lt.s32.totalorder %s277, 31
    %s279 = scalar_select %p278, %s277, 31
    %s280 = smul.addr %s279, 4
    %s281 = scalar_lea.vmem %s6, %s280
    %s282 = sld [smem:[#allocation9]]
    %s283 = sadd.s32 %s282, 0
    %s284 = sld [smem:[#allocation10]]
    %p285 = scmp.gt.s32.totalorder %s284, 1
    %s286 = scalar_select %p285, %s284, 1
    %s287 = sadd.s32 %s282, %s286
    %s288 = ssub.s32 %s287, 1
    %p289 = scmp.lt.s32.totalorder %s283, %s288
    %s290 = scalar_select %p289, %s283, %s288
    %p291 = scmp.lt.s32.totalorder %s290, 0
    %s292 = scalar_select %p291, %s290, 0
    %s293 = smul.u32 32, %s292
    %p294 = scmp.lt.s32.totalorder %s293, 31
    %s295 = scalar_select %p294, %s293, 31
    %s296 = smul.addr %s295, 4
    %s297 = scalar_lea.vmem %s7, %s296
    %s298 = sld [smem:[#allocation9]]
    %s299 = sadd.s32 %s298, 0
    %s300 = sld [smem:[#allocation10]]
    %p301 = scmp.gt.s32.totalorder %s300, 1
    %s302 = scalar_select %p301, %s300, 1
    %s303 = sadd.s32 %s298, %s302
    %s304 = ssub.s32 %s303, 1
    %p305 = scmp.lt.s32.totalorder %s299, %s304
    %s306 = scalar_select %p305, %s299, %s304
    %p307 = scmp.lt.s32.totalorder %s306, 0
    %s308 = scalar_select %p307, %s306, 0
    %s309 = smul.u32 32, %s308
    %p310 = scmp.lt.s32.totalorder %s309, 31
    %s311 = scalar_select %p310, %s309, 31
    %s312 = smul.addr %s311, 8
    %s313 = scalar_lea.vmem %s2, %s312
    %s314 = sld [smem:[#allocation9]]
    %s315 = sadd.s32 %s314, 0
    %s316 = sld [smem:[#allocation10]]
    %p317 = scmp.gt.s32.totalorder %s316, 1
    %s318 = scalar_select %p317, %s316, 1
    %s319 = sadd.s32 %s314, %s318
    %s320 = ssub.s32 %s319, 1
    %p321 = scmp.lt.s32.totalorder %s315, %s320
    %s322 = scalar_select %p321, %s315, %s320
    %p323 = scmp.lt.s32.totalorder %s322, 0
    %s324 = scalar_select %p323, %s322, 0
    %s325 = smul.u32 32, %s324
    %s326 = sld [smem:[#allocation9]]
    %s327 = sadd.s32 %s326, 0
    %s328 = sld [smem:[#allocation10]]
    %p329 = scmp.gt.s32.totalorder %s328, 1
    %s330 = scalar_select %p329, %s328, 1
    %s331 = sadd.s32 %s326, %s330
    %s332 = ssub.s32 %s331, 1
    %p333 = scmp.lt.s32.totalorder %s327, %s332
    %s334 = scalar_select %p333, %s327, %s332
    %p335 = scmp.lt.s32.totalorder %s334, 0
    %s336 = scalar_select %p335, %s334, 0
    %s337 = smul.u32 32, %s336
    %p338 = scmp.lt.s32.totalorder %s337, 31
    %s339 = scalar_select %p338, %s337, 31
    %s340 = smul.addr %s339, 8
    %s341 = scalar_lea.vmem %s3, %s340
    %s342 = sld [smem:[#allocation9]]
    %s343 = sadd.s32 %s342, 0
    %s344 = sld [smem:[#allocation10]]
    %p345 = scmp.gt.s32.totalorder %s344, 1
    %s346 = scalar_select %p345, %s344, 1
    %s347 = sadd.s32 %s342, %s346
    %s348 = ssub.s32 %s347, 1
    %p349 = scmp.lt.s32.totalorder %s343, %s348
    %s350 = scalar_select %p349, %s343, %s348
    %p351 = scmp.lt.s32.totalorder %s350, 0
    %s352 = scalar_select %p351, %s350, 0
    %s353 = smul.u32 32, %s352
    %s354 = sld [smem:[#allocation9]]
    %s355 = sadd.s32 %s354, 0
    %s356 = sld [smem:[#allocation10]]
    %p357 = scmp.gt.s32.totalorder %s356, 1
    %s358 = scalar_select %p357, %s356, 1
    %s359 = sadd.s32 %s354, %s358
    %s360 = ssub.s32 %s359, 1
    %p361 = scmp.lt.s32.totalorder %s355, %s360
    %s362 = scalar_select %p361, %s355, %s360
    %p363 = scmp.lt.s32.totalorder %s362, 0
    %s364 = scalar_select %p363, %s362, 0
    %s365 = smul.u32 32, %s364
    %p366 = scmp.lt.s32.totalorder %s365, 31
    %s367 = scalar_select %p366, %s365, 31
    %s368 = smul.addr %s367, 8
    %s369 = scalar_lea.vmem %s4, %s368
    %s370 = sld [smem:[#allocation9]]
    %s371 = sadd.s32 %s370, 0
    %s372 = sld [smem:[#allocation10]]
    %p373 = scmp.gt.s32.totalorder %s372, 1
    %s374 = scalar_select %p373, %s372, 1
    %s375 = sadd.s32 %s370, %s374
    %s376 = ssub.s32 %s375, 1
    %p377 = scmp.lt.s32.totalorder %s371, %s376
    %s378 = scalar_select %p377, %s371, %s376
    %p379 = scmp.lt.s32.totalorder %s378, 0
    %s380 = scalar_select %p379, %s378, 0
    %s381 = smul.u32 32, %s380
    %s382 = sld [smem:[#allocation9]]
    %s383 = sadd.s32 %s382, 0
    %s384 = sld [smem:[#allocation10]]
    %p385 = scmp.gt.s32.totalorder %s384, 1
    %s386 = scalar_select %p385, %s384, 1
    %s387 = sadd.s32 %s382, %s386
    %s388 = ssub.s32 %s387, 1
    %p389 = scmp.lt.s32.totalorder %s383, %s388
    %s390 = scalar_select %p389, %s383, %s388
    %p391 = scmp.lt.s32.totalorder %s390, 0
    %s392 = scalar_select %p391, %s390, 0
    %s393 = smul.u32 32, %s392
    %p394 = scmp.lt.s32.totalorder %s393, 31
    %s395 = scalar_select %p394, %s393, 31
    %s396 = smul.addr %s395, 8
    %s397 = scalar_lea.vmem %s5, %s396
    %s398 = sld [smem:[#allocation9]]
    %s399 = sadd.s32 %s398, 0
    %s400 = sld [smem:[#allocation10]]
    %p401 = scmp.gt.s32.totalorder %s400, 1
    %s402 = scalar_select %p401, %s400, 1
    %s403 = sadd.s32 %s398, %s402
    %s404 = ssub.s32 %s403, 1
    %p405 = scmp.lt.s32.totalorder %s399, %s404
    %s406 = scalar_select %p405, %s399, %s404
    %p407 = scmp.lt.s32.totalorder %s406, 0
    %s408 = scalar_select %p407, %s406, 0
    %s409 = smul.u32 32, %s408
    %s410 = sld [smem:[#allocation9]]
    %s411 = sadd.s32 %s410, 0
    %s412 = sld [smem:[#allocation10]]
    %p413 = scmp.gt.s32.totalorder %s412, 1
    %s414 = scalar_select %p413, %s412, 1
    %s415 = sadd.s32 %s410, %s414
    %s416 = ssub.s32 %s415, 1
    %p417 = scmp.lt.s32.totalorder %s411, %s416
    %s418 = scalar_select %p417, %s411, %s416
    %p419 = scmp.lt.s32.totalorder %s418, 0
    %s420 = scalar_select %p419, %s418, 0
    %s421 = smul.u32 32, %s420
    %p422 = scmp.lt.s32.totalorder %s421, 31
    %s423 = scalar_select %p422, %s421, 31
    %s424 = smul.addr %s423, 4
    %s425 = scalar_lea.vmem %s6, %s424
    %s426 = sld [smem:[#allocation9]]
    %s427 = sadd.s32 %s426, 0
    %s428 = sld [smem:[#allocation10]]
    %p429 = scmp.gt.s32.totalorder %s428, 1
    %s430 = scalar_select %p429, %s428, 1
    %s431 = sadd.s32 %s426, %s430
    %s432 = ssub.s32 %s431, 1
    %p433 = scmp.lt.s32.totalorder %s427, %s432
    %s434 = scalar_select %p433, %s427, %s432
    %p435 = scmp.lt.s32.totalorder %s434, 0
    %s436 = scalar_select %p435, %s434, 0
    %s437 = smul.u32 32, %s436
    %s438 = sld [smem:[#allocation9]]
    %s439 = sadd.s32 %s438, 0
    %s440 = sld [smem:[#allocation10]]
    %p441 = scmp.gt.s32.totalorder %s440, 1
    %s442 = scalar_select %p441, %s440, 1
    %s443 = sadd.s32 %s438, %s442
    %s444 = ssub.s32 %s443, 1
    %p445 = scmp.lt.s32.totalorder %s439, %s444
    %s446 = scalar_select %p445, %s439, %s444
    %p447 = scmp.lt.s32.totalorder %s446, 0
    %s448 = scalar_select %p447, %s446, 0
    %s449 = smul.u32 32, %s448
    %p450 = scmp.lt.s32.totalorder %s449, 31
    %s451 = scalar_select %p450, %s449, 31
    %s452 = smul.addr %s451, 4
    %s453 = scalar_lea.vmem %s7, %s452
    %s454 = sld [smem:[#allocation9]]
    %s455 = sadd.s32 %s454, 0
    %s456 = sld [smem:[#allocation10]]
    %p457 = scmp.gt.s32.totalorder %s456, 1
    %s458 = scalar_select %p457, %s456, 1
    %s459 = sadd.s32 %s454, %s458
    %s460 = ssub.s32 %s459, 1
    %p461 = scmp.lt.s32.totalorder %s455, %s460
    %s462 = scalar_select %p461, %s455, %s460
    %p463 = scmp.lt.s32.totalorder %s462, 0
    %s464 = scalar_select %p463, %s462, 0
    %s465 = smul.u32 32, %s464
    %p467 = scmp.eq.s32.totalorder 0, 0
    // Predicated region
    $region34: #{tpu_custom_call.1} parent=1 // pred_check
      %p468 = pneg %p467
    $region35: #{tpu_custom_call.1} parent=1 // pred_check_branch
      %470 = sbr.rel (%p468) target = $region37
    $region36: #{tpu_custom_call.1} parent=1 // pred_region
      %vm471 = vcmask 125952
      %472 = vst.msk [vmem:[#allocation2] sm:$0xf] %vm471, -1.2676506e+30
      %473 = vst.msk [vmem:[#allocation5] sm:$0xf] %vm471, -1.2676506e+30
      %474 = vst.msk [vmem:[#allocation3] sm:$0xf] %vm471, 0.0
      %475 = vst.msk [vmem:[#allocation6] sm:$0xf] %vm471, 0.0
      %476 = vst [vmem:[#allocation4] sm:$0xff] 0.0
      %477 = vst [vmem:[#allocation4 + $0x8] sm:$0xff] 0.0
      %478 = vst [vmem:[#allocation7] sm:$0xff] 0.0
      %479 = vst [vmem:[#allocation7 + $0x8] sm:$0xff] 0.0
    $region37: #{tpu_custom_call.1} parent=1 // pred_fallthru
      _
    %s480 = sld [smem:[#allocation10]]
    %p481 = scmp.lt.s32.totalorder 0, %s480
    // Predicated region
    $region38: #{tpu_custom_call.1} parent=1 // pred_check
      %p482 = pneg %p481
    $region39: #{tpu_custom_call.1} parent=1 // pred_check_branch
      %484 = sbr.rel (%p482) target = $region41
    $region40: #{tpu_custom_call.1} parent=1 // pred_region
      %v485 = vld [vmem:[%s9] sm:$0xf]
      %v486 = vpack.c.bf16 %v485, %v485
      %v487 = vld [vmem:[%s313] sm:$0xff]
      %v488 = vld [vmem:[%s313 + $0x8] sm:$0xff]
      %v489 = vld [vmem:[%s313 + $0x10] sm:$0xff]
      %v490 = vld [vmem:[%s313 + $0x18] sm:$0xff]
      %v491 = vld [vmem:[%s313 + $0x20] sm:$0xff]
      %v492 = vld [vmem:[%s313 + $0x28] sm:$0xff]
      %v493 = vld [vmem:[%s313 + $0x30] sm:$0xff]
      %v494 = vld [vmem:[%s313 + $0x38] sm:$0xff]
      %v495 = vld [vmem:[%s313 + $0x40] sm:$0xff]
      %v496 = vld [vmem:[%s313 + $0x48] sm:$0xff]
      %v497 = vld [vmem:[%s313 + $0x50] sm:$0xff]
      %v498 = vld [vmem:[%s313 + $0x58] sm:$0xff]
      %v499 = vld [vmem:[%s313 + $0x60] sm:$0xff]
      %v500 = vld [vmem:[%s313 + $0x68] sm:$0xff]
      %v501 = vld [vmem:[%s313 + $0x70] sm:$0xff]
      %v502 = vld [vmem:[%s313 + $0x78] sm:$0xff]
      %v503 = vld [vmem:[%s313 + $0x80] sm:$0xff]
      %v504 = vld [vmem:[%s313 + $0x88] sm:$0xff]
      %v505 = vld [vmem:[%s313 + $0x90] sm:$0xff]
      %v506 = vld [vmem:[%s313 + $0x98] sm:$0xff]
      %v507 = vld [vmem:[%s313 + $0xa0] sm:$0xff]
      %v508 = vld [vmem:[%s313 + $0xa8] sm:$0xff]
      %v509 = vld [vmem:[%s313 + $0xb0] sm:$0xff]
      %v510 = vld [vmem:[%s313 + $0xb8] sm:$0xff]
      %v511 = vld [vmem:[%s313 + $0xc0] sm:$0xff]
      %v512 = vld [vmem:[%s313 + $0xc8] sm:$0xff]
      %v513 = vld [vmem:[%s313 + $0xd0] sm:$0xff]
      %v514 = vld [vmem:[%s313 + $0xd8] sm:$0xff]
      %v515 = vld [vmem:[%s313 + $0xe0] sm:$0xff]
      %v516 = vld [vmem:[%s313 + $0xe8] sm:$0xff]
      %v517 = vld [vmem:[%s313 + $0xf0] sm:$0xff]
      %v518 = vld [vmem:[%s313 + $0xf8] sm:$0xff]
      %s519 = smul.u32 0, 16
      %v520 = vstv %s519
      %v521 = vsub.s32 %v487, %v520
      %v522 = vsub.s32 %v488, %v520
      %v523 = vsub.s32 %v489, %v520
      %v524 = vsub.s32 %v490, %v520
      %v525 = vsub.s32 %v491, %v520
      %v526 = vsub.s32 %v492, %v520
      %v527 = vsub.s32 %v493, %v520
      %v528 = vsub.s32 %v494, %v520
      %v529 = vsub.s32 %v495, %v520
      %v530 = vsub.s32 %v496, %v520
      %v531 = vsub.s32 %v497, %v520
      %v532 = vsub.s32 %v498, %v520
      %v533 = vsub.s32 %v499, %v520
      %v534 = vsub.s32 %v500, %v520
      %v535 = vsub.s32 %v501, %v520
      %v536 = vsub.s32 %v502, %v520
      %v537 = vsub.s32 %v503, %v520
      %v538 = vsub.s32 %v504, %v520
      %v539 = vsub.s32 %v505, %v520
      %v540 = vsub.s32 %v506, %v520
      %v541 = vsub.s32 %v507, %v520
      %v542 = vsub.s32 %v508, %v520
      %v543 = vsub.s32 %v509, %v520
      %v544 = vsub.s32 %v510, %v520
      %v545 = vsub.s32 %v511, %v520
      %v546 = vsub.s32 %v512, %v520
      %v547 = vsub.s32 %v513, %v520
      %v548 = vsub.s32 %v514, %v520
      %v549 = vsub.s32 %v515, %v520
      %v550 = vsub.s32 %v516, %v520
      %v551 = vsub.s32 %v517, %v520
      %v552 = vsub.s32 %v518, %v520
      %v553 = vlaneseq
      %v554 = vand.u32 %v553, 127
      %555 = vset.pattern.permute.xlu0 0
      %556 = vperm.xlu0 %555, %v521
      %v557 = vpop.permute.xlu0 %556
      %558 = vset.pattern.permute.xlu0 0
      %559 = vperm.xlu0 %558, %v522
      %v560 = vpop.permute.xlu0 %559
      %561 = vset.pattern.permute.xlu0 0
      %562 = vperm.xlu0 %561, %v523
      %v563 = vpop.permute.xlu0 %562
      %564 = vset.pattern.permute.xlu0 0
      %565 = vperm.xlu0 %564, %v524
      %v566 = vpop.permute.xlu0 %565
      %567 = vset.pattern.permute.xlu0 0
      %568 = vperm.xlu0 %567, %v525
      %v569 = vpop.permute.xlu0 %568
      %570 = vset.pattern.permute.xlu0 0
      %571 = vperm.xlu0 %570, %v526
      %v572 = vpop.permute.xlu0 %571
      %573 = vset.pattern.permute.xlu0 0
      %574 = vperm.xlu0 %573, %v527
      %v575 = vpop.permute.xlu0 %574
      %576 = vset.pattern.permute.xlu0 0
      %577 = vperm.xlu0 %576, %v528
      %v578 = vpop.permute.xlu0 %577
      %579 = vset.pattern.permute.xlu0 0
      %580 = vperm.xlu0 %579, %v529
      %v581 = vpop.permute.xlu0 %580
      %582 = vset.pattern.permute.xlu0 0
      %583 = vperm.xlu0 %582, %v530
      %v584 = vpop.permute.xlu0 %583
      %585 = vset.pattern.permute.xlu0 0
      %586 = vperm.xlu0 %585, %v531
      %v587 = vpop.permute.xlu0 %586
      %588 = vset.pattern.permute.xlu0 0
      %589 = vperm.xlu0 %588, %v532
      %v590 = vpop.permute.xlu0 %589
      %591 = vset.pattern.permute.xlu0 0
      %592 = vperm.xlu0 %591, %v533
      %v593 = vpop.permute.xlu0 %592
      %594 = vset.pattern.permute.xlu0 0
      %595 = vperm.xlu0 %594, %v534
      %v596 = vpop.permute.xlu0 %595
      %597 = vset.pattern.permute.xlu0 0
      %598 = vperm.xlu0 %597, %v535
      %v599 = vpop.permute.xlu0 %598
      %600 = vset.pattern.permute.xlu0 0
      %601 = vperm.xlu0 %600, %v536
      %v602 = vpop.permute.xlu0 %601
      %603 = vset.pattern.permute.xlu0 0
      %604 = vperm.xlu0 %603, %v537
      %v605 = vpop.permute.xlu0 %604
      %606 = vset.pattern.permute.xlu0 0
      %607 = vperm.xlu0 %606, %v538
      %v608 = vpop.permute.xlu0 %607
      %609 = vset.pattern.permute.xlu0 0
      %610 = vperm.xlu0 %609, %v539
      %v611 = vpop.permute.xlu0 %610
      %612 = vset.pattern.permute.xlu0 0
      %613 = vperm.xlu0 %612, %v540
      %v614 = vpop.permute.xlu0 %613
      %615 = vset.pattern.permute.xlu0 0
      %616 = vperm.xlu0 %615, %v541
      %v617 = vpop.permute.xlu0 %616
      %618 = vset.pattern.permute.xlu0 0
      %619 = vperm.xlu0 %618, %v542
      %v620 = vpop.permute.xlu0 %619
      %621 = vset.pattern.permute.xlu0 0
      %622 = vperm.xlu0 %621, %v543
      %v623 = vpop.permute.xlu0 %622
      %624 = vset.pattern.permute.xlu0 0
      %625 = vperm.xlu0 %624, %v544
      %v626 = vpop.permute.xlu0 %625
      %627 = vset.pattern.permute.xlu0 0
      %628 = vperm.xlu0 %627, %v545
      %v629 = vpop.permute.xlu0 %628
      %630 = vset.pattern.permute.xlu0 0
      %631 = vperm.xlu0 %630, %v546
      %v632 = vpop.permute.xlu0 %631
      %633 = vset.pattern.permute.xlu0 0
      %634 = vperm.xlu0 %633, %v547
      %v635 = vpop.permute.xlu0 %634
      %636 = vset.pattern.permute.xlu0 0
      %637 = vperm.xlu0 %636, %v548
      %v638 = vpop.permute.xlu0 %637
      %639 = vset.pattern.permute.xlu0 0
      %640 = vperm.xlu0 %639, %v549
      %v641 = vpop.permute.xlu0 %640
      %642 = vset.pattern.permute.xlu0 0
      %643 = vperm.xlu0 %642, %v550
      %v644 = vpop.permute.xlu0 %643
      %645 = vset.pattern.permute.xlu0 0
      %646 = vperm.xlu0 %645, %v551
      %v647 = vpop.permute.xlu0 %646
      %648 = vset.pattern.permute.xlu0 0
      %649 = vperm.xlu0 %648, %v552
      %v650 = vpop.permute.xlu0 %649
      %vm651 = vcmp.eq.s32.totalorder %v554, %v557
      %vm652 = vcmp.eq.s32.totalorder %v554, %v560
      %vm653 = vcmp.eq.s32.totalorder %v554, %v563
      %vm654 = vcmp.eq.s32.totalorder %v554, %v566
      %vm655 = vcmp.eq.s32.totalorder %v554, %v569
      %vm656 = vcmp.eq.s32.totalorder %v554, %v572
      %vm657 = vcmp.eq.s32.totalorder %v554, %v575
      %vm658 = vcmp.eq.s32.totalorder %v554, %v578
      %vm659 = vcmp.eq.s32.totalorder %v554, %v581
      %vm660 = vcmp.eq.s32.totalorder %v554, %v584
      %vm661 = vcmp.eq.s32.totalorder %v554, %v587
      %vm662 = vcmp.eq.s32.totalorder %v554, %v590
      %vm663 = vcmp.eq.s32.totalorder %v554, %v593
      %vm664 = vcmp.eq.s32.totalorder %v554, %v596
      %vm665 = vcmp.eq.s32.totalorder %v554, %v599
      %vm666 = vcmp.eq.s32.totalorder %v554, %v602
      %vm667 = vcmp.eq.s32.totalorder %v554, %v605
      %vm668 = vcmp.eq.s32.totalorder %v554, %v608
      %vm669 = vcmp.eq.s32.totalorder %v554, %v611
      %vm670 = vcmp.eq.s32.totalorder %v554, %v614
      %vm671 = vcmp.eq.s32.totalorder %v554, %v617
      %vm672 = vcmp.eq.s32.totalorder %v554, %v620
      %vm673 = vcmp.eq.s32.totalorder %v554, %v623
      %vm674 = vcmp.eq.s32.totalorder %v554, %v626
      %vm675 = vcmp.eq.s32.totalorder %v554, %v629
      %vm676 = vcmp.eq.s32.totalorder %v554, %v632
      %vm677 = vcmp.eq.s32.totalorder %v554, %v635
      %vm678 = vcmp.eq.s32.totalorder %v554, %v638
      %vm679 = vcmp.eq.s32.totalorder %v554, %v641
      %vm680 = vcmp.eq.s32.totalorder %v554, %v644
      %vm681 = vcmp.eq.s32.totalorder %v554, %v647
      %vm682 = vcmp.eq.s32.totalorder %v554, %v650
      %v683 = vsel %vm651, 1, 0
      %v684 = vsel %vm652, 1, 0
      %v685 = vsel %vm653, 1, 0
      %v686 = vsel %vm654, 1, 0
      %v687 = vsel %vm655, 1, 0
      %v688 = vsel %vm656, 1, 0
      %v689 = vsel %vm657, 1, 0
      %v690 = vsel %vm658, 1, 0
      %v691 = vsel %vm659, 1, 0
      %v692 = vsel %vm660, 1, 0
      %v693 = vsel %vm661, 1, 0
      %v694 = vsel %vm662, 1, 0
      %v695 = vsel %vm663, 1, 0
      %v696 = vsel %vm664, 1, 0
      %v697 = vsel %vm665, 1, 0
      %v698 = vsel %vm666, 1, 0
      %v699 = vsel %vm667, 1, 0
      %v700 = vsel %vm668, 1, 0
      %v701 = vsel %vm669, 1, 0
      %v702 = vsel %vm670, 1, 0
      %v703 = vsel %vm671, 1, 0
      %v704 = vsel %vm672, 1, 0
      %v705 = vsel %vm673, 1, 0
      %v706 = vsel %vm674, 1, 0
      %v707 = vsel %vm675, 1, 0
      %v708 = vsel %vm676, 1, 0
      %v709 = vsel %vm677, 1, 0
      %v710 = vsel %vm678, 1, 0
      %v711 = vsel %vm679, 1, 0
      %v712 = vsel %vm680, 1, 0
      %v713 = vsel %vm681, 1, 0
      %v714 = vsel %vm682, 1, 0
      %v715 = vcvt.s32.f32 %v683
      %v716 = vcvt.s32.f32 %v684
      %v717 = vcvt.s32.f32 %v685
      %v718 = vcvt.s32.f32 %v686
      %v719 = vcvt.s32.f32 %v687
      %v720 = vcvt.s32.f32 %v688
      %v721 = vcvt.s32.f32 %v689
      %v722 = vcvt.s32.f32 %v690
      %v723 = vcvt.s32.f32 %v691
      %v724 = vcvt.s32.f32 %v692
      %v725 = vcvt.s32.f32 %v693
      %v726 = vcvt.s32.f32 %v694
      %v727 = vcvt.s32.f32 %v695
      %v728 = vcvt.s32.f32 %v696
      %v729 = vcvt.s32.f32 %v697
      %v730 = vcvt.s32.f32 %v698
      %v731 = vcvt.s32.f32 %v699
      %v732 = vcvt.s32.f32 %v700
      %v733 = vcvt.s32.f32 %v701
      %v734 = vcvt.s32.f32 %v702
      %v735 = vcvt.s32.f32 %v703
      %v736 = vcvt.s32.f32 %v704
      %v737 = vcvt.s32.f32 %v705
      %v738 = vcvt.s32.f32 %v706
      %v739 = vcvt.s32.f32 %v707
      %v740 = vcvt.s32.f32 %v708
      %v741 = vcvt.s32.f32 %v709
      %v742 = vcvt.s32.f32 %v710
      %v743 = vcvt.s32.f32 %v711
      %v744 = vcvt.s32.f32 %v712
      %v745 = vcvt.s32.f32 %v713
      %v746 = vcvt.s32.f32 %v714
      %v747 = vpack.c.bf16 %v716, %v715
      %v748 = vpack.c.bf16 %v718, %v717
      %v749 = vpack.c.bf16 %v720, %v719
      %v750 = vpack.c.bf16 %v722, %v721
      %v751 = vpack.c.bf16 %v724, %v723
      %v752 = vpack.c.bf16 %v726, %v725
      %v753 = vpack.c.bf16 %v728, %v727
      %v754 = vpack.c.bf16 %v730, %v729
      %v755 = vpack.c.bf16 %v732, %v731
      %v756 = vpack.c.bf16 %v734, %v733
      %v757 = vpack.c.bf16 %v736, %v735
      %v758 = vpack.c.bf16 %v738, %v737
      %v759 = vpack.c.bf16 %v740, %v739
      %v760 = vpack.c.bf16 %v742, %v741
      %v761 = vpack.c.bf16 %v744, %v743
      %v762 = vpack.c.bf16 %v746, %v745
      %vm763 = vcmp.ge.s32.totalorder %v521, 0
      %vm764 = vcmp.ge.s32.totalorder %v522, 0
      %vm765 = vcmp.ge.s32.totalorder %v523, 0
      %vm766 = vcmp.ge.s32.totalorder %v524, 0
      %vm767 = vcmp.ge.s32.totalorder %v525, 0
      %vm768 = vcmp.ge.s32.totalorder %v526, 0
      %vm769 = vcmp.ge.s32.totalorder %v527, 0
      %vm770 = vcmp.ge.s32.totalorder %v528, 0
      %vm771 = vcmp.ge.s32.totalorder %v529, 0
      %vm772 = vcmp.ge.s32.totalorder %v530, 0
      %vm773 = vcmp.ge.s32.totalorder %v531, 0
      %vm774 = vcmp.ge.s32.totalorder %v532, 0
      %vm775 = vcmp.ge.s32.totalorder %v533, 0
      %vm776 = vcmp.ge.s32.totalorder %v534, 0
      %vm777 = vcmp.ge.s32.totalorder %v535, 0
      %vm778 = vcmp.ge.s32.totalorder %v536, 0
      %vm779 = vcmp.ge.s32.totalorder %v537, 0
      %vm780 = vcmp.ge.s32.totalorder %v538, 0
      %vm781 = vcmp.ge.s32.totalorder %v539, 0
      %vm782 = vcmp.ge.s32.totalorder %v540, 0
      %vm783 = vcmp.ge.s32.totalorder %v541, 0
      %vm784 = vcmp.ge.s32.totalorder %v542, 0
      %vm785 = vcmp.ge.s32.totalorder %v543, 0
      %vm786 = vcmp.ge.s32.totalorder %v544, 0
      %vm787 = vcmp.ge.s32.totalorder %v545, 0
      %vm788 = vcmp.ge.s32.totalorder %v546, 0
      %vm789 = vcmp.ge.s32.totalorder %v547, 0
      %vm790 = vcmp.ge.s32.totalorder %v548, 0
      %vm791 = vcmp.ge.s32.totalorder %v549, 0
      %vm792 = vcmp.ge.s32.totalorder %v550, 0
      %vm793 = vcmp.ge.s32.totalorder %v551, 0
      %vm794 = vcmp.ge.s32.totalorder %v552, 0
      %vm795 = vcmp.lt.s32.totalorder %v521, 16
      %vm796 = vcmp.lt.s32.totalorder %v522, 16
      %vm797 = vcmp.lt.s32.totalorder %v523, 16
      %vm798 = vcmp.lt.s32.totalorder %v524, 16
      %vm799 = vcmp.lt.s32.totalorder %v525, 16
      %vm800 = vcmp.lt.s32.totalorder %v526, 16
      %vm801 = vcmp.lt.s32.totalorder %v527, 16
      %vm802 = vcmp.lt.s32.totalorder %v528, 16
      %vm803 = vcmp.lt.s32.totalorder %v529, 16
      %vm804 = vcmp.lt.s32.totalorder %v530, 16
      %vm805 = vcmp.lt.s32.totalorder %v531, 16
      %vm806 = vcmp.lt.s32.totalorder %v532, 16
      %vm807 = vcmp.lt.s32.totalorder %v533, 16
      %vm808 = vcmp.lt.s32.totalorder %v534, 16
      %vm809 = vcmp.lt.s32.totalorder %v535, 16
      %vm810 = vcmp.lt.s32.totalorder %v536, 16
      %vm811 = vcmp.lt.s32.totalorder %v537, 16
      %vm812 = vcmp.lt.s32.totalorder %v538, 16
      %vm813 = vcmp.lt.s32.totalorder %v539, 16
      %vm814 = vcmp.lt.s32.totalorder %v540, 16
      %vm815 = vcmp.lt.s32.totalorder %v541, 16
      %vm816 = vcmp.lt.s32.totalorder %v542, 16
      %vm817 = vcmp.lt.s32.totalorder %v543, 16
      %vm818 = vcmp.lt.s32.totalorder %v544, 16
      %vm819 = vcmp.lt.s32.totalorder %v545, 16
      %vm820 = vcmp.lt.s32.totalorder %v546, 16
      %vm821 = vcmp.lt.s32.totalorder %v547, 16
      %vm822 = vcmp.lt.s32.totalorder %v548, 16
      %vm823 = vcmp.lt.s32.totalorder %v549, 16
      %vm824 = vcmp.lt.s32.totalorder %v550, 16
      %vm825 = vcmp.lt.s32.totalorder %v551, 16
      %vm826 = vcmp.lt.s32.totalorder %v552, 16
      %vm827 = vmand %vm763, %vm795
      %vm828 = vmand %vm764, %vm796
      %vm829 = vmand %vm765, %vm797
      %vm830 = vmand %vm766, %vm798
      %vm831 = vmand %vm767, %vm799
      %vm832 = vmand %vm768, %vm800
      %vm833 = vmand %vm769, %vm801
      %vm834 = vmand %vm770, %vm802
      %vm835 = vmand %vm771, %vm803
      %vm836 = vmand %vm772, %vm804
      %vm837 = vmand %vm773, %vm805
      %vm838 = vmand %vm774, %vm806
      %vm839 = vmand %vm775, %vm807
      %vm840 = vmand %vm776, %vm808
      %vm841 = vmand %vm777, %vm809
      %vm842 = vmand %vm778, %vm810
      %vm843 = vmand %vm779, %vm811
      %vm844 = vmand %vm780, %vm812
      %vm845 = vmand %vm781, %vm813
      %vm846 = vmand %vm782, %vm814
      %vm847 = vmand %vm783, %vm815
      %vm848 = vmand %vm784, %vm816
      %vm849 = vmand %vm785, %vm817
      %vm850 = vmand %vm786, %vm818
      %vm851 = vmand %vm787, %vm819
      %vm852 = vmand %vm788, %vm820
      %vm853 = vmand %vm789, %vm821
      %vm854 = vmand %vm790, %vm822
      %vm855 = vmand %vm791, %vm823
      %vm856 = vmand %vm792, %vm824
      %vm857 = vmand %vm793, %vm825
      %vm858 = vmand %vm794, %vm826
      %v859 = vld [vmem:[%s369] sm:$0xff]
      %v860 = vld [vmem:[%s369 + $0x8] sm:$0xff]
      %v861 = vld [vmem:[%s369 + $0x10] sm:$0xff]
      %v862 = vld [vmem:[%s369 + $0x18] sm:$0xff]
      %v863 = vld [vmem:[%s369 + $0x20] sm:$0xff]
      %v864 = vld [vmem:[%s369 + $0x28] sm:$0xff]
      %v865 = vld [vmem:[%s369 + $0x30] sm:$0xff]
      %v866 = vld [vmem:[%s369 + $0x38] sm:$0xff]
      %v867 = vld [vmem:[%s369 + $0x40] sm:$0xff]
      %v868 = vld [vmem:[%s369 + $0x48] sm:$0xff]
      %v869 = vld [vmem:[%s369 + $0x50] sm:$0xff]
      %v870 = vld [vmem:[%s369 + $0x58] sm:$0xff]
      %v871 = vld [vmem:[%s369 + $0x60] sm:$0xff]
      %v872 = vld [vmem:[%s369 + $0x68] sm:$0xff]
      %v873 = vld [vmem:[%s369 + $0x70] sm:$0xff]
      %v874 = vld [vmem:[%s369 + $0x78] sm:$0xff]
      %v875 = vld [vmem:[%s369 + $0x80] sm:$0xff]
      %v876 = vld [vmem:[%s369 + $0x88] sm:$0xff]
      %v877 = vld [vmem:[%s369 + $0x90] sm:$0xff]
      %v878 = vld [vmem:[%s369 + $0x98] sm:$0xff]
      %v879 = vld [vmem:[%s369 + $0xa0] sm:$0xff]
      %v880 = vld [vmem:[%s369 + $0xa8] sm:$0xff]
      %v881 = vld [vmem:[%s369 + $0xb0] sm:$0xff]
      %v882 = vld [vmem:[%s369 + $0xb8] sm:$0xff]
      %v883 = vld [vmem:[%s369 + $0xc0] sm:$0xff]
      %v884 = vld [vmem:[%s369 + $0xc8] sm:$0xff]
      %v885 = vld [vmem:[%s369 + $0xd0] sm:$0xff]
      %v886 = vld [vmem:[%s369 + $0xd8] sm:$0xff]
      %v887 = vld [vmem:[%s369 + $0xe0] sm:$0xff]
      %v888 = vld [vmem:[%s369 + $0xe8] sm:$0xff]
      %v889 = vld [vmem:[%s369 + $0xf0] sm:$0xff]
      %v890 = vld [vmem:[%s369 + $0xf8] sm:$0xff]
      %v891 = vld [vmem:[%s341] sm:$0xff]
      %v892 = vld [vmem:[%s341 + $0x8] sm:$0xff]
      %v893 = vld [vmem:[%s341 + $0x10] sm:$0xff]
      %v894 = vld [vmem:[%s341 + $0x18] sm:$0xff]
      %v895 = vld [vmem:[%s341 + $0x20] sm:$0xff]
      %v896 = vld [vmem:[%s341 + $0x28] sm:$0xff]
      %v897 = vld [vmem:[%s341 + $0x30] sm:$0xff]
      %v898 = vld [vmem:[%s341 + $0x38] sm:$0xff]
      %v899 = vld [vmem:[%s341 + $0x40] sm:$0xff]
      %v900 = vld [vmem:[%s341 + $0x48] sm:$0xff]
      %v901 = vld [vmem:[%s341 + $0x50] sm:$0xff]
      %v902 = vld [vmem:[%s341 + $0x58] sm:$0xff]
      %v903 = vld [vmem:[%s341 + $0x60] sm:$0xff]
      %v904 = vld [vmem:[%s341 + $0x68] sm:$0xff]
      %v905 = vld [vmem:[%s341 + $0x70] sm:$0xff]
      %v906 = vld [vmem:[%s341 + $0x78] sm:$0xff]
      %v907 = vld [vmem:[%s341 + $0x80] sm:$0xff]
      %v908 = vld [vmem:[%s341 + $0x88] sm:$0xff]
      %v909 = vld [vmem:[%s341 + $0x90] sm:$0xff]
      %v910 = vld [vmem:[%s341 + $0x98] sm:$0xff]
      %v911 = vld [vmem:[%s341 + $0xa0] sm:$0xff]
      %v912 = vld [vmem:[%s341 + $0xa8] sm:$0xff]
      %v913 = vld [vmem:[%s341 + $0xb0] sm:$0xff]
      %v914 = vld [vmem:[%s341 + $0xb8] sm:$0xff]
      %v915 = vld [vmem:[%s341 + $0xc0] sm:$0xff]
      %v916 = vld [vmem:[%s341 + $0xc8] sm:$0xff]
      %v917 = vld [vmem:[%s341 + $0xd0] sm:$0xff]
      %v918 = vld [vmem:[%s341 + $0xd8] sm:$0xff]
      %v919 = vld [vmem:[%s341 + $0xe0] sm:$0xff]
      %v920 = vld [vmem:[%s341 + $0xe8] sm:$0xff]
      %v921 = vld [vmem:[%s341 + $0xf0] sm:$0xff]
      %v922 = vld [vmem:[%s341 + $0xf8] sm:$0xff]
      %v923 = vadd.f32 %v891, %v859
      %v924 = vadd.f32 %v892, %v860
      %v925 = vadd.f32 %v893, %v861
      %v926 = vadd.f32 %v894, %v862
      %v927 = vadd.f32 %v895, %v863
      %v928 = vadd.f32 %v896, %v864
      %v929 = vadd.f32 %v897, %v865
      %v930 = vadd.f32 %v898, %v866
      %v931 = vadd.f32 %v899, %v867
      %v932 = vadd.f32 %v900, %v868
      %v933 = vadd.f32 %v901, %v869
      %v934 = vadd.f32 %v902, %v870
      %v935 = vadd.f32 %v903, %v871
      %v936 = vadd.f32 %v904, %v872
      %v937 = vadd.f32 %v905, %v873
      %v938 = vadd.f32 %v906, %v874
      %v939 = vadd.f32 %v907, %v875
      %v940 = vadd.f32 %v908, %v876
      %v941 = vadd.f32 %v909, %v877
      %v942 = vadd.f32 %v910, %v878
      %v943 = vadd.f32 %v911, %v879
      %v944 = vadd.f32 %v912, %v880
      %v945 = vadd.f32 %v913, %v881
      %v946 = vadd.f32 %v914, %v882
      %v947 = vadd.f32 %v915, %v883
      %v948 = vadd.f32 %v916, %v884
      %v949 = vadd.f32 %v917, %v885
      %v950 = vadd.f32 %v918, %v886
      %v951 = vadd.f32 %v919, %v887
      %v952 = vadd.f32 %v920, %v888
      %v953 = vadd.f32 %v921, %v889
      %v954 = vadd.f32 %v922, %v890
      %vm955 = vcmp.ge.f32.partialorder %v923, 0.0
      %vm956 = vcmp.ge.f32.partialorder %v924, 0.0
      %vm957 = vcmp.ge.f32.partialorder %v925, 0.0
      %vm958 = vcmp.ge.f32.partialorder %v926, 0.0
      %vm959 = vcmp.ge.f32.partialorder %v927, 0.0
      %vm960 = vcmp.ge.f32.partialorder %v928, 0.0
      %vm961 = vcmp.ge.f32.partialorder %v929, 0.0
      %vm962 = vcmp.ge.f32.partialorder %v930, 0.0
      %vm963 = vcmp.ge.f32.partialorder %v931, 0.0
      %vm964 = vcmp.ge.f32.partialorder %v932, 0.0
      %vm965 = vcmp.ge.f32.partialorder %v933, 0.0
      %vm966 = vcmp.ge.f32.partialorder %v934, 0.0
      %vm967 = vcmp.ge.f32.partialorder %v935, 0.0
      %vm968 = vcmp.ge.f32.partialorder %v936, 0.0
      %vm969 = vcmp.ge.f32.partialorder %v937, 0.0
      %vm970 = vcmp.ge.f32.partialorder %v938, 0.0
      %vm971 = vcmp.ge.f32.partialorder %v939, 0.0
      %vm972 = vcmp.ge.f32.partialorder %v940, 0.0
      %vm973 = vcmp.ge.f32.partialorder %v941, 0.0
      %vm974 = vcmp.ge.f32.partialorder %v942, 0.0
      %vm975 = vcmp.ge.f32.partialorder %v943, 0.0
      %vm976 = vcmp.ge.f32.partialorder %v944, 0.0
      %vm977 = vcmp.ge.f32.partialorder %v945, 0.0
      %vm978 = vcmp.ge.f32.partialorder %v946, 0.0
      %vm979 = vcmp.ge.f32.partialorder %v947, 0.0
      %vm980 = vcmp.ge.f32.partialorder %v948, 0.0
      %vm981 = vcmp.ge.f32.partialorder %v949, 0.0
      %vm982 = vcmp.ge.f32.partialorder %v950, 0.0
      %vm983 = vcmp.ge.f32.partialorder %v951, 0.0
      %vm984 = vcmp.ge.f32.partialorder %v952, 0.0
      %vm985 = vcmp.ge.f32.partialorder %v953, 0.0
      %vm986 = vcmp.ge.f32.partialorder %v954, 0.0
      %v987 = vmul.f32 %v923, 0.2
      %v988 = vmul.f32 %v924, 0.2
      %v989 = vmul.f32 %v925, 0.2
      %v990 = vmul.f32 %v926, 0.2
      %v991 = vmul.f32 %v927, 0.2
      %v992 = vmul.f32 %v928, 0.2
      %v993 = vmul.f32 %v929, 0.2
      %v994 = vmul.f32 %v930, 0.2
      %v995 = vmul.f32 %v931, 0.2
      %v996 = vmul.f32 %v932, 0.2
      %v997 = vmul.f32 %v933, 0.2
      %v998 = vmul.f32 %v934, 0.2
      %v999 = vmul.f32 %v935, 0.2
      %v1000 = vmul.f32 %v936, 0.2
      %v1001 = vmul.f32 %v937, 0.2
      %v1002 = vmul.f32 %v938, 0.2
      %v1003 = vmul.f32 %v939, 0.2
      %v1004 = vmul.f32 %v940, 0.2
      %v1005 = vmul.f32 %v941, 0.2
      %v1006 = vmul.f32 %v942, 0.2
      %v1007 = vmul.f32 %v943, 0.2
      %v1008 = vmul.f32 %v944, 0.2
      %v1009 = vmul.f32 %v945, 0.2
      %v1010 = vmul.f32 %v946, 0.2
      %v1011 = vmul.f32 %v947, 0.2
      %v1012 = vmul.f32 %v948, 0.2
      %v1013 = vmul.f32 %v949, 0.2
      %v1014 = vmul.f32 %v950, 0.2
      %v1015 = vmul.f32 %v951, 0.2
      %v1016 = vmul.f32 %v952, 0.2
      %v1017 = vmul.f32 %v953, 0.2
      %v1018 = vmul.f32 %v954, 0.2
      %v1019 = vsel %vm955, %v923, %v987
      %v1020 = vsel %vm956, %v924, %v988
      %v1021 = vsel %vm957, %v925, %v989
      %v1022 = vsel %vm958, %v926, %v990
      %v1023 = vsel %vm959, %v927, %v991
      %v1024 = vsel %vm960, %v928, %v992
      %v1025 = vsel %vm961, %v929, %v993
      %v1026 = vsel %vm962, %v930, %v994
      %v1027 = vsel %vm963, %v931, %v995
      %v1028 = vsel %vm964, %v932, %v996
      %v1029 = vsel %vm965, %v933, %v997
      %v1030 = vsel %vm966, %v934, %v998
      %v1031 = vsel %vm967, %v935, %v999
      %v1032 = vsel %vm968, %v936, %v1000
      %v1033 = vsel %vm969, %v937, %v1001
      %v1034 = vsel %vm970, %v938, %v1002
      %v1035 = vsel %vm971, %v939, %v1003
      %v1036 = vsel %vm972, %v940, %v1004
      %v1037 = vsel %vm973, %v941, %v1005
      %v1038 = vsel %vm974, %v942, %v1006
      %v1039 = vsel %vm975, %v943, %v1007
      %v1040 = vsel %vm976, %v944, %v1008
      %v1041 = vsel %vm977, %v945, %v1009
      %v1042 = vsel %vm978, %v946, %v1010
      %v1043 = vsel %vm979, %v947, %v1011
      %v1044 = vsel %vm980, %v948, %v1012
      %v1045 = vsel %vm981, %v949, %v1013
      %v1046 = vsel %vm982, %v950, %v1014
      %v1047 = vsel %vm983, %v951, %v1015
      %v1048 = vsel %vm984, %v952, %v1016
      %v1049 = vsel %vm985, %v953, %v1017
      %v1050 = vsel %vm986, %v954, %v1018
      %v1051 = vld [vmem:[%s397] sm:$0xff]
      %v1052 = vld [vmem:[%s397 + $0x8] sm:$0xff]
      %v1053 = vld [vmem:[%s397 + $0x10] sm:$0xff]
      %v1054 = vld [vmem:[%s397 + $0x18] sm:$0xff]
      %v1055 = vld [vmem:[%s397 + $0x20] sm:$0xff]
      %v1056 = vld [vmem:[%s397 + $0x28] sm:$0xff]
      %v1057 = vld [vmem:[%s397 + $0x30] sm:$0xff]
      %v1058 = vld [vmem:[%s397 + $0x38] sm:$0xff]
      %v1059 = vld [vmem:[%s397 + $0x40] sm:$0xff]
      %v1060 = vld [vmem:[%s397 + $0x48] sm:$0xff]
      %v1061 = vld [vmem:[%s397 + $0x50] sm:$0xff]
      %v1062 = vld [vmem:[%s397 + $0x58] sm:$0xff]
      %v1063 = vld [vmem:[%s397 + $0x60] sm:$0xff]
      %v1064 = vld [vmem:[%s397 + $0x68] sm:$0xff]
      %v1065 = vld [vmem:[%s397 + $0x70] sm:$0xff]
      %v1066 = vld [vmem:[%s397 + $0x78] sm:$0xff]
      %v1067 = vld [vmem:[%s397 + $0x80] sm:$0xff]
      %v1068 = vld [vmem:[%s397 + $0x88] sm:$0xff]
      %v1069 = vld [vmem:[%s397 + $0x90] sm:$0xff]
      %v1070 = vld [vmem:[%s397 + $0x98] sm:$0xff]
      %v1071 = vld [vmem:[%s397 + $0xa0] sm:$0xff]
      %v1072 = vld [vmem:[%s397 + $0xa8] sm:$0xff]
      %v1073 = vld [vmem:[%s397 + $0xb0] sm:$0xff]
      %v1074 = vld [vmem:[%s397 + $0xb8] sm:$0xff]
      %v1075 = vld [vmem:[%s397 + $0xc0] sm:$0xff]
      %v1076 = vld [vmem:[%s397 + $0xc8] sm:$0xff]
      %v1077 = vld [vmem:[%s397 + $0xd0] sm:$0xff]
      %v1078 = vld [vmem:[%s397 + $0xd8] sm:$0xff]
      %v1079 = vld [vmem:[%s397 + $0xe0] sm:$0xff]
      %v1080 = vld [vmem:[%s397 + $0xe8] sm:$0xff]
      %v1081 = vld [vmem:[%s397 + $0xf0] sm:$0xff]
      %v1082 = vld [vmem:[%s397 + $0xf8] sm:$0xff]
      %v1083 = vadd.f32 %v1051, %v859
      %v1084 = vadd.f32 %v1052, %v860
      %v1085 = vadd.f32 %v1053, %v861
      %v1086 = vadd.f32 %v1054, %v862
      %v1087 = vadd.f32 %v1055, %v863
      %v1088 = vadd.f32 %v1056, %v864
      %v1089 = vadd.f32 %v1057, %v865
      %v1090 = vadd.f32 %v1058, %v866
      %v1091 = vadd.f32 %v1059, %v867
      %v1092 = vadd.f32 %v1060, %v868
      %v1093 = vadd.f32 %v1061, %v869
      %v1094 = vadd.f32 %v1062, %v870
      %v1095 = vadd.f32 %v1063, %v871
      %v1096 = vadd.f32 %v1064, %v872
      %v1097 = vadd.f32 %v1065, %v873
      %v1098 = vadd.f32 %v1066, %v874
      %v1099 = vadd.f32 %v1067, %v875
      %v1100 = vadd.f32 %v1068, %v876
      %v1101 = vadd.f32 %v1069, %v877
      %v1102 = vadd.f32 %v1070, %v878
      %v1103 = vadd.f32 %v1071, %v879
      %v1104 = vadd.f32 %v1072, %v880
      %v1105 = vadd.f32 %v1073, %v881
      %v1106 = vadd.f32 %v1074, %v882
      %v1107 = vadd.f32 %v1075, %v883
      %v1108 = vadd.f32 %v1076, %v884
      %v1109 = vadd.f32 %v1077, %v885
      %v1110 = vadd.f32 %v1078, %v886
      %v1111 = vadd.f32 %v1079, %v887
      %v1112 = vadd.f32 %v1080, %v888
      %v1113 = vadd.f32 %v1081, %v889
      %v1114 = vadd.f32 %v1082, %v890
      %vm1115 = vcmp.ge.f32.partialorder %v1083, 0.0
      %vm1116 = vcmp.ge.f32.partialorder %v1084, 0.0
      %vm1117 = vcmp.ge.f32.partialorder %v1085, 0.0
      %vm1118 = vcmp.ge.f32.partialorder %v1086, 0.0
      %vm1119 = vcmp.ge.f32.partialorder %v1087, 0.0
      %vm1120 = vcmp.ge.f32.partialorder %v1088, 0.0
      %vm1121 = vcmp.ge.f32.partialorder %v1089, 0.0
      %vm1122 = vcmp.ge.f32.partialorder %v1090, 0.0
      %vm1123 = vcmp.ge.f32.partialorder %v1091, 0.0
      %vm1124 = vcmp.ge.f32.partialorder %v1092, 0.0
      %vm1125 = vcmp.ge.f32.partialorder %v1093, 0.0
      %vm1126 = vcmp.ge.f32.partialorder %v1094, 0.0
      %vm1127 = vcmp.ge.f32.partialorder %v1095, 0.0
      %vm1128 = vcmp.ge.f32.partialorder %v1096, 0.0
      %vm1129 = vcmp.ge.f32.partialorder %v1097, 0.0
      %vm1130 = vcmp.ge.f32.partialorder %v1098, 0.0
      %vm1131 = vcmp.ge.f32.partialorder %v1099, 0.0
      %vm1132 = vcmp.ge.f32.partialorder %v1100, 0.0
      %vm1133 = vcmp.ge.f32.partialorder %v1101, 0.0
      %vm1134 = vcmp.ge.f32.partialorder %v1102, 0.0
      %vm1135 = vcmp.ge.f32.partialorder %v1103, 0.0
      %vm1136 = vcmp.ge.f32.partialorder %v1104, 0.0
      %vm1137 = vcmp.ge.f32.partialorder %v1105, 0.0
      %vm1138 = vcmp.ge.f32.partialorder %v1106, 0.0
      %vm1139 = vcmp.ge.f32.partialorder %v1107, 0.0
      %vm1140 = vcmp.ge.f32.partialorder %v1108, 0.0
      %vm1141 = vcmp.ge.f32.partialorder %v1109, 0.0
      %vm1142 = vcmp.ge.f32.partialorder %v1110, 0.0
      %vm1143 = vcmp.ge.f32.partialorder %v1111, 0.0
      %vm1144 = vcmp.ge.f32.partialorder %v1112, 0.0
      %vm1145 = vcmp.ge.f32.partialorder %v1113, 0.0
      %vm1146 = vcmp.ge.f32.partialorder %v1114, 0.0
      %v1147 = vmul.f32 %v1083, 0.2
      %v1148 = vmul.f32 %v1084, 0.2
      %v1149 = vmul.f32 %v1085, 0.2
      %v1150 = vmul.f32 %v1086, 0.2
      %v1151 = vmul.f32 %v1087, 0.2
      %v1152 = vmul.f32 %v1088, 0.2
      %v1153 = vmul.f32 %v1089, 0.2
      %v1154 = vmul.f32 %v1090, 0.2
      %v1155 = vmul.f32 %v1091, 0.2
      %v1156 = vmul.f32 %v1092, 0.2
      %v1157 = vmul.f32 %v1093, 0.2
      %v1158 = vmul.f32 %v1094, 0.2
      %v1159 = vmul.f32 %v1095, 0.2
      %v1160 = vmul.f32 %v1096, 0.2
      %v1161 = vmul.f32 %v1097, 0.2
      %v1162 = vmul.f32 %v1098, 0.2
      %v1163 = vmul.f32 %v1099, 0.2
      %v1164 = vmul.f32 %v1100, 0.2
      %v1165 = vmul.f32 %v1101, 0.2
      %v1166 = vmul.f32 %v1102, 0.2
      %v1167 = vmul.f32 %v1103, 0.2
      %v1168 = vmul.f32 %v1104, 0.2
      %v1169 = vmul.f32 %v1105, 0.2
      %v1170 = vmul.f32 %v1106, 0.2
      %v1171 = vmul.f32 %v1107, 0.2
      %v1172 = vmul.f32 %v1108, 0.2
      %v1173 = vmul.f32 %v1109, 0.2
      %v1174 = vmul.f32 %v1110, 0.2
      %v1175 = vmul.f32 %v1111, 0.2
      %v1176 = vmul.f32 %v1112, 0.2
      %v1177 = vmul.f32 %v1113, 0.2
      %v1178 = vmul.f32 %v1114, 0.2
      %v1179 = vsel %vm1115, %v1083, %v1147
      %v1180 = vsel %vm1116, %v1084, %v1148
      %v1181 = vsel %vm1117, %v1085, %v1149
      %v1182 = vsel %vm1118, %v1086, %v1150
      %v1183 = vsel %vm1119, %v1087, %v1151
      %v1184 = vsel %vm1120, %v1088, %v1152
      %v1185 = vsel %vm1121, %v1089, %v1153
      %v1186 = vsel %vm1122, %v1090, %v1154
      %v1187 = vsel %vm1123, %v1091, %v1155
      %v1188 = vsel %vm1124, %v1092, %v1156
      %v1189 = vsel %vm1125, %v1093, %v1157
      %v1190 = vsel %vm1126, %v1094, %v1158
      %v1191 = vsel %vm1127, %v1095, %v1159
      %v1192 = vsel %vm1128, %v1096, %v1160
      %v1193 = vsel %vm1129, %v1097, %v1161
      %v1194 = vsel %vm1130, %v1098, %v1162
      %v1195 = vsel %vm1131, %v1099, %v1163
      %v1196 = vsel %vm1132, %v1100, %v1164
      %v1197 = vsel %vm1133, %v1101, %v1165
      %v1198 = vsel %vm1134, %v1102, %v1166
      %v1199 = vsel %vm1135, %v1103, %v1167
      %v1200 = vsel %vm1136, %v1104, %v1168
      %v1201 = vsel %vm1137, %v1105, %v1169
      %v1202 = vsel %vm1138, %v1106, %v1170
      %v1203 = vsel %vm1139, %v1107, %v1171
      %v1204 = vsel %vm1140, %v1108, %v1172
      %v1205 = vsel %vm1141, %v1109, %v1173
      %v1206 = vsel %vm1142, %v1110, %v1174
      %v1207 = vsel %vm1143, %v1111, %v1175
      %v1208 = vsel %vm1144, %v1112, %v1176
      %v1209 = vsel %vm1145, %v1113, %v1177
      %v1210 = vsel %vm1146, %v1114, %v1178
      %v1211 = vlaneseq
      %v1212 = vshrl.u32 %v1211, 7
      %v1213 = vld [vmem:[%s425] sm:$0xf]
      %v1214 = vld [vmem:[%s425 + $0x4] sm:$0xf]
      %v1215 = vld [vmem:[%s425 + $0x8] sm:$0xf]
      %v1216 = vld [vmem:[%s425 + $0xc] sm:$0xf]
      %v1217 = vld [vmem:[%s425 + $0x10] sm:$0xf]
      %v1218 = vld [vmem:[%s425 + $0x14] sm:$0xf]
      %v1219 = vld [vmem:[%s425 + $0x18] sm:$0xf]
      %v1220 = vld [vmem:[%s425 + $0x1c] sm:$0xf]
      %v1221 = vld [vmem:[%s425 + $0x20] sm:$0xf]
      %v1222 = vld [vmem:[%s425 + $0x24] sm:$0xf]
      %v1223 = vld [vmem:[%s425 + $0x28] sm:$0xf]
      %v1224 = vld [vmem:[%s425 + $0x2c] sm:$0xf]
      %v1225 = vld [vmem:[%s425 + $0x30] sm:$0xf]
      %v1226 = vld [vmem:[%s425 + $0x34] sm:$0xf]
      %v1227 = vld [vmem:[%s425 + $0x38] sm:$0xf]
      %v1228 = vld [vmem:[%s425 + $0x3c] sm:$0xf]
      %v1229 = vld [vmem:[%s425 + $0x40] sm:$0xf]
      %v1230 = vld [vmem:[%s425 + $0x44] sm:$0xf]
      %v1231 = vld [vmem:[%s425 + $0x48] sm:$0xf]
      %v1232 = vld [vmem:[%s425 + $0x4c] sm:$0xf]
      %v1233 = vld [vmem:[%s425 + $0x50] sm:$0xf]
      %v1234 = vld [vmem:[%s425 + $0x54] sm:$0xf]
      %v1235 = vld [vmem:[%s425 + $0x58] sm:$0xf]
      %v1236 = vld [vmem:[%s425 + $0x5c] sm:$0xf]
      %v1237 = vld [vmem:[%s425 + $0x60] sm:$0xf]
      %v1238 = vld [vmem:[%s425 + $0x64] sm:$0xf]
      %v1239 = vld [vmem:[%s425 + $0x68] sm:$0xf]
      %v1240 = vld [vmem:[%s425 + $0x6c] sm:$0xf]
      %v1241 = vld [vmem:[%s425 + $0x70] sm:$0xf]
      %v1242 = vld [vmem:[%s425 + $0x74] sm:$0xf]
      %v1243 = vld [vmem:[%s425 + $0x78] sm:$0xf]
      %v1244 = vld [vmem:[%s425 + $0x7c] sm:$0xf]
      %v1245 = vld [vmem:[#allocation2] sm:$0xf]
      %1247 = vset.pattern.permute.xlu0 0
      %1248 = vperm.xlu0 %1247, %v1019
      %v1249 = vpop.permute.xlu0 %1248
      %1252 = vset.pattern.permute.xlu0 0
      %1253 = vperm.xlu0 %1252, %v1020
      %v1254 = vpop.permute.xlu0 %1253
      %1257 = vset.pattern.permute.xlu0 0
      %1258 = vperm.xlu0 %1257, %v1021
      %v1259 = vpop.permute.xlu0 %1258
      %1262 = vset.pattern.permute.xlu0 0
      %1263 = vperm.xlu0 %1262, %v1022
      %v1264 = vpop.permute.xlu0 %1263
      %1267 = vset.pattern.permute.xlu0 0
      %1268 = vperm.xlu0 %1267, %v1023
      %v1269 = vpop.permute.xlu0 %1268
      %1272 = vset.pattern.permute.xlu0 0
      %1273 = vperm.xlu0 %1272, %v1024
      %v1274 = vpop.permute.xlu0 %1273
      %1277 = vset.pattern.permute.xlu0 0
      %1278 = vperm.xlu0 %1277, %v1025
      %v1279 = vpop.permute.xlu0 %1278
      %1282 = vset.pattern.permute.xlu0 0
      %1283 = vperm.xlu0 %1282, %v1026
      %v1284 = vpop.permute.xlu0 %1283
      %1287 = vset.pattern.permute.xlu0 0
      %1288 = vperm.xlu0 %1287, %v1027
      %v1289 = vpop.permute.xlu0 %1288
      %1292 = vset.pattern.permute.xlu0 0
      %1293 = vperm.xlu0 %1292, %v1028
      %v1294 = vpop.permute.xlu0 %1293
      %1297 = vset.pattern.permute.xlu0 0
      %1298 = vperm.xlu0 %1297, %v1029
      %v1299 = vpop.permute.xlu0 %1298
      %1302 = vset.pattern.permute.xlu0 0
      %1303 = vperm.xlu0 %1302, %v1030
      %v1304 = vpop.permute.xlu0 %1303
      %1307 = vset.pattern.permute.xlu0 0
      %1308 = vperm.xlu0 %1307, %v1031
      %v1309 = vpop.permute.xlu0 %1308
      %1312 = vset.pattern.permute.xlu0 0
      %1313 = vperm.xlu0 %1312, %v1032
      %v1314 = vpop.permute.xlu0 %1313
      %1317 = vset.pattern.permute.xlu0 0
      %1318 = vperm.xlu0 %1317, %v1033
      %v1319 = vpop.permute.xlu0 %1318
      %1322 = vset.pattern.permute.xlu0 0
      %1323 = vperm.xlu0 %1322, %v1034
      %v1324 = vpop.permute.xlu0 %1323
      %1327 = vset.pattern.permute.xlu0 0
      %1328 = vperm.xlu0 %1327, %v1035
      %v1329 = vpop.permute.xlu0 %1328
      %1332 = vset.pattern.permute.xlu0 0
      %1333 = vperm.xlu0 %1332, %v1036
      %v1334 = vpop.permute.xlu0 %1333
      %1337 = vset.pattern.permute.xlu0 0
      %1338 = vperm.xlu0 %1337, %v1037
      %v1339 = vpop.permute.xlu0 %1338
      %1342 = vset.pattern.permute.xlu0 0
      %1343 = vperm.xlu0 %1342, %v1038
      %v1344 = vpop.permute.xlu0 %1343
      %1347 = vset.pattern.permute.xlu0 0
      %1348 = vperm.xlu0 %1347, %v1039
      %v1349 = vpop.permute.xlu0 %1348
      %1352 = vset.pattern.permute.xlu0 0
      %1353 = vperm.xlu0 %1352, %v1040
      %v1354 = vpop.permute.xlu0 %1353
      %1357 = vset.pattern.permute.xlu0 0
      %1358 = vperm.xlu0 %1357, %v1041
      %v1359 = vpop.permute.xlu0 %1358
      %1362 = vset.pattern.permute.xlu0 0
      %1363 = vperm.xlu0 %1362, %v1042
      %v1364 = vpop.permute.xlu0 %1363
      %1367 = vset.pattern.permute.xlu0 0
      %1368 = vperm.xlu0 %1367, %v1043
      %v1369 = vpop.permute.xlu0 %1368
      %1372 = vset.pattern.permute.xlu0 0
      %1373 = vperm.xlu0 %1372, %v1044
      %v1374 = vpop.permute.xlu0 %1373
      %1377 = vset.pattern.permute.xlu0 0
      %1378 = vperm.xlu0 %1377, %v1045
      %v1379 = vpop.permute.xlu0 %1378
      %1382 = vset.pattern.permute.xlu0 0
      %1383 = vperm.xlu0 %1382, %v1046
      %v1384 = vpop.permute.xlu0 %1383
      %1387 = vset.pattern.permute.xlu0 0
      %1388 = vperm.xlu0 %1387, %v1047
      %v1389 = vpop.permute.xlu0 %1388
      %1392 = vset.pattern.permute.xlu0 0
      %1393 = vperm.xlu0 %1392, %v1048
      %v1394 = vpop.permute.xlu0 %1393
      %1397 = vset.pattern.permute.xlu0 0
      %1398 = vperm.xlu0 %1397, %v1049
      %v1399 = vpop.permute.xlu0 %1398
      %1402 = vset.pattern.permute.xlu0 0
      %1403 = vperm.xlu0 %1402, %v1050
      %v1404 = vpop.permute.xlu0 %1403
      %v1406 = vsel %vm651, %v1249, -1.2676506e+30
      %v1407 = vsel %vm652, %v1254, -1.2676506e+30
      %v1408 = vsel %vm653, %v1259, -1.2676506e+30
      %v1409 = vsel %vm654, %v1264, -1.2676506e+30
      %v1410 = vsel %vm655, %v1269, -1.2676506e+30
      %v1411 = vsel %vm656, %v1274, -1.2676506e+30
      %v1412 = vsel %vm657, %v1279, -1.2676506e+30
      %v1413 = vsel %vm658, %v1284, -1.2676506e+30
      %v1414 = vsel %vm659, %v1289, -1.2676506e+30
      %v1415 = vsel %vm660, %v1294, -1.2676506e+30
      %v1416 = vsel %vm661, %v1299, -1.2676506e+30
      %v1417 = vsel %vm662, %v1304, -1.2676506e+30
      %v1418 = vsel %vm663, %v1309, -1.2676506e+30
      %v1419 = vsel %vm664, %v1314, -1.2676506e+30
      %v1420 = vsel %vm665, %v1319, -1.2676506e+30
      %v1421 = vsel %vm666, %v1324, -1.2676506e+30
      %v1422 = vsel %vm667, %v1329, -1.2676506e+30
      %v1423 = vsel %vm668, %v1334, -1.2676506e+30
      %v1424 = vsel %vm669, %v1339, -1.2676506e+30
      %v1425 = vsel %vm670, %v1344, -1.2676506e+30
      %v1426 = vsel %vm671, %v1349, -1.2676506e+30
      %v1427 = vsel %vm672, %v1354, -1.2676506e+30
      %v1428 = vsel %vm673, %v1359, -1.2676506e+30
      %v1429 = vsel %vm674, %v1364, -1.2676506e+30
      %v1430 = vsel %vm675, %v1369, -1.2676506e+30
      %v1431 = vsel %vm676, %v1374, -1.2676506e+30
      %v1432 = vsel %vm677, %v1379, -1.2676506e+30
      %v1433 = vsel %vm678, %v1384, -1.2676506e+30
      %v1434 = vsel %vm679, %v1389, -1.2676506e+30
      %v1435 = vsel %vm680, %v1394, -1.2676506e+30
      %v1436 = vsel %vm681, %v1399, -1.2676506e+30
      %v1437 = vsel %vm682, %v1404, -1.2676506e+30
      %vm1438 = vcmask 130048
      %v1439 = vsel %vm1438, %v1406, -inf
      %v1440 = vsel %vm1438, %v1407, -inf
      %v1441 = vsel %vm1438, %v1408, -inf
      %v1442 = vsel %vm1438, %v1409, -inf
      %v1443 = vsel %vm1438, %v1410, -inf
      %v1444 = vmax.f32 %v1439, %v1443
      %v1445 = vsel %vm1438, %v1411, -inf
      %v1446 = vmax.f32 %v1440, %v1445
      %v1447 = vsel %vm1438, %v1412, -inf
      %v1448 = vmax.f32 %v1441, %v1447
      %v1449 = vsel %vm1438, %v1413, -inf
      %v1450 = vmax.f32 %v1442, %v1449
      %v1451 = vsel %vm1438, %v1414, -inf
      %v1452 = vmax.f32 %v1444, %v1451
      %v1453 = vsel %vm1438, %v1415, -inf
      %v1454 = vmax.f32 %v1446, %v1453
      %v1455 = vsel %vm1438, %v1416, -inf
      %v1456 = vmax.f32 %v1448, %v1455
      %v1457 = vsel %vm1438, %v1417, -inf
      %v1458 = vmax.f32 %v1450, %v1457
      %v1459 = vsel %vm1438, %v1418, -inf
      %v1460 = vmax.f32 %v1452, %v1459
      %v1461 = vsel %vm1438, %v1419, -inf
      %v1462 = vmax.f32 %v1454, %v1461
      %v1463 = vsel %vm1438, %v1420, -inf
      %v1464 = vmax.f32 %v1456, %v1463
      %v1465 = vsel %vm1438, %v1421, -inf
      %v1466 = vmax.f32 %v1458, %v1465
      %v1467 = vsel %vm1438, %v1422, -inf
      %v1468 = vmax.f32 %v1460, %v1467
      %v1469 = vsel %vm1438, %v1423, -inf
      %v1470 = vmax.f32 %v1462, %v1469
      %v1471 = vsel %vm1438, %v1424, -inf
      %v1472 = vmax.f32 %v1464, %v1471
      %v1473 = vsel %vm1438, %v1425, -inf
      %v1474 = vmax.f32 %v1466, %v1473
      %v1475 = vsel %vm1438, %v1426, -inf
      %v1476 = vmax.f32 %v1468, %v1475
      %v1477 = vsel %vm1438, %v1427, -inf
      %v1478 = vmax.f32 %v1470, %v1477
      %v1479 = vsel %vm1438, %v1428, -inf
      %v1480 = vmax.f32 %v1472, %v1479
      %v1481 = vsel %vm1438, %v1429, -inf
      %v1482 = vmax.f32 %v1474, %v1481
      %v1483 = vsel %vm1438, %v1430, -inf
      %v1484 = vmax.f32 %v1476, %v1483
      %v1485 = vsel %vm1438, %v1431, -inf
      %v1486 = vmax.f32 %v1478, %v1485
      %v1487 = vsel %vm1438, %v1432, -inf
      %v1488 = vmax.f32 %v1480, %v1487
      %v1489 = vsel %vm1438, %v1433, -inf
      %v1490 = vmax.f32 %v1482, %v1489
      %v1491 = vsel %vm1438, %v1434, -inf
      %v1492 = vmax.f32 %v1484, %v1491
      %v1493 = vsel %vm1438, %v1435, -inf
      %v1494 = vmax.f32 %v1486, %v1493
      %v1495 = vsel %vm1438, %v1436, -inf
      %v1496 = vmax.f32 %v1488, %v1495
      %v1497 = vsel %vm1438, %v1437, -inf
      %v1498 = vmax.f32 %v1490, %v1497
      %v1499 = vmax.f32 %v1492, %v1494
      %v1500 = vmax.f32 %v1496, %v1498
      %v1501 = vmax.f32 %v1499, %v1500
      %v1502 = vrot.slane %v1501, 4
      %v1503 = vmax.f32 %v1501, %v1502
      %v1504 = vrot.slane %v1503, 2
      %v1505 = vmax.f32 %v1503, %v1504
      %v1506 = vrot.slane %v1505, 1
      %v1507 = vmax.f32 %v1505, %v1506
      %vm1508 = vcmp.eq.s32.totalorder %v1212, 0
      %v1509 = vmax.f32 %v1245, %v1507
      %v1510 = vsel %vm1508, 1, 0
      %vm1511 = vcmp.eq.s32.totalorder %v1510, 1
      %v1512 = vsel %vm1511, %v1509, %v1245
      %1513 = vset.pattern.permute.xlu0 1
      %1514 = vperm.xlu0 %1513, %v1019
      %v1515 = vpop.permute.xlu0 %1514
      %1517 = vset.pattern.permute.xlu0 1
      %1518 = vperm.xlu0 %1517, %v1020
      %v1519 = vpop.permute.xlu0 %1518
      %1521 = vset.pattern.permute.xlu0 1
      %1522 = vperm.xlu0 %1521, %v1021
      %v1523 = vpop.permute.xlu0 %1522
      %1525 = vset.pattern.permute.xlu0 1
      %1526 = vperm.xlu0 %1525, %v1022
      %v1527 = vpop.permute.xlu0 %1526
      %1529 = vset.pattern.permute.xlu0 1
      %1530 = vperm.xlu0 %1529, %v1023
      %v1531 = vpop.permute.xlu0 %1530
      %1533 = vset.pattern.permute.xlu0 1
      %1534 = vperm.xlu0 %1533, %v1024
      %v1535 = vpop.permute.xlu0 %1534
      %1537 = vset.pattern.permute.xlu0 1
      %1538 = vperm.xlu0 %1537, %v1025
      %v1539 = vpop.permute.xlu0 %1538
      %1541 = vset.pattern.permute.xlu0 1
      %1542 = vperm.xlu0 %1541, %v1026
      %v1543 = vpop.permute.xlu0 %1542
      %1545 = vset.pattern.permute.xlu0 1
      %1546 = vperm.xlu0 %1545, %v1027
      %v1547 = vpop.permute.xlu0 %1546
      %1549 = vset.pattern.permute.xlu0 1
      %1550 = vperm.xlu0 %1549, %v1028
      %v1551 = vpop.permute.xlu0 %1550
      %1553 = vset.pattern.permute.xlu0 1
      %1554 = vperm.xlu0 %1553, %v1029
      %v1555 = vpop.permute.xlu0 %1554
      %1557 = vset.pattern.permute.xlu0 1
      %1558 = vperm.xlu0 %1557, %v1030
      %v1559 = vpop.permute.xlu0 %1558
      %1561 = vset.pattern.permute.xlu0 1
      %1562 = vperm.xlu0 %1561, %v1031
      %v1563 = vpop.permute.xlu0 %1562
      %1565 = vset.pattern.permute.xlu0 1
      %1566 = vperm.xlu0 %1565, %v1032
      %v1567 = vpop.permute.xlu0 %1566
      %1569 = vset.pattern.permute.xlu0 1
      %1570 = vperm.xlu0 %1569, %v1033
      %v1571 = vpop.permute.xlu0 %1570
      %1573 = vset.pattern.permute.xlu0 1
      %1574 = vperm.xlu0 %1573, %v1034
      %v1575 = vpop.permute.xlu0 %1574
      %1577 = vset.pattern.permute.xlu0 1
      %1578 = vperm.xlu0 %1577, %v1035
      %v1579 = vpop.permute.xlu0 %1578
      %1581 = vset.pattern.permute.xlu0 1
      %1582 = vperm.xlu0 %1581, %v1036
      %v1583 = vpop.permute.xlu0 %1582
      %1585 = vset.pattern.permute.xlu0 1
      %1586 = vperm.xlu0 %1585, %v1037
      %v1587 = vpop.permute.xlu0 %1586
      %1589 = vset.pattern.permute.xlu0 1
      %1590 = vperm.xlu0 %1589, %v1038
      %v1591 = vpop.permute.xlu0 %1590
      %1593 = vset.pattern.permute.xlu0 1
      %1594 = vperm.xlu0 %1593, %v1039
      %v1595 = vpop.permute.xlu0 %1594
      %1597 = vset.pattern.permute.xlu0 1
      %1598 = vperm.xlu0 %1597, %v1040
      %v1599 = vpop.permute.xlu0 %1598
      %1601 = vset.pattern.permute.xlu0 1
      %1602 = vperm.xlu0 %1601, %v1041
      %v1603 = vpop.permute.xlu0 %1602
      %1605 = vset.pattern.permute.xlu0 1
      %1606 = vperm.xlu0 %1605, %v1042
      %v1607 = vpop.permute.xlu0 %1606
      %1609 = vset.pattern.permute.xlu0 1
      %1610 = vperm.xlu0 %1609, %v1043
      %v1611 = vpop.permute.xlu0 %1610
      %1613 = vset.pattern.permute.xlu0 1
      %1614 = vperm.xlu0 %1613, %v1044
      %v1615 = vpop.permute.xlu0 %1614
      %1617 = vset.pattern.permute.xlu0 1
      %1618 = vperm.xlu0 %1617, %v1045
      %v1619 = vpop.permute.xlu0 %1618
      %1621 = vset.pattern.permute.xlu0 1
      %1622 = vperm.xlu0 %1621, %v1046
      %v1623 = vpop.permute.xlu0 %1622
      %1625 = vset.pattern.permute.xlu0 1
      %1626 = vperm.xlu0 %1625, %v1047
      %v1627 = vpop.permute.xlu0 %1626
      %1629 = vset.pattern.permute.xlu0 1
      %1630 = vperm.xlu0 %1629, %v1048
      %v1631 = vpop.permute.xlu0 %1630
      %1633 = vset.pattern.permute.xlu0 1
      %1634 = vperm.xlu0 %1633, %v1049
      %v1635 = vpop.permute.xlu0 %1634
      %1637 = vset.pattern.permute.xlu0 1
      %1638 = vperm.xlu0 %1637, %v1050
      %v1639 = vpop.permute.xlu0 %1638
      %v1641 = vsel %vm651, %v1515, -1.2676506e+30
      %v1642 = vsel %vm652, %v1519, -1.2676506e+30
      %v1643 = vsel %vm653, %v1523, -1.2676506e+30
      %v1644 = vsel %vm654, %v1527, -1.2676506e+30
      %v1645 = vsel %vm655, %v1531, -1.2676506e+30
      %v1646 = vsel %vm656, %v1535, -1.2676506e+30
      %v1647 = vsel %vm657, %v1539, -1.2676506e+30
      %v1648 = vsel %vm658, %v1543, -1.2676506e+30
      %v1649 = vsel %vm659, %v1547, -1.2676506e+30
      %v1650 = vsel %vm660, %v1551, -1.2676506e+30
      %v1651 = vsel %vm661, %v1555, -1.2676506e+30
      %v1652 = vsel %vm662, %v1559, -1.2676506e+30
      %v1653 = vsel %vm663, %v1563, -1.2676506e+30
      %v1654 = vsel %vm664, %v1567, -1.2676506e+30
      %v1655 = vsel %vm665, %v1571, -1.2676506e+30
      %v1656 = vsel %vm666, %v1575, -1.2676506e+30
      %v1657 = vsel %vm667, %v1579, -1.2676506e+30
      %v1658 = vsel %vm668, %v1583, -1.2676506e+30
      %v1659 = vsel %vm669, %v1587, -1.2676506e+30
      %v1660 = vsel %vm670, %v1591, -1.2676506e+30
      %v1661 = vsel %vm671, %v1595, -1.2676506e+30
      %v1662 = vsel %vm672, %v1599, -1.2676506e+30
      %v1663 = vsel %vm673, %v1603, -1.2676506e+30
      %v1664 = vsel %vm674, %v1607, -1.2676506e+30
      %v1665 = vsel %vm675, %v1611, -1.2676506e+30
      %v1666 = vsel %vm676, %v1615, -1.2676506e+30
      %v1667 = vsel %vm677, %v1619, -1.2676506e+30
      %v1668 = vsel %vm678, %v1623, -1.2676506e+30
      %v1669 = vsel %vm679, %v1627, -1.2676506e+30
      %v1670 = vsel %vm680, %v1631, -1.2676506e+30
      %v1671 = vsel %vm681, %v1635, -1.2676506e+30
      %v1672 = vsel %vm682, %v1639, -1.2676506e+30
      %v1673 = vsel %vm1438, %v1641, -inf
      %v1674 = vsel %vm1438, %v1642, -inf
      %v1675 = vsel %vm1438, %v1643, -inf
      %v1676 = vsel %vm1438, %v1644, -inf
      %v1677 = vsel %vm1438, %v1645, -inf
      %v1678 = vmax.f32 %v1673, %v1677
      %v1679 = vsel %vm1438, %v1646, -inf
      %v1680 = vmax.f32 %v1674, %v1679
      %v1681 = vsel %vm1438, %v1647, -inf
      %v1682 = vmax.f32 %v1675, %v1681
      %v1683 = vsel %vm1438, %v1648, -inf
      %v1684 = vmax.f32 %v1676, %v1683
      %v1685 = vsel %vm1438, %v1649, -inf
      %v1686 = vmax.f32 %v1678, %v1685
      %v1687 = vsel %vm1438, %v1650, -inf
      %v1688 = vmax.f32 %v1680, %v1687
      %v1689 = vsel %vm1438, %v1651, -inf
      %v1690 = vmax.f32 %v1682, %v1689
      %v1691 = vsel %vm1438, %v1652, -inf
      %v1692 = vmax.f32 %v1684, %v1691
      %v1693 = vsel %vm1438, %v1653, -inf
      %v1694 = vmax.f32 %v1686, %v1693
      %v1695 = vsel %vm1438, %v1654, -inf
      %v1696 = vmax.f32 %v1688, %v1695
      %v1697 = vsel %vm1438, %v1655, -inf
      %v1698 = vmax.f32 %v1690, %v1697
      %v1699 = vsel %vm1438, %v1656, -inf
      %v1700 = vmax.f32 %v1692, %v1699
      %v1701 = vsel %vm1438, %v1657, -inf
      %v1702 = vmax.f32 %v1694, %v1701
      %v1703 = vsel %vm1438, %v1658, -inf
      %v1704 = vmax.f32 %v1696, %v1703
      %v1705 = vsel %vm1438, %v1659, -inf
      %v1706 = vmax.f32 %v1698, %v1705
      %v1707 = vsel %vm1438, %v1660, -inf
      %v1708 = vmax.f32 %v1700, %v1707
      %v1709 = vsel %vm1438, %v1661, -inf
      %v1710 = vmax.f32 %v1702, %v1709
      %v1711 = vsel %vm1438, %v1662, -inf
      %v1712 = vmax.f32 %v1704, %v1711
      %v1713 = vsel %vm1438, %v1663, -inf
      %v1714 = vmax.f32 %v1706, %v1713
      %v1715 = vsel %vm1438, %v1664, -inf
      %v1716 = vmax.f32 %v1708, %v1715
      %v1717 = vsel %vm1438, %v1665, -inf
      %v1718 = vmax.f32 %v1710, %v1717
      %v1719 = vsel %vm1438, %v1666, -inf
      %v1720 = vmax.f32 %v1712, %v1719
      %v1721 = vsel %vm1438, %v1667, -inf
      %v1722 = vmax.f32 %v1714, %v1721
      %v1723 = vsel %vm1438, %v1668, -inf
      %v1724 = vmax.f32 %v1716, %v1723
      %v1725 = vsel %vm1438, %v1669, -inf
      %v1726 = vmax.f32 %v1718, %v1725
      %v1727 = vsel %vm1438, %v1670, -inf
      %v1728 = vmax.f32 %v1720, %v1727
      %v1729 = vsel %vm1438, %v1671, -inf
      %v1730 = vmax.f32 %v1722, %v1729
      %v1731 = vsel %vm1438, %v1672, -inf
      %v1732 = vmax.f32 %v1724, %v1731
      %v1733 = vmax.f32 %v1726, %v1728
      %v1734 = vmax.f32 %v1730, %v1732
      %v1735 = vmax.f32 %v1733, %v1734
      %v1736 = vrot.slane %v1735, 4
      %v1737 = vmax.f32 %v1735, %v1736
      %v1738 = vrot.slane %v1737, 2
      %v1739 = vmax.f32 %v1737, %v1738
      %v1740 = vrot.slane %v1739, 1
      %v1741 = vmax.f32 %v1739, %v1740
      %vm1742 = vcmp.eq.s32.totalorder %v1212, 1
      %v1743 = vmax.f32 %v1512, %v1741
      %v1744 = vsel %vm1742, 1, 0
      %vm1745 = vcmp.eq.s32.totalorder %v1744, 1
      %v1746 = vsel %vm1745, %v1743, %v1512
      %1747 = vset.pattern.permute.xlu0 2
      %1748 = vperm.xlu0 %1747, %v1019
      %v1749 = vpop.permute.xlu0 %1748
      %1751 = vset.pattern.permute.xlu0 2
      %1752 = vperm.xlu0 %1751, %v1020
      %v1753 = vpop.permute.xlu0 %1752
      %1755 = vset.pattern.permute.xlu0 2
      %1756 = vperm.xlu0 %1755, %v1021
      %v1757 = vpop.permute.xlu0 %1756
      %1759 = vset.pattern.permute.xlu0 2
      %1760 = vperm.xlu0 %1759, %v1022
      %v1761 = vpop.permute.xlu0 %1760
      %1763 = vset.pattern.permute.xlu0 2
      %1764 = vperm.xlu0 %1763, %v1023
      %v1765 = vpop.permute.xlu0 %1764
      %1767 = vset.pattern.permute.xlu0 2
      %1768 = vperm.xlu0 %1767, %v1024
      %v1769 = vpop.permute.xlu0 %1768
      %1771 = vset.pattern.permute.xlu0 2
      %1772 = vperm.xlu0 %1771, %v1025
      %v1773 = vpop.permute.xlu0 %1772
      %1775 = vset.pattern.permute.xlu0 2
      %1776 = vperm.xlu0 %1775, %v1026
      %v1777 = vpop.permute.xlu0 %1776
      %1779 = vset.pattern.permute.xlu0 2
      %1780 = vperm.xlu0 %1779, %v1027
      %v1781 = vpop.permute.xlu0 %1780
      %1783 = vset.pattern.permute.xlu0 2
      %1784 = vperm.xlu0 %1783, %v1028
      %v1785 = vpop.permute.xlu0 %1784
      %1787 = vset.pattern.permute.xlu0 2
      %1788 = vperm.xlu0 %1787, %v1029
      %v1789 = vpop.permute.xlu0 %1788
      %1791 = vset.pattern.permute.xlu0 2
      %1792 = vperm.xlu0 %1791, %v1030
      %v1793 = vpop.permute.xlu0 %1792
      %1795 = vset.pattern.permute.xlu0 2
      %1796 = vperm.xlu0 %1795, %v1031
      %v1797 = vpop.permute.xlu0 %1796
      %1799 = vset.pattern.permute.xlu0 2
      %1800 = vperm.xlu0 %1799, %v1032
      %v1801 = vpop.permute.xlu0 %1800
      %1803 = vset.pattern.permute.xlu0 2
      %1804 = vperm.xlu0 %1803, %v1033
      %v1805 = vpop.permute.xlu0 %1804
      %1807 = vset.pattern.permute.xlu0 2
      %1808 = vperm.xlu0 %1807, %v1034
      %v1809 = vpop.permute.xlu0 %1808
      %1811 = vset.pattern.permute.xlu0 2
      %1812 = vperm.xlu0 %1811, %v1035
      %v1813 = vpop.permute.xlu0 %1812
      %1815 = vset.pattern.permute.xlu0 2
      %1816 = vperm.xlu0 %1815, %v1036
      %v1817 = vpop.permute.xlu0 %1816
      %1819 = vset.pattern.permute.xlu0 2
      %1820 = vperm.xlu0 %1819, %v1037
      %v1821 = vpop.permute.xlu0 %1820
      %1823 = vset.pattern.permute.xlu0 2
      %1824 = vperm.xlu0 %1823, %v1038
      %v1825 = vpop.permute.xlu0 %1824
      %1827 = vset.pattern.permute.xlu0 2
      %1828 = vperm.xlu0 %1827, %v1039
      %v1829 = vpop.permute.xlu0 %1828
      %1831 = vset.pattern.permute.xlu0 2
      %1832 = vperm.xlu0 %1831, %v1040
      %v1833 = vpop.permute.xlu0 %1832
      %1835 = vset.pattern.permute.xlu0 2
      %1836 = vperm.xlu0 %1835, %v1041
      %v1837 = vpop.permute.xlu0 %1836
      %1839 = vset.pattern.permute.xlu0 2
      %1840 = vperm.xlu0 %1839, %v1042
      %v1841 = vpop.permute.xlu0 %1840
      %1843 = vset.pattern.permute.xlu0 2
      %1844 = vperm.xlu0 %1843, %v1043
      %v1845 = vpop.permute.xlu0 %1844
      %1847 = vset.pattern.permute.xlu0 2
      %1848 = vperm.xlu0 %1847, %v1044
      %v1849 = vpop.permute.xlu0 %1848
      %1851 = vset.pattern.permute.xlu0 2
      %1852 = vperm.xlu0 %1851, %v1045
      %v1853 = vpop.permute.xlu0 %1852
      %1855 = vset.pattern.permute.xlu0 2
      %1856 = vperm.xlu0 %1855, %v1046
      %v1857 = vpop.permute.xlu0 %1856
      %1859 = vset.pattern.permute.xlu0 2
      %1860 = vperm.xlu0 %1859, %v1047
      %v1861 = vpop.permute.xlu0 %1860
      %1863 = vset.pattern.permute.xlu0 2
      %1864 = vperm.xlu0 %1863, %v1048
      %v1865 = vpop.permute.xlu0 %1864
      %1867 = vset.pattern.permute.xlu0 2
      %1868 = vperm.xlu0 %1867, %v1049
      %v1869 = vpop.permute.xlu0 %1868
      %1871 = vset.pattern.permute.xlu0 2
      %1872 = vperm.xlu0 %1871, %v1050
      %v1873 = vpop.permute.xlu0 %1872
      %v1875 = vsel %vm651, %v1749, -1.2676506e+30
      %v1876 = vsel %vm652, %v1753, -1.2676506e+30
      %v1877 = vsel %vm653, %v1757, -1.2676506e+30
      %v1878 = vsel %vm654, %v1761, -1.2676506e+30
      %v1879 = vsel %vm655, %v1765, -1.2676506e+30
      %v1880 = vsel %vm656, %v1769, -1.2676506e+30
      %v1881 = vsel %vm657, %v1773, -1.2676506e+30
      %v1882 = vsel %vm658, %v1777, -1.2676506e+30
      %v1883 = vsel %vm659, %v1781, -1.2676506e+30
      %v1884 = vsel %vm660, %v1785, -1.2676506e+30
      %v1885 = vsel %vm661, %v1789, -1.2676506e+30
      %v1886 = vsel %vm662, %v1793, -1.2676506e+30
      %v1887 = vsel %vm663, %v1797, -1.2676506e+30
      %v1888 = vsel %vm664, %v1801, -1.2676506e+30
      %v1889 = vsel %vm665, %v1805, -1.2676506e+30
      %v1890 = vsel %vm666, %v1809, -1.2676506e+30
      %v1891 = vsel %vm667, %v1813, -1.2676506e+30
      %v1892 = vsel %vm668, %v1817, -1.2676506e+30
      %v1893 = vsel %vm669, %v1821, -1.2676506e+30
      %v1894 = vsel %vm670, %v1825, -1.2676506e+30
      %v1895 = vsel %vm671, %v1829, -1.2676506e+30
      %v1896 = vsel %vm672, %v1833, -1.2676506e+30
      %v1897 = vsel %vm673, %v1837, -1.2676506e+30
      %v1898 = vsel %vm674, %v1841, -1.2676506e+30
      %v1899 = vsel %vm675, %v1845, -1.2676506e+30
      %v1900 = vsel %vm676, %v1849, -1.2676506e+30
      %v1901 = vsel %vm677, %v1853, -1.2676506e+30
      %v1902 = vsel %vm678, %v1857, -1.2676506e+30
      %v1903 = vsel %vm679, %v1861, -1.2676506e+30
      %v1904 = vsel %vm680, %v1865, -1.2676506e+30
      %v1905 = vsel %vm681, %v1869, -1.2676506e+30
      %v1906 = vsel %vm682, %v1873, -1.2676506e+30
      %v1907 = vsel %vm1438, %v1875, -inf
      %v1908 = vsel %vm1438, %v1876, -inf
      %v1909 = vsel %vm1438, %v1877, -inf
      %v1910 = vsel %vm1438, %v1878, -inf
      %v1911 = vsel %vm1438, %v1879, -inf
      %v1912 = vmax.f32 %v1907, %v1911
      %v1913 = vsel %vm1438, %v1880, -inf
      %v1914 = vmax.f32 %v1908, %v1913
      %v1915 = vsel %vm1438, %v1881, -inf
      %v1916 = vmax.f32 %v1909, %v1915
      %v1917 = vsel %vm1438, %v1882, -inf
      %v1918 = vmax.f32 %v1910, %v1917
      %v1919 = vsel %vm1438, %v1883, -inf
      %v1920 = vmax.f32 %v1912, %v1919
      %v1921 = vsel %vm1438, %v1884, -inf
      %v1922 = vmax.f32 %v1914, %v1921
      %v1923 = vsel %vm1438, %v1885, -inf
      %v1924 = vmax.f32 %v1916, %v1923
      %v1925 = vsel %vm1438, %v1886, -inf
      %v1926 = vmax.f32 %v1918, %v1925
      %v1927 = vsel %vm1438, %v1887, -inf
      %v1928 = vmax.f32 %v1920, %v1927
      %v1929 = vsel %vm1438, %v1888, -inf
      %v1930 = vmax.f32 %v1922, %v1929
      %v1931 = vsel %vm1438, %v1889, -inf
      %v1932 = vmax.f32 %v1924, %v1931
      %v1933 = vsel %vm1438, %v1890, -inf
      %v1934 = vmax.f32 %v1926, %v1933
      %v1935 = vsel %vm1438, %v1891, -inf
      %v1936 = vmax.f32 %v1928, %v1935
      %v1937 = vsel %vm1438, %v1892, -inf
      %v1938 = vmax.f32 %v1930, %v1937
      %v1939 = vsel %vm1438, %v1893, -inf
      %v1940 = vmax.f32 %v1932, %v1939
      %v1941 = vsel %vm1438, %v1894, -inf
      %v1942 = vmax.f32 %v1934, %v1941
      %v1943 = vsel %vm1438, %v1895, -inf
      %v1944 = vmax.f32 %v1936, %v1943
      %v1945 = vsel %vm1438, %v1896, -inf
      %v1946 = vmax.f32 %v1938, %v1945
      %v1947 = vsel %vm1438, %v1897, -inf
      %v1948 = vmax.f32 %v1940, %v1947
      %v1949 = vsel %vm1438, %v1898, -inf
      %v1950 = vmax.f32 %v1942, %v1949
      %v1951 = vsel %vm1438, %v1899, -inf
      %v1952 = vmax.f32 %v1944, %v1951
      %v1953 = vsel %vm1438, %v1900, -inf
      %v1954 = vmax.f32 %v1946, %v1953
      %v1955 = vsel %vm1438, %v1901, -inf
      %v1956 = vmax.f32 %v1948, %v1955
      %v1957 = vsel %vm1438, %v1902, -inf
      %v1958 = vmax.f32 %v1950, %v1957
      %v1959 = vsel %vm1438, %v1903, -inf
      %v1960 = vmax.f32 %v1952, %v1959
      %v1961 = vsel %vm1438, %v1904, -inf
      %v1962 = vmax.f32 %v1954, %v1961
      %v1963 = vsel %vm1438, %v1905, -inf
      %v1964 = vmax.f32 %v1956, %v1963
      %v1965 = vsel %vm1438, %v1906, -inf
      %v1966 = vmax.f32 %v1958, %v1965
      %v1967 = vmax.f32 %v1960, %v1962
      %v1968 = vmax.f32 %v1964, %v1966
      %v1969 = vmax.f32 %v1967, %v1968
      %v1970 = vrot.slane %v1969, 4
      %v1971 = vmax.f32 %v1969, %v1970
      %v1972 = vrot.slane %v1971, 2
      %v1973 = vmax.f32 %v1971, %v1972
      %v1974 = vrot.slane %v1973, 1
      %v1975 = vmax.f32 %v1973, %v1974
      %vm1976 = vcmp.eq.s32.totalorder %v1212, 2
      %v1977 = vmax.f32 %v1746, %v1975
      %v1978 = vsel %vm1976, 1, 0
      %vm1979 = vcmp.eq.s32.totalorder %v1978, 1
      %v1980 = vsel %vm1979, %v1977, %v1746
      %1981 = vset.pattern.permute.xlu0 3
      %1982 = vperm.xlu0 %1981, %v1019
      %v1983 = vpop.permute.xlu0 %1982
      %1985 = vset.pattern.permute.xlu0 3
      %1986 = vperm.xlu0 %1985, %v1020
      %v1987 = vpop.permute.xlu0 %1986
      %1989 = vset.pattern.permute.xlu0 3
      %1990 = vperm.xlu0 %1989, %v1021
      %v1991 = vpop.permute.xlu0 %1990
      %1993 = vset.pattern.permute.xlu0 3
      %1994 = vperm.xlu0 %1993, %v1022
      %v1995 = vpop.permute.xlu0 %1994
      %1997 = vset.pattern.permute.xlu0 3
      %1998 = vperm.xlu0 %1997, %v1023
      %v1999 = vpop.permute.xlu0 %1998
      %2001 = vset.pattern.permute.xlu0 3
      %2002 = vperm.xlu0 %2001, %v1024
      %v2003 = vpop.permute.xlu0 %2002
      %2005 = vset.pattern.permute.xlu0 3
      %2006 = vperm.xlu0 %2005, %v1025
      %v2007 = vpop.permute.xlu0 %2006
      %2009 = vset.pattern.permute.xlu0 3
      %2010 = vperm.xlu0 %2009, %v1026
      %v2011 = vpop.permute.xlu0 %2010
      %2013 = vset.pattern.permute.xlu0 3
      %2014 = vperm.xlu0 %2013, %v1027
      %v2015 = vpop.permute.xlu0 %2014
      %2017 = vset.pattern.permute.xlu0 3
      %2018 = vperm.xlu0 %2017, %v1028
      %v2019 = vpop.permute.xlu0 %2018
      %2021 = vset.pattern.permute.xlu0 3
      %2022 = vperm.xlu0 %2021, %v1029
      %v2023 = vpop.permute.xlu0 %2022
      %2025 = vset.pattern.permute.xlu0 3
      %2026 = vperm.xlu0 %2025, %v1030
      %v2027 = vpop.permute.xlu0 %2026
      %2029 = vset.pattern.permute.xlu0 3
      %2030 = vperm.xlu0 %2029, %v1031
      %v2031 = vpop.permute.xlu0 %2030
      %2033 = vset.pattern.permute.xlu0 3
      %2034 = vperm.xlu0 %2033, %v1032
      %v2035 = vpop.permute.xlu0 %2034
      %2037 = vset.pattern.permute.xlu0 3
      %2038 = vperm.xlu0 %2037, %v1033
      %v2039 = vpop.permute.xlu0 %2038
      %2041 = vset.pattern.permute.xlu0 3
      %2042 = vperm.xlu0 %2041, %v1034
      %v2043 = vpop.permute.xlu0 %2042
      %2045 = vset.pattern.permute.xlu0 3
      %2046 = vperm.xlu0 %2045, %v1035
      %v2047 = vpop.permute.xlu0 %2046
      %2049 = vset.pattern.permute.xlu0 3
      %2050 = vperm.xlu0 %2049, %v1036
      %v2051 = vpop.permute.xlu0 %2050
      %2053 = vset.pattern.permute.xlu0 3
      %2054 = vperm.xlu0 %2053, %v1037
      %v2055 = vpop.permute.xlu0 %2054
      %2057 = vset.pattern.permute.xlu0 3
      %2058 = vperm.xlu0 %2057, %v1038
      %v2059 = vpop.permute.xlu0 %2058
      %2061 = vset.pattern.permute.xlu0 3
      %2062 = vperm.xlu0 %2061, %v1039
      %v2063 = vpop.permute.xlu0 %2062
      %2065 = vset.pattern.permute.xlu0 3
      %2066 = vperm.xlu0 %2065, %v1040
      %v2067 = vpop.permute.xlu0 %2066
      %2069 = vset.pattern.permute.xlu0 3
      %2070 = vperm.xlu0 %2069, %v1041
      %v2071 = vpop.permute.xlu0 %2070
      %2073 = vset.pattern.permute.xlu0 3
      %2074 = vperm.xlu0 %2073, %v1042
      %v2075 = vpop.permute.xlu0 %2074
      %2077 = vset.pattern.permute.xlu0 3
      %2078 = vperm.xlu0 %2077, %v1043
      %v2079 = vpop.permute.xlu0 %2078
      %2081 = vset.pattern.permute.xlu0 3
      %2082 = vperm.xlu0 %2081, %v1044
      %v2083 = vpop.permute.xlu0 %2082
      %2085 = vset.pattern.permute.xlu0 3
      %2086 = vperm.xlu0 %2085, %v1045
      %v2087 = vpop.permute.xlu0 %2086
      %2089 = vset.pattern.permute.xlu0 3
      %2090 = vperm.xlu0 %2089, %v1046
      %v2091 = vpop.permute.xlu0 %2090
      %2093 = vset.pattern.permute.xlu0 3
      %2094 = vperm.xlu0 %2093, %v1047
      %v2095 = vpop.permute.xlu0 %2094
      %2097 = vset.pattern.permute.xlu0 3
      %2098 = vperm.xlu0 %2097, %v1048
      %v2099 = vpop.permute.xlu0 %2098
      %2101 = vset.pattern.permute.xlu0 3
      %2102 = vperm.xlu0 %2101, %v1049
      %v2103 = vpop.permute.xlu0 %2102
      %2105 = vset.pattern.permute.xlu0 3
      %2106 = vperm.xlu0 %2105, %v1050
      %v2107 = vpop.permute.xlu0 %2106
      %v2109 = vsel %vm651, %v1983, -1.2676506e+30
      %v2110 = vsel %vm652, %v1987, -1.2676506e+30
      %v2111 = vsel %vm653, %v1991, -1.2676506e+30
      %v2112 = vsel %vm654, %v1995, -1.2676506e+30
      %v2113 = vsel %vm655, %v1999, -1.2676506e+30
      %v2114 = vsel %vm656, %v2003, -1.2676506e+30
      %v2115 = vsel %vm657, %v2007, -1.2676506e+30
      %v2116 = vsel %vm658, %v2011, -1.2676506e+30
      %v2117 = vsel %vm659, %v2015, -1.2676506e+30
      %v2118 = vsel %vm660, %v2019, -1.2676506e+30
      %v2119 = vsel %vm661, %v2023, -1.2676506e+30
      %v2120 = vsel %vm662, %v2027, -1.2676506e+30
      %v2121 = vsel %vm663, %v2031, -1.2676506e+30
      %v2122 = vsel %vm664, %v2035, -1.2676506e+30
      %v2123 = vsel %vm665, %v2039, -1.2676506e+30
      %v2124 = vsel %vm666, %v2043, -1.2676506e+30
      %v2125 = vsel %vm667, %v2047, -1.2676506e+30
      %v2126 = vsel %vm668, %v2051, -1.2676506e+30
      %v2127 = vsel %vm669, %v2055, -1.2676506e+30
      %v2128 = vsel %vm670, %v2059, -1.2676506e+30
      %v2129 = vsel %vm671, %v2063, -1.2676506e+30
      %v2130 = vsel %vm672, %v2067, -1.2676506e+30
      %v2131 = vsel %vm673, %v2071, -1.2676506e+30
      %v2132 = vsel %vm674, %v2075, -1.2676506e+30
      %v2133 = vsel %vm675, %v2079, -1.2676506e+30
      %v2134 = vsel %vm676, %v2083, -1.2676506e+30
      %v2135 = vsel %vm677, %v2087, -1.2676506e+30
      %v2136 = vsel %vm678, %v2091, -1.2676506e+30
      %v2137 = vsel %vm679, %v2095, -1.2676506e+30
      %v2138 = vsel %vm680, %v2099, -1.2676506e+30
      %v2139 = vsel %vm681, %v2103, -1.2676506e+30
      %v2140 = vsel %vm682, %v2107, -1.2676506e+30
      %v2141 = vsel %vm1438, %v2109, -inf
      %v2142 = vsel %vm1438, %v2110, -inf
      %v2143 = vsel %vm1438, %v2111, -inf
      %v2144 = vsel %vm1438, %v2112, -inf
      %v2145 = vsel %vm1438, %v2113, -inf
      %v2146 = vmax.f32 %v2141, %v2145
      %v2147 = vsel %vm1438, %v2114, -inf
      %v2148 = vmax.f32 %v2142, %v2147
      %v2149 = vsel %vm1438, %v2115, -inf
      %v2150 = vmax.f32 %v2143, %v2149
      %v2151 = vsel %vm1438, %v2116, -inf
      %v2152 = vmax.f32 %v2144, %v2151
      %v2153 = vsel %vm1438, %v2117, -inf
      %v2154 = vmax.f32 %v2146, %v2153
      %v2155 = vsel %vm1438, %v2118, -inf
      %v2156 = vmax.f32 %v2148, %v2155
      %v2157 = vsel %vm1438, %v2119, -inf
      %v2158 = vmax.f32 %v2150, %v2157
      %v2159 = vsel %vm1438, %v2120, -inf
      %v2160 = vmax.f32 %v2152, %v2159
      %v2161 = vsel %vm1438, %v2121, -inf
      %v2162 = vmax.f32 %v2154, %v2161
      %v2163 = vsel %vm1438, %v2122, -inf
      %v2164 = vmax.f32 %v2156, %v2163
      %v2165 = vsel %vm1438, %v2123, -inf
      %v2166 = vmax.f32 %v2158, %v2165
      %v2167 = vsel %vm1438, %v2124, -inf
      %v2168 = vmax.f32 %v2160, %v2167
      %v2169 = vsel %vm1438, %v2125, -inf
      %v2170 = vmax.f32 %v2162, %v2169
      %v2171 = vsel %vm1438, %v2126, -inf
      %v2172 = vmax.f32 %v2164, %v2171
      %v2173 = vsel %vm1438, %v2127, -inf
      %v2174 = vmax.f32 %v2166, %v2173
      %v2175 = vsel %vm1438, %v2128, -inf
      %v2176 = vmax.f32 %v2168, %v2175
      %v2177 = vsel %vm1438, %v2129, -inf
      %v2178 = vmax.f32 %v2170, %v2177
      %v2179 = vsel %vm1438, %v2130, -inf
      %v2180 = vmax.f32 %v2172, %v2179
      %v2181 = vsel %vm1438, %v2131, -inf
      %v2182 = vmax.f32 %v2174, %v2181
      %v2183 = vsel %vm1438, %v2132, -inf
      %v2184 = vmax.f32 %v2176, %v2183
      %v2185 = vsel %vm1438, %v2133, -inf
      %v2186 = vmax.f32 %v2178, %v2185
      %v2187 = vsel %vm1438, %v2134, -inf
      %v2188 = vmax.f32 %v2180, %v2187
      %v2189 = vsel %vm1438, %v2135, -inf
      %v2190 = vmax.f32 %v2182, %v2189
      %v2191 = vsel %vm1438, %v2136, -inf
      %v2192 = vmax.f32 %v2184, %v2191
      %v2193 = vsel %vm1438, %v2137, -inf
      %v2194 = vmax.f32 %v2186, %v2193
      %v2195 = vsel %vm1438, %v2138, -inf
      %v2196 = vmax.f32 %v2188, %v2195
      %v2197 = vsel %vm1438, %v2139, -inf
      %v2198 = vmax.f32 %v2190, %v2197
      %v2199 = vsel %vm1438, %v2140, -inf
      %v2200 = vmax.f32 %v2192, %v2199
      %v2201 = vmax.f32 %v2194, %v2196
      %v2202 = vmax.f32 %v2198, %v2200
      %v2203 = vmax.f32 %v2201, %v2202
      %v2204 = vrot.slane %v2203, 4
      %v2205 = vmax.f32 %v2203, %v2204
      %v2206 = vrot.slane %v2205, 2
      %v2207 = vmax.f32 %v2205, %v2206
      %v2208 = vrot.slane %v2207, 1
      %v2209 = vmax.f32 %v2207, %v2208
      %vm2210 = vcmp.eq.s32.totalorder %v1212, 3
      %v2211 = vmax.f32 %v1980, %v2209
      %v2212 = vsel %vm2210, 1, 0
      %vm2213 = vcmp.eq.s32.totalorder %v2212, 1
      %v2214 = vsel %vm2213, %v2211, %v1980
      %v2215 = vpack.c.bf16 %v2214, %v2214
      %v2216 = vunpack.c.l.bf16 %v2215
      %vm2217 = vcmask 125952
      %2218 = vst.msk [vmem:[#allocation2] sm:$0xf] %vm2217, %v2216
      %v2219 = vsub.f32 %v1245, %v2216
      %v2220 = vmul.f32 %v2219, 1.442695
      %v2221 = vpow.pop %v2220
      %v2223 = vsel %vm1438, %v747, 0
      %v2226 = vsel %vm1438, %v748, 0
      %v2229 = vsel %vm1438, %v749, 0
      %v2232 = vsel %vm1438, %v750, 0
      %v2235 = vsel %vm1438, %v751, 0
      %v2238 = vsel %vm1438, %v752, 0
      %v2241 = vsel %vm1438, %v753, 0
      %v2244 = vsel %vm1438, %v754, 0
      %v2247 = vsel %vm1438, %v755, 0
      %v2250 = vsel %vm1438, %v756, 0
      %v2253 = vsel %vm1438, %v757, 0
      %v2256 = vsel %vm1438, %v758, 0
      %v2259 = vsel %vm1438, %v759, 0
      %v2262 = vsel %vm1438, %v760, 0
      %v2265 = vsel %vm1438, %v761, 0
      %v2268 = vsel %vm1438, %v762, 0
      %v2271 = vsel %vm1438, %v2215, 0
      %2273 = vmatpush.bf16.xpose.msra.mxu0 0
      %2274 = vmatpush.bf16.xpose.msra.mxu0 0
      %2275 = vmatpush.bf16.xpose.msra.mxu0 0
      %2276 = vmatpush.bf16.xpose.msra.mxu0 0
      %2277 = vmatpush.bf16.xpose.msra.mxu0 0
      %2278 = vmatpush.bf16.xpose.msra.mxu0 0
      %2279 = vmatpush.bf16.xpose.msra.mxu0 0
      %2280 = vmatpush.bf16.xpose.msra.mxu0 %v2271
      %2281 = vmatmul.bf16.gmra.mxu0 %v2223
      %v2282 = vpop.f32.mrf.mxu0
      %v2283 = vadd.f32 0.0, %v2282
      %v2284 = vpop.f32.mrf.mxu0
      %v2285 = vadd.f32 0.0, %v2284
      %2286 = vmatmul.bf16.gmra.mxu0 %v2226
      %v2287 = vpop.f32.mrf.mxu0
      %v2288 = vadd.f32 0.0, %v2287
      %v2289 = vpop.f32.mrf.mxu0
      %v2290 = vadd.f32 0.0, %v2289
      %2291 = vmatmul.bf16.gmra.mxu0 %v2229
      %v2292 = vpop.f32.mrf.mxu0
      %v2293 = vadd.f32 0.0, %v2292
      %v2294 = vpop.f32.mrf.mxu0
      %v2295 = vadd.f32 0.0, %v2294
      %2296 = vmatmul.bf16.gmra.mxu0 %v2232
      %v2297 = vpop.f32.mrf.mxu0
      %v2298 = vadd.f32 0.0, %v2297
      %v2299 = vpop.f32.mrf.mxu0
      %v2300 = vadd.f32 0.0, %v2299
      %2301 = vmatmul.bf16.gmra.mxu0 %v2235
      %v2302 = vpop.f32.mrf.mxu0
      %v2303 = vadd.f32 0.0, %v2302
      %v2304 = vpop.f32.mrf.mxu0
      %v2305 = vadd.f32 0.0, %v2304
      %2306 = vmatmul.bf16.gmra.mxu0 %v2238
      %v2307 = vpop.f32.mrf.mxu0
      %v2308 = vadd.f32 0.0, %v2307
      %v2309 = vpop.f32.mrf.mxu0
      %v2310 = vadd.f32 0.0, %v2309
      %2311 = vmatmul.bf16.gmra.mxu0 %v2241
      %v2312 = vpop.f32.mrf.mxu0
      %v2313 = vadd.f32 0.0, %v2312
      %v2314 = vpop.f32.mrf.mxu0
      %v2315 = vadd.f32 0.0, %v2314
      %2316 = vmatmul.bf16.gmra.mxu0 %v2244
      %v2317 = vpop.f32.mrf.mxu0
      %v2318 = vadd.f32 0.0, %v2317
      %v2319 = vpop.f32.mrf.mxu0
      %v2320 = vadd.f32 0.0, %v2319
      %2321 = vmatmul.bf16.gmra.mxu0 %v2247
      %v2322 = vpop.f32.mrf.mxu0
      %v2323 = vadd.f32 0.0, %v2322
      %v2324 = vpop.f32.mrf.mxu0
      %v2325 = vadd.f32 0.0, %v2324
      %2326 = vmatmul.bf16.gmra.mxu0 %v2250
      %v2327 = vpop.f32.mrf.mxu0
      %v2328 = vadd.f32 0.0, %v2327
      %v2329 = vpop.f32.mrf.mxu0
      %v2330 = vadd.f32 0.0, %v2329
      %2331 = vmatmul.bf16.gmra.mxu0 %v2253
      %v2332 = vpop.f32.mrf.mxu0
      %v2333 = vadd.f32 0.0, %v2332
      %v2334 = vpop.f32.mrf.mxu0
      %v2335 = vadd.f32 0.0, %v2334
      %2336 = vmatmul.bf16.gmra.mxu0 %v2256
      %v2337 = vpop.f32.mrf.mxu0
      %v2338 = vadd.f32 0.0, %v2337
      %v2339 = vpop.f32.mrf.mxu0
      %v2340 = vadd.f32 0.0, %v2339
      %2341 = vmatmul.bf16.gmra.mxu0 %v2259
      %v2342 = vpop.f32.mrf.mxu0
      %v2343 = vadd.f32 0.0, %v2342
      %v2344 = vpop.f32.mrf.mxu0
      %v2345 = vadd.f32 0.0, %v2344
      %2346 = vmatmul.bf16.gmra.mxu0 %v2262
      %v2347 = vpop.f32.mrf.mxu0
      %v2348 = vadd.f32 0.0, %v2347
      %v2349 = vpop.f32.mrf.mxu0
      %v2350 = vadd.f32 0.0, %v2349
      %2351 = vmatmul.bf16.gmra.mxu0 %v2265
      %v2352 = vpop.f32.mrf.mxu0
      %v2353 = vadd.f32 0.0, %v2352
      %v2354 = vpop.f32.mrf.mxu0
      %v2355 = vadd.f32 0.0, %v2354
      %2356 = vmatmul.bf16.gmra.mxu0 %v2268
      %v2357 = vpop.f32.mrf.mxu0
      %v2358 = vadd.f32 0.0, %v2357
      %v2359 = vpop.f32.mrf.mxu0
      %v2360 = vadd.f32 0.0, %v2359
      %2361 = vdwg.mxu0
      %v2362 = vsub.f32 %v1019, %v2283
      %v2363 = vsub.f32 %v1020, %v2285
      %v2364 = vsub.f32 %v1021, %v2288
      %v2365 = vsub.f32 %v1022, %v2290
      %v2366 = vsub.f32 %v1023, %v2293
      %v2367 = vsub.f32 %v1024, %v2295
      %v2368 = vsub.f32 %v1025, %v2298
      %v2369 = vsub.f32 %v1026, %v2300
      %v2370 = vsub.f32 %v1027, %v2303
      %v2371 = vsub.f32 %v1028, %v2305
      %v2372 = vsub.f32 %v1029, %v2308
      %v2373 = vsub.f32 %v1030, %v2310
      %v2374 = vsub.f32 %v1031, %v2313
      %v2375 = vsub.f32 %v1032, %v2315
      %v2376 = vsub.f32 %v1033, %v2318
      %v2377 = vsub.f32 %v1034, %v2320
      %v2378 = vsub.f32 %v1035, %v2323
      %v2379 = vsub.f32 %v1036, %v2325
      %v2380 = vsub.f32 %v1037, %v2328
      %v2381 = vsub.f32 %v1038, %v2330
      %v2382 = vsub.f32 %v1039, %v2333
      %v2383 = vsub.f32 %v1040, %v2335
      %v2384 = vsub.f32 %v1041, %v2338
      %v2385 = vsub.f32 %v1042, %v2340
      %v2386 = vsub.f32 %v1043, %v2343
      %v2387 = vsub.f32 %v1044, %v2345
      %v2388 = vsub.f32 %v1045, %v2348
      %v2389 = vsub.f32 %v1046, %v2350
      %v2390 = vsub.f32 %v1047, %v2353
      %v2391 = vsub.f32 %v1048, %v2355
      %v2392 = vsub.f32 %v1049, %v2358
      %v2393 = vsub.f32 %v1050, %v2360
      %v2394 = vsel %vm827, 1, 0
      %v2395 = vsel %vm828, 1, 0
      %v2396 = vsel %vm829, 1, 0
      %v2397 = vsel %vm830, 1, 0
      %v2398 = vsel %vm831, 1, 0
      %v2399 = vsel %vm832, 1, 0
      %v2400 = vsel %vm833, 1, 0
      %v2401 = vsel %vm834, 1, 0
      %v2402 = vsel %vm835, 1, 0
      %v2403 = vsel %vm836, 1, 0
      %v2404 = vsel %vm837, 1, 0
      %v2405 = vsel %vm838, 1, 0
      %v2406 = vsel %vm839, 1, 0
      %v2407 = vsel %vm840, 1, 0
      %v2408 = vsel %vm841, 1, 0
      %v2409 = vsel %vm842, 1, 0
      %v2410 = vsel %vm843, 1, 0
      %v2411 = vsel %vm844, 1, 0
      %v2412 = vsel %vm845, 1, 0
      %v2413 = vsel %vm846, 1, 0
      %v2414 = vsel %vm847, 1, 0
      %v2415 = vsel %vm848, 1, 0
      %v2416 = vsel %vm849, 1, 0
      %v2417 = vsel %vm850, 1, 0
      %v2418 = vsel %vm851, 1, 0
      %v2419 = vsel %vm852, 1, 0
      %v2420 = vsel %vm853, 1, 0
      %v2421 = vsel %vm854, 1, 0
      %v2422 = vsel %vm855, 1, 0
      %v2423 = vsel %vm856, 1, 0
      %v2424 = vsel %vm857, 1, 0
      %v2425 = vsel %vm858, 1, 0
      %2426 = vset.pattern.permute.xlu0 0
      %2427 = vperm.xlu0 %2426, %v2394
      %v2428 = vpop.permute.xlu0 %2427
      %2429 = vset.pattern.permute.xlu0 0
      %2430 = vperm.xlu0 %2429, %v2395
      %v2431 = vpop.permute.xlu0 %2430
      %2432 = vset.pattern.permute.xlu0 0
      %2433 = vperm.xlu0 %2432, %v2396
      %v2434 = vpop.permute.xlu0 %2433
      %2435 = vset.pattern.permute.xlu0 0
      %2436 = vperm.xlu0 %2435, %v2397
      %v2437 = vpop.permute.xlu0 %2436
      %2438 = vset.pattern.permute.xlu0 0
      %2439 = vperm.xlu0 %2438, %v2398
      %v2440 = vpop.permute.xlu0 %2439
      %2441 = vset.pattern.permute.xlu0 0
      %2442 = vperm.xlu0 %2441, %v2399
      %v2443 = vpop.permute.xlu0 %2442
      %2444 = vset.pattern.permute.xlu0 0
      %2445 = vperm.xlu0 %2444, %v2400
      %v2446 = vpop.permute.xlu0 %2445
      %2447 = vset.pattern.permute.xlu0 0
      %2448 = vperm.xlu0 %2447, %v2401
      %v2449 = vpop.permute.xlu0 %2448
      %2450 = vset.pattern.permute.xlu0 0
      %2451 = vperm.xlu0 %2450, %v2402
      %v2452 = vpop.permute.xlu0 %2451
      %2453 = vset.pattern.permute.xlu0 0
      %2454 = vperm.xlu0 %2453, %v2403
      %v2455 = vpop.permute.xlu0 %2454
      %2456 = vset.pattern.permute.xlu0 0
      %2457 = vperm.xlu0 %2456, %v2404
      %v2458 = vpop.permute.xlu0 %2457
      %2459 = vset.pattern.permute.xlu0 0
      %2460 = vperm.xlu0 %2459, %v2405
      %v2461 = vpop.permute.xlu0 %2460
      %2462 = vset.pattern.permute.xlu0 0
      %2463 = vperm.xlu0 %2462, %v2406
      %v2464 = vpop.permute.xlu0 %2463
      %2465 = vset.pattern.permute.xlu0 0
      %2466 = vperm.xlu0 %2465, %v2407
      %v2467 = vpop.permute.xlu0 %2466
      %2468 = vset.pattern.permute.xlu0 0
      %2469 = vperm.xlu0 %2468, %v2408
      %v2470 = vpop.permute.xlu0 %2469
      %2471 = vset.pattern.permute.xlu0 0
      %2472 = vperm.xlu0 %2471, %v2409
      %v2473 = vpop.permute.xlu0 %2472
      %2474 = vset.pattern.permute.xlu0 0
      %2475 = vperm.xlu0 %2474, %v2410
      %v2476 = vpop.permute.xlu0 %2475
      %2477 = vset.pattern.permute.xlu0 0
      %2478 = vperm.xlu0 %2477, %v2411
      %v2479 = vpop.permute.xlu0 %2478
      %2480 = vset.pattern.permute.xlu0 0
      %2481 = vperm.xlu0 %2480, %v2412
      %v2482 = vpop.permute.xlu0 %2481
      %2483 = vset.pattern.permute.xlu0 0
      %2484 = vperm.xlu0 %2483, %v2413
      %v2485 = vpop.permute.xlu0 %2484
      %2486 = vset.pattern.permute.xlu0 0
      %2487 = vperm.xlu0 %2486, %v2414
      %v2488 = vpop.permute.xlu0 %2487
      %2489 = vset.pattern.permute.xlu0 0
      %2490 = vperm.xlu0 %2489, %v2415
      %v2491 = vpop.permute.xlu0 %2490
      %2492 = vset.pattern.permute.xlu0 0
      %2493 = vperm.xlu0 %2492, %v2416
      %v2494 = vpop.permute.xlu0 %2493
      %2495 = vset.pattern.permute.xlu0 0
      %2496 = vperm.xlu0 %2495, %v2417
      %v2497 = vpop.permute.xlu0 %2496
      %2498 = vset.pattern.permute.xlu0 0
      %2499 = vperm.xlu0 %2498, %v2418
      %v2500 = vpop.permute.xlu0 %2499
      %2501 = vset.pattern.permute.xlu0 0
      %2502 = vperm.xlu0 %2501, %v2419
      %v2503 = vpop.permute.xlu0 %2502
      %2504 = vset.pattern.permute.xlu0 0
      %2505 = vperm.xlu0 %2504, %v2420
      %v2506 = vpop.permute.xlu0 %2505
      %2507 = vset.pattern.permute.xlu0 0
      %2508 = vperm.xlu0 %2507, %v2421
      %v2509 = vpop.permute.xlu0 %2508
      %2510 = vset.pattern.permute.xlu0 0
      %2511 = vperm.xlu0 %2510, %v2422
      %v2512 = vpop.permute.xlu0 %2511
      %2513 = vset.pattern.permute.xlu0 0
      %2514 = vperm.xlu0 %2513, %v2423
      %v2515 = vpop.permute.xlu0 %2514
      %2516 = vset.pattern.permute.xlu0 0
      %2517 = vperm.xlu0 %2516, %v2424
      %v2518 = vpop.permute.xlu0 %2517
      %2519 = vset.pattern.permute.xlu0 0
      %2520 = vperm.xlu0 %2519, %v2425
      %v2521 = vpop.permute.xlu0 %2520
      %vm2522 = vcmp.eq.s32.totalorder %v2428, 1
      %vm2523 = vcmp.eq.s32.totalorder %v2431, 1
      %vm2524 = vcmp.eq.s32.totalorder %v2434, 1
      %vm2525 = vcmp.eq.s32.totalorder %v2437, 1
      %vm2526 = vcmp.eq.s32.totalorder %v2440, 1
      %vm2527 = vcmp.eq.s32.totalorder %v2443, 1
      %vm2528 = vcmp.eq.s32.totalorder %v2446, 1
      %vm2529 = vcmp.eq.s32.totalorder %v2449, 1
      %vm2530 = vcmp.eq.s32.totalorder %v2452, 1
      %vm2531 = vcmp.eq.s32.totalorder %v2455, 1
      %vm2532 = vcmp.eq.s32.totalorder %v2458, 1
      %vm2533 = vcmp.eq.s32.totalorder %v2461, 1
      %vm2534 = vcmp.eq.s32.totalorder %v2464, 1
      %vm2535 = vcmp.eq.s32.totalorder %v2467, 1
      %vm2536 = vcmp.eq.s32.totalorder %v2470, 1
      %vm2537 = vcmp.eq.s32.totalorder %v2473, 1
      %vm2538 = vcmp.eq.s32.totalorder %v2476, 1
      %vm2539 = vcmp.eq.s32.totalorder %v2479, 1
      %vm2540 = vcmp.eq.s32.totalorder %v2482, 1
      %vm2541 = vcmp.eq.s32.totalorder %v2485, 1
      %vm2542 = vcmp.eq.s32.totalorder %v2488, 1
      %vm2543 = vcmp.eq.s32.totalorder %v2491, 1
      %vm2544 = vcmp.eq.s32.totalorder %v2494, 1
      %vm2545 = vcmp.eq.s32.totalorder %v2497, 1
      %vm2546 = vcmp.eq.s32.totalorder %v2500, 1
      %vm2547 = vcmp.eq.s32.totalorder %v2503, 1
      %vm2548 = vcmp.eq.s32.totalorder %v2506, 1
      %vm2549 = vcmp.eq.s32.totalorder %v2509, 1
      %vm2550 = vcmp.eq.s32.totalorder %v2512, 1
      %vm2551 = vcmp.eq.s32.totalorder %v2515, 1
      %vm2552 = vcmp.eq.s32.totalorder %v2518, 1
      %vm2553 = vcmp.eq.s32.totalorder %v2521, 1
      %v2554 = vsel %vm2522, %v2362, -1.2676506e+30
      %v2555 = vsel %vm2523, %v2363, -1.2676506e+30
      %v2556 = vsel %vm2524, %v2364, -1.2676506e+30
      %v2557 = vsel %vm2525, %v2365, -1.2676506e+30
      %v2558 = vsel %vm2526, %v2366, -1.2676506e+30
      %v2559 = vsel %vm2527, %v2367, -1.2676506e+30
      %v2560 = vsel %vm2528, %v2368, -1.2676506e+30
      %v2561 = vsel %vm2529, %v2369, -1.2676506e+30
      %v2562 = vsel %vm2530, %v2370, -1.2676506e+30
      %v2563 = vsel %vm2531, %v2371, -1.2676506e+30
      %v2564 = vsel %vm2532, %v2372, -1.2676506e+30
      %v2565 = vsel %vm2533, %v2373, -1.2676506e+30
      %v2566 = vsel %vm2534, %v2374, -1.2676506e+30
      %v2567 = vsel %vm2535, %v2375, -1.2676506e+30
      %v2568 = vsel %vm2536, %v2376, -1.2676506e+30
      %v2569 = vsel %vm2537, %v2377, -1.2676506e+30
      %v2570 = vsel %vm2538, %v2378, -1.2676506e+30
      %v2571 = vsel %vm2539, %v2379, -1.2676506e+30
      %v2572 = vsel %vm2540, %v2380, -1.2676506e+30
      %v2573 = vsel %vm2541, %v2381, -1.2676506e+30
      %v2574 = vsel %vm2542, %v2382, -1.2676506e+30
      %v2575 = vsel %vm2543, %v2383, -1.2676506e+30
      %v2576 = vsel %vm2544, %v2384, -1.2676506e+30
      %v2577 = vsel %vm2545, %v2385, -1.2676506e+30
      %v2578 = vsel %vm2546, %v2386, -1.2676506e+30
      %v2579 = vsel %vm2547, %v2387, -1.2676506e+30
      %v2580 = vsel %vm2548, %v2388, -1.2676506e+30
      %v2581 = vsel %vm2549, %v2389, -1.2676506e+30
      %v2582 = vsel %vm2550, %v2390, -1.2676506e+30
      %v2583 = vsel %vm2551, %v2391, -1.2676506e+30
      %v2584 = vsel %vm2552, %v2392, -1.2676506e+30
      %v2585 = vsel %vm2553, %v2393, -1.2676506e+30
      %v2586 = vmul.f32 %v2554, 1.442695
      %v2587 = vpow.pop %v2586
      %v2588 = vmul.f32 %v2555, 1.442695
      %v2589 = vpow.pop %v2588
      %v2590 = vmul.f32 %v2556, 1.442695
      %v2591 = vpow.pop %v2590
      %v2592 = vmul.f32 %v2557, 1.442695
      %v2593 = vpow.pop %v2592
      %v2594 = vmul.f32 %v2558, 1.442695
      %v2595 = vpow.pop %v2594
      %v2596 = vmul.f32 %v2559, 1.442695
      %v2597 = vpow.pop %v2596
      %v2598 = vmul.f32 %v2560, 1.442695
      %v2599 = vpow.pop %v2598
      %v2600 = vmul.f32 %v2561, 1.442695
      %v2601 = vpow.pop %v2600
      %v2602 = vmul.f32 %v2562, 1.442695
      %v2603 = vpow.pop %v2602
      %v2604 = vmul.f32 %v2563, 1.442695
      %v2605 = vpow.pop %v2604
      %v2606 = vmul.f32 %v2564, 1.442695
      %v2607 = vpow.pop %v2606
      %v2608 = vmul.f32 %v2565, 1.442695
      %v2609 = vpow.pop %v2608
      %v2610 = vmul.f32 %v2566, 1.442695
      %v2611 = vpow.pop %v2610
      %v2612 = vmul.f32 %v2567, 1.442695
      %v2613 = vpow.pop %v2612
      %v2614 = vmul.f32 %v2568, 1.442695
      %v2615 = vpow.pop %v2614
      %v2616 = vmul.f32 %v2569, 1.442695
      %v2617 = vpow.pop %v2616
      %v2618 = vmul.f32 %v2570, 1.442695
      %v2619 = vpow.pop %v2618
      %v2620 = vmul.f32 %v2571, 1.442695
      %v2621 = vpow.pop %v2620
      %v2622 = vmul.f32 %v2572, 1.442695
      %v2623 = vpow.pop %v2622
      %v2624 = vmul.f32 %v2573, 1.442695
      %v2625 = vpow.pop %v2624
      %v2626 = vmul.f32 %v2574, 1.442695
      %v2627 = vpow.pop %v2626
      %v2628 = vmul.f32 %v2575, 1.442695
      %v2629 = vpow.pop %v2628
      %v2630 = vmul.f32 %v2576, 1.442695
      %v2631 = vpow.pop %v2630
      %v2632 = vmul.f32 %v2577, 1.442695
      %v2633 = vpow.pop %v2632
      %v2634 = vmul.f32 %v2578, 1.442695
      %v2635 = vpow.pop %v2634
      %v2636 = vmul.f32 %v2579, 1.442695
      %v2637 = vpow.pop %v2636
      %v2638 = vmul.f32 %v2580, 1.442695
      %v2639 = vpow.pop %v2638
      %v2640 = vmul.f32 %v2581, 1.442695
      %v2641 = vpow.pop %v2640
      %v2642 = vmul.f32 %v2582, 1.442695
      %v2643 = vpow.pop %v2642
      %v2644 = vmul.f32 %v2583, 1.442695
      %v2645 = vpow.pop %v2644
      %v2646 = vmul.f32 %v2584, 1.442695
      %v2647 = vpow.pop %v2646
      %v2648 = vmul.f32 %v2585, 1.442695
      %v2649 = vpow.pop %v2648
      %v2650 = vpack.c.bf16 %v2589, %v2587
      %v2651 = vpack.c.bf16 %v2593, %v2591
      %v2652 = vpack.c.bf16 %v2597, %v2595
      %v2653 = vpack.c.bf16 %v2601, %v2599
      %v2654 = vpack.c.bf16 %v2605, %v2603
      %v2655 = vpack.c.bf16 %v2609, %v2607
      %v2656 = vpack.c.bf16 %v2613, %v2611
      %v2657 = vpack.c.bf16 %v2617, %v2615
      %v2658 = vpack.c.bf16 %v2621, %v2619
      %v2659 = vpack.c.bf16 %v2625, %v2623
      %v2660 = vpack.c.bf16 %v2629, %v2627
      %v2661 = vpack.c.bf16 %v2633, %v2631
      %v2662 = vpack.c.bf16 %v2637, %v2635
      %v2663 = vpack.c.bf16 %v2641, %v2639
      %v2664 = vpack.c.bf16 %v2645, %v2643
      %v2665 = vpack.c.bf16 %v2649, %v2647
      %2666 = vxpose.xlu0.c.b16.start [1/8] %v2650, 128
      %2667 = vxpose.xlu0.c.b16.cont [2/8] %v2651, 128
      %2668 = vxpose.xlu0.c.b16.cont [3/8] %v2652, 128
      %2669 = vxpose.xlu0.c.b16.cont [4/8] %v2653, 128
      %2670 = vxpose.xlu0.c.b16.cont [5/8] %v2654, 128
      %2671 = vxpose.xlu0.c.b16.cont [6/8] %v2655, 128
      %2672 = vxpose.xlu0.c.b16.cont [7/8] %v2656, 128
      %2673 = vxpose.xlu0.c.b16.end [8/8] %v2657, 128
      %v2674 = vpop.trf.xlu0
      %v2675 = vpop.trf.xlu0
      %v2676 = vpop.trf.xlu0
      %v2677 = vpop.trf.xlu0
      %v2678 = vpop.trf.xlu0
      %v2679 = vpop.trf.xlu0
      %v2680 = vpop.trf.xlu0
      %v2681 = vpop.trf.xlu0
      %2682 = vxpose.xlu0.c.b16.start [1/8] %v2658, 128
      %2683 = vxpose.xlu0.c.b16.cont [2/8] %v2659, 128
      %2684 = vxpose.xlu0.c.b16.cont [3/8] %v2660, 128
      %2685 = vxpose.xlu0.c.b16.cont [4/8] %v2661, 128
      %2686 = vxpose.xlu0.c.b16.cont [5/8] %v2662, 128
      %2687 = vxpose.xlu0.c.b16.cont [6/8] %v2663, 128
      %2688 = vxpose.xlu0.c.b16.cont [7/8] %v2664, 128
      %2689 = vxpose.xlu0.c.b16.end [8/8] %v2665, 128
      %v2690 = vpop.trf.xlu0
      %v2691 = vpop.trf.xlu0
      %v2692 = vpop.trf.xlu0
      %v2693 = vpop.trf.xlu0
      %v2694 = vpop.trf.xlu0
      %v2695 = vpop.trf.xlu0
      %v2696 = vpop.trf.xlu0
      %v2697 = vpop.trf.xlu0
      %2698 = vmatpush.bf16.msra.mxu0 %v754
      %2699 = vmatpush.bf16.msra.mxu0 %v753
      %2700 = vmatpush.bf16.msra.mxu0 %v752
      %2701 = vmatpush.bf16.msra.mxu0 %v751
      %2702 = vmatpush.bf16.msra.mxu0 %v750
      %2703 = vmatpush.bf16.msra.mxu0 %v749
      %2704 = vmatpush.bf16.msra.mxu0 %v748
      %2705 = vmatpush.bf16.msra.mxu0 %v747
      %2706 = vmatmul.bf16.gmra.mxu0 %v2674
      %v2707 = vpop.f32.mrf.mxu0
      %v2708 = vadd.f32 0.0, %v2707
      %v2709 = vpop.f32.mrf.mxu0
      %2710 = vdwg.mxu0
      %2711 = vmatpush.bf16.msra.mxu0 %v762
      %2712 = vmatpush.bf16.msra.mxu0 %v761
      %2713 = vmatpush.bf16.msra.mxu0 %v760
      %2714 = vmatpush.bf16.msra.mxu0 %v759
      %2715 = vmatpush.bf16.msra.mxu0 %v758
      %2716 = vmatpush.bf16.msra.mxu0 %v757
      %2717 = vmatpush.bf16.msra.mxu0 %v756
      %2718 = vmatpush.bf16.msra.mxu0 %v755
      %2719 = vmatmul.bf16.gmra.mxu0 %v2690
      %v2720 = vpop.f32.mrf.mxu0
      %v2721 = vadd.f32 %v2708, %v2720
      %v2722 = vpop.f32.mrf.mxu0
      %2723 = vdwg.mxu0
      %v2724 = vld [vmem:[#allocation3] sm:$0xf]
      %v2725 = vmul.f32 %v2221, %v2724
      %v2726 = vadd.f32 %v2725, %v2721
      %2727 = vst.msk [vmem:[#allocation3] sm:$0xf] %vm2217, %v2726
      %vm2728 = vcmask 31744
      %v2730 = vsel %vm2728, %v2650, 0
      %v2733 = vsel %vm2728, %v2651, 0
      %v2736 = vsel %vm2728, %v2652, 0
      %v2739 = vsel %vm2728, %v2653, 0
      %v2742 = vsel %vm2728, %v2654, 0
      %v2745 = vsel %vm2728, %v2655, 0
      %v2748 = vsel %vm2728, %v2656, 0
      %v2751 = vsel %vm2728, %v2657, 0
      %v2754 = vsel %vm2728, %v2658, 0
      %v2757 = vsel %vm2728, %v2659, 0
      %v2760 = vsel %vm2728, %v2660, 0
      %v2763 = vsel %vm2728, %v2661, 0
      %v2766 = vsel %vm2728, %v2662, 0
      %v2769 = vsel %vm2728, %v2663, 0
      %v2772 = vsel %vm2728, %v2664, 0
      %v2775 = vsel %vm2728, %v2665, 0
      %vm2777 = vcmask 1041408
      %v2779 = vsel %vm2777, %v486, 0
      %2781 = vmatpush.bf16.msra.mxu0 0
      %2782 = vmatpush.bf16.msra.mxu0 0
      %2783 = vmatpush.bf16.msra.mxu0 0
      %2784 = vmatpush.bf16.msra.mxu0 0
      %2785 = vmatpush.bf16.msra.mxu0 0
      %2786 = vmatpush.bf16.msra.mxu0 0
      %2787 = vmatpush.bf16.msra.mxu0 0
      %2788 = vmatpush.bf16.msra.mxu0 %v2779
      %2789 = vmatmul.bf16.gmra.mxu0 %v2730
      %v2790 = vpop.f32.mrf.mxu0
      %v2791 = vadd.f32 0.0, %v2790
      %v2792 = vpop.f32.mrf.mxu0
      %v2793 = vadd.f32 0.0, %v2792
      %2794 = vmatmul.bf16.gmra.mxu0 %v2733
      %v2795 = vpop.f32.mrf.mxu0
      %v2796 = vadd.f32 0.0, %v2795
      %v2797 = vpop.f32.mrf.mxu0
      %v2798 = vadd.f32 0.0, %v2797
      %2799 = vmatmul.bf16.gmra.mxu0 %v2736
      %v2800 = vpop.f32.mrf.mxu0
      %v2801 = vadd.f32 0.0, %v2800
      %v2802 = vpop.f32.mrf.mxu0
      %v2803 = vadd.f32 0.0, %v2802
      %2804 = vmatmul.bf16.gmra.mxu0 %v2739
      %v2805 = vpop.f32.mrf.mxu0
      %v2806 = vadd.f32 0.0, %v2805
      %v2807 = vpop.f32.mrf.mxu0
      %v2808 = vadd.f32 0.0, %v2807
      %2809 = vmatmul.bf16.gmra.mxu0 %v2742
      %v2810 = vpop.f32.mrf.mxu0
      %v2811 = vadd.f32 0.0, %v2810
      %v2812 = vpop.f32.mrf.mxu0
      %v2813 = vadd.f32 0.0, %v2812
      %2814 = vmatmul.bf16.gmra.mxu0 %v2745
      %v2815 = vpop.f32.mrf.mxu0
      %v2816 = vadd.f32 0.0, %v2815
      %v2817 = vpop.f32.mrf.mxu0
      %v2818 = vadd.f32 0.0, %v2817
      %2819 = vmatmul.bf16.gmra.mxu0 %v2748
      %v2820 = vpop.f32.mrf.mxu0
      %v2821 = vadd.f32 0.0, %v2820
      %v2822 = vpop.f32.mrf.mxu0
      %v2823 = vadd.f32 0.0, %v2822
      %2824 = vmatmul.bf16.gmra.mxu0 %v2751
      %v2825 = vpop.f32.mrf.mxu0
      %v2826 = vadd.f32 0.0, %v2825
      %v2827 = vpop.f32.mrf.mxu0
      %v2828 = vadd.f32 0.0, %v2827
      %2829 = vmatmul.bf16.gmra.mxu0 %v2754
      %v2830 = vpop.f32.mrf.mxu0
      %v2831 = vadd.f32 0.0, %v2830
      %v2832 = vpop.f32.mrf.mxu0
      %v2833 = vadd.f32 0.0, %v2832
      %2834 = vmatmul.bf16.gmra.mxu0 %v2757
      %v2835 = vpop.f32.mrf.mxu0
      %v2836 = vadd.f32 0.0, %v2835
      %v2837 = vpop.f32.mrf.mxu0
      %v2838 = vadd.f32 0.0, %v2837
      %2839 = vmatmul.bf16.gmra.mxu0 %v2760
      %v2840 = vpop.f32.mrf.mxu0
      %v2841 = vadd.f32 0.0, %v2840
      %v2842 = vpop.f32.mrf.mxu0
      %v2843 = vadd.f32 0.0, %v2842
      %2844 = vmatmul.bf16.gmra.mxu0 %v2763
      %v2845 = vpop.f32.mrf.mxu0
      %v2846 = vadd.f32 0.0, %v2845
      %v2847 = vpop.f32.mrf.mxu0
      %v2848 = vadd.f32 0.0, %v2847
      %2849 = vmatmul.bf16.gmra.mxu0 %v2766
      %v2850 = vpop.f32.mrf.mxu0
      %v2851 = vadd.f32 0.0, %v2850
      %v2852 = vpop.f32.mrf.mxu0
      %v2853 = vadd.f32 0.0, %v2852
      %2854 = vmatmul.bf16.gmra.mxu0 %v2769
      %v2855 = vpop.f32.mrf.mxu0
      %v2856 = vadd.f32 0.0, %v2855
      %v2857 = vpop.f32.mrf.mxu0
      %v2858 = vadd.f32 0.0, %v2857
      %2859 = vmatmul.bf16.gmra.mxu0 %v2772
      %v2860 = vpop.f32.mrf.mxu0
      %v2861 = vadd.f32 0.0, %v2860
      %v2862 = vpop.f32.mrf.mxu0
      %v2863 = vadd.f32 0.0, %v2862
      %2864 = vmatmul.bf16.gmra.mxu0 %v2775
      %v2865 = vpop.f32.mrf.mxu0
      %v2866 = vadd.f32 0.0, %v2865
      %v2867 = vpop.f32.mrf.mxu0
      %v2868 = vadd.f32 0.0, %v2867
      %2869 = vdwg.mxu0
      %v2870 = vunpack.c.l.bf16 %v1213
      %v2871 = vunpack.c.l.bf16 %v1214
      %v2872 = vunpack.c.l.bf16 %v1215
      %v2873 = vunpack.c.l.bf16 %v1216
      %v2874 = vunpack.c.l.bf16 %v1217
      %v2875 = vunpack.c.l.bf16 %v1218
      %v2876 = vunpack.c.l.bf16 %v1219
      %v2877 = vunpack.c.l.bf16 %v1220
      %v2878 = vunpack.c.l.bf16 %v1221
      %v2879 = vunpack.c.l.bf16 %v1222
      %v2880 = vunpack.c.l.bf16 %v1223
      %v2881 = vunpack.c.l.bf16 %v1224
      %v2882 = vunpack.c.l.bf16 %v1225
      %v2883 = vunpack.c.l.bf16 %v1226
      %v2884 = vunpack.c.l.bf16 %v1227
      %v2885 = vunpack.c.l.bf16 %v1228
      %v2886 = vunpack.c.l.bf16 %v1229
      %v2887 = vunpack.c.l.bf16 %v1230
      %v2888 = vunpack.c.l.bf16 %v1231
      %v2889 = vunpack.c.l.bf16 %v1232
      %v2890 = vunpack.c.l.bf16 %v1233
      %v2891 = vunpack.c.l.bf16 %v1234
      %v2892 = vunpack.c.l.bf16 %v1235
      %v2893 = vunpack.c.l.bf16 %v1236
      %v2894 = vunpack.c.l.bf16 %v1237
      %v2895 = vunpack.c.l.bf16 %v1238
      %v2896 = vunpack.c.l.bf16 %v1239
      %v2897 = vunpack.c.l.bf16 %v1240
      %v2898 = vunpack.c.l.bf16 %v1241
      %v2899 = vunpack.c.l.bf16 %v1242
      %v2900 = vunpack.c.l.bf16 %v1243
      %v2901 = vunpack.c.l.bf16 %v1244
      %v2902 = vmul.f32 %v2791, %v2870
      %v2903 = vmul.f32 %v2793, %v2871
      %v2904 = vmul.f32 %v2796, %v2872
      %v2905 = vmul.f32 %v2798, %v2873
      %v2906 = vmul.f32 %v2801, %v2874
      %v2907 = vmul.f32 %v2803, %v2875
      %v2908 = vmul.f32 %v2806, %v2876
      %v2909 = vmul.f32 %v2808, %v2877
      %v2910 = vmul.f32 %v2811, %v2878
      %v2911 = vmul.f32 %v2813, %v2879
      %v2912 = vmul.f32 %v2816, %v2880
      %v2913 = vmul.f32 %v2818, %v2881
      %v2914 = vmul.f32 %v2821, %v2882
      %v2915 = vmul.f32 %v2823, %v2883
      %v2916 = vmul.f32 %v2826, %v2884
      %v2917 = vmul.f32 %v2828, %v2885
      %v2918 = vmul.f32 %v2831, %v2886
      %v2919 = vmul.f32 %v2833, %v2887
      %v2920 = vmul.f32 %v2836, %v2888
      %v2921 = vmul.f32 %v2838, %v2889
      %v2922 = vmul.f32 %v2841, %v2890
      %v2923 = vmul.f32 %v2843, %v2891
      %v2924 = vmul.f32 %v2846, %v2892
      %v2925 = vmul.f32 %v2848, %v2893
      %v2926 = vmul.f32 %v2851, %v2894
      %v2927 = vmul.f32 %v2853, %v2895
      %v2928 = vmul.f32 %v2856, %v2896
      %v2929 = vmul.f32 %v2858, %v2897
      %v2930 = vmul.f32 %v2861, %v2898
      %v2931 = vmul.f32 %v2863, %v2899
      %v2932 = vmul.f32 %v2866, %v2900
      %v2933 = vmul.f32 %v2868, %v2901
      %v2934 = vpack.c.bf16 %v2903, %v2902
      %v2935 = vpack.c.bf16 %v2905, %v2904
      %v2936 = vpack.c.bf16 %v2907, %v2906
      %v2937 = vpack.c.bf16 %v2909, %v2908
      %v2938 = vpack.c.bf16 %v2911, %v2910
      %v2939 = vpack.c.bf16 %v2913, %v2912
      %v2940 = vpack.c.bf16 %v2915, %v2914
      %v2941 = vpack.c.bf16 %v2917, %v2916
      %v2942 = vpack.c.bf16 %v2919, %v2918
      %v2943 = vpack.c.bf16 %v2921, %v2920
      %v2944 = vpack.c.bf16 %v2923, %v2922
      %v2945 = vpack.c.bf16 %v2925, %v2924
      %v2946 = vpack.c.bf16 %v2927, %v2926
      %v2947 = vpack.c.bf16 %v2929, %v2928
      %v2948 = vpack.c.bf16 %v2931, %v2930
      %v2949 = vpack.c.bf16 %v2933, %v2932
      %2950 = vxpose.xlu0.c.b16.start [1/8] %v747, 128
      %2951 = vxpose.xlu0.c.b16.cont [2/8] %v748, 128
      %2952 = vxpose.xlu0.c.b16.cont [3/8] %v749, 128
      %2953 = vxpose.xlu0.c.b16.cont [4/8] %v750, 128
      %2954 = vxpose.xlu0.c.b16.cont [5/8] %v751, 128
      %2955 = vxpose.xlu0.c.b16.cont [6/8] %v752, 128
      %2956 = vxpose.xlu0.c.b16.cont [7/8] %v753, 128
      %2957 = vxpose.xlu0.c.b16.end [8/8] %v754, 128
      %v2958 = vpop.trf.xlu0
      %v2959 = vpop.trf.xlu0
      %v2960 = vpop.trf.xlu0
      %v2961 = vpop.trf.xlu0
      %v2962 = vpop.trf.xlu0
      %v2963 = vpop.trf.xlu0
      %v2964 = vpop.trf.xlu0
      %v2965 = vpop.trf.xlu0
      %2966 = vxpose.xlu0.c.b16.start [1/8] %v755, 128
      %2967 = vxpose.xlu0.c.b16.cont [2/8] %v756, 128
      %2968 = vxpose.xlu0.c.b16.cont [3/8] %v757, 128
      %2969 = vxpose.xlu0.c.b16.cont [4/8] %v758, 128
      %2970 = vxpose.xlu0.c.b16.cont [5/8] %v759, 128
      %2971 = vxpose.xlu0.c.b16.cont [6/8] %v760, 128
      %2972 = vxpose.xlu0.c.b16.cont [7/8] %v761, 128
      %2973 = vxpose.xlu0.c.b16.end [8/8] %v762, 128
      %v2974 = vpop.trf.xlu0
      %v2975 = vpop.trf.xlu0
      %v2976 = vpop.trf.xlu0
      %v2977 = vpop.trf.xlu0
      %v2978 = vpop.trf.xlu0
      %v2979 = vpop.trf.xlu0
      %v2980 = vpop.trf.xlu0
      %v2981 = vpop.trf.xlu0
      %2982 = vmatpush.bf16.msra.mxu0 %v2941
      %2983 = vmatpush.bf16.msra.mxu0 %v2940
      %2984 = vmatpush.bf16.msra.mxu0 %v2939
      %2985 = vmatpush.bf16.msra.mxu0 %v2938
      %2986 = vmatpush.bf16.msra.mxu0 %v2937
      %2987 = vmatpush.bf16.msra.mxu0 %v2936
      %2988 = vmatpush.bf16.msra.mxu0 %v2935
      %2989 = vmatpush.bf16.msra.mxu0 %v2934
      %2990 = vmatmul.bf16.gmra.mxu0 %v2958
      %v2991 = vpop.f32.mrf.mxu0
      %v2992 = vadd.f32 0.0, %v2991
      %v2993 = vpop.f32.mrf.mxu0
      %v2994 = vadd.f32 0.0, %v2993
      %2995 = vdwg.mxu0
      %2996 = vmatpush.bf16.msra.mxu0 %v2949
      %2997 = vmatpush.bf16.msra.mxu0 %v2948
      %2998 = vmatpush.bf16.msra.mxu0 %v2947
      %2999 = vmatpush.bf16.msra.mxu0 %v2946
      %3000 = vmatpush.bf16.msra.mxu0 %v2945
      %3001 = vmatpush.bf16.msra.mxu0 %v2944
      %3002 = vmatpush.bf16.msra.mxu0 %v2943
      %3003 = vmatpush.bf16.msra.mxu0 %v2942
      %3004 = vmatmul.bf16.gmra.mxu0 %v2974
      %v3005 = vpop.f32.mrf.mxu0
      %v3006 = vadd.f32 %v2992, %v3005
      %v3007 = vpop.f32.mrf.mxu0
      %v3008 = vadd.f32 %v2994, %v3007
      %3009 = vdwg.mxu0
      %3010 = vxpose.xlu0.b32.start [1/16] %v2221, 128
      %3011 = vxpose.xlu0.b32.cont [2/16] 0.0, 128
      %3012 = vxpose.xlu0.b32.cont [3/16] 0.0, 128
      %3013 = vxpose.xlu0.b32.cont [4/16] 0.0, 128
      %3014 = vxpose.xlu0.b32.cont [5/16] 0.0, 128
      %3015 = vxpose.xlu0.b32.cont [6/16] 0.0, 128
      %3016 = vxpose.xlu0.b32.cont [7/16] 0.0, 128
      %3017 = vxpose.xlu0.b32.cont [8/16] 0.0, 128
      %3018 = vxpose.xlu0.b32.cont [9/16] 0.0, 128
      %3019 = vxpose.xlu0.b32.cont [10/16] 0.0, 128
      %3020 = vxpose.xlu0.b32.cont [11/16] 0.0, 128
      %3021 = vxpose.xlu0.b32.cont [12/16] 0.0, 128
      %3022 = vxpose.xlu0.b32.cont [13/16] 0.0, 128
      %3023 = vxpose.xlu0.b32.cont [14/16] 0.0, 128
      %3024 = vxpose.xlu0.b32.cont [15/16] 0.0, 128
      %3025 = vxpose.xlu0.b32.end [16/16] 0.0, 128
      %v3026 = vpop.trf.xlu0
      %v3027 = vpop.trf.xlu0
      %v3028 = vpop.trf.xlu0
      %v3029 = vpop.trf.xlu0
      %v3030 = vpop.trf.xlu0
      %v3031 = vpop.trf.xlu0
      %v3032 = vpop.trf.xlu0
      %v3033 = vpop.trf.xlu0
      %v3034 = vpop.trf.xlu0
      %v3035 = vpop.trf.xlu0
      %v3036 = vpop.trf.xlu0
      %v3037 = vpop.trf.xlu0
      %v3038 = vpop.trf.xlu0
      %v3039 = vpop.trf.xlu0
      %v3040 = vpop.trf.xlu0
      %v3041 = vpop.trf.xlu0
      %v3043 = vsel %vm2728, %v3026, 0
      %v3046 = vsel %vm2728, %v3027, 0
      %vm3048 = vcmask 1043456
      %v3050 = vsel %vm3048, %v485, 0
      %3052 = vmatpush.msra.mxu0 0.0
      %3053 = vmatpush.msra.mxu0 0.0
      %3054 = vmatpush.msra.mxu0 0.0
      %3055 = vmatpush.msra.mxu0 0.0
      %3056 = vmatpush.msra.mxu0 0.0
      %3057 = vmatpush.msra.mxu0 0.0
      %3058 = vmatpush.msra.mxu0 0.0
      %3059 = vmatpush.msra.mxu0 0.0
      %3060 = vmatpush.msra.mxu0 0.0
      %3061 = vmatpush.msra.mxu0 0.0
      %3062 = vmatpush.msra.mxu0 0.0
      %3063 = vmatpush.msra.mxu0 0.0
      %3064 = vmatpush.msra.mxu0 0.0
      %3065 = vmatpush.msra.mxu0 0.0
      %3066 = vmatpush.msra.mxu0 0.0
      %v3067 = vand.u32 %v3050, 4294901760
      %3068 = vmatpush.msra.mxu0 %v3067
      %v3069 = vand.u32 %v3043, 4294901760
      %v3070 = vsub.f32 %v3043, %v3069
      %v3071 = vand.u32 %v3070, 4294901760
      %v3072 = vsub.f32 %v3070, %v3071
      %v3073 = vand.u32 %v3072, 4294901760
      %3074 = vmatmul.f32.gmra.mxu0 %v3073
      %v3075 = vpop.f32.mrf.mxu0
      %v3076 = vadd.f32 0.0, %v3075
      %v3077 = vand.u32 %v3046, 4294901760
      %v3078 = vsub.f32 %v3046, %v3077
      %v3079 = vand.u32 %v3078, 4294901760
      %v3080 = vsub.f32 %v3078, %v3079
      %v3081 = vand.u32 %v3080, 4294901760
      %3082 = vmatmul.f32.gmra.mxu0 %v3081
      %v3083 = vpop.f32.mrf.mxu0
      %v3084 = vadd.f32 0.0, %v3083
      %3085 = vdwg.mxu0
      %3086 = vmatpush.msra.mxu0 0.0
      %3087 = vmatpush.msra.mxu0 0.0
      %3088 = vmatpush.msra.mxu0 0.0
      %3089 = vmatpush.msra.mxu0 0.0
      %3090 = vmatpush.msra.mxu0 0.0
      %3091 = vmatpush.msra.mxu0 0.0
      %3092 = vmatpush.msra.mxu0 0.0
      %3093 = vmatpush.msra.mxu0 0.0
      %3094 = vmatpush.msra.mxu0 0.0
      %3095 = vmatpush.msra.mxu0 0.0
      %3096 = vmatpush.msra.mxu0 0.0
      %3097 = vmatpush.msra.mxu0 0.0
      %3098 = vmatpush.msra.mxu0 0.0
      %3099 = vmatpush.msra.mxu0 0.0
      %3100 = vmatpush.msra.mxu0 0.0
      %v3101 = vand.u32 %v3050, 4294901760
      %v3102 = vsub.f32 %v3050, %v3101
      %v3103 = vand.u32 %v3102, 4294901760
      %v3104 = vsub.f32 %v3102, %v3103
      %v3105 = vand.u32 %v3104, 4294901760
      %3106 = vmatpush.msra.mxu0 %v3105
      %v3107 = vand.u32 %v3043, 4294901760
      %3108 = vmatmul.f32.gmra.mxu0 %v3107
      %v3109 = vpop.f32.mrf.mxu0
      %v3110 = vadd.f32 %v3076, %v3109
      %v3111 = vand.u32 %v3046, 4294901760
      %3112 = vmatmul.f32.gmra.mxu0 %v3111
      %v3113 = vpop.f32.mrf.mxu0
      %v3114 = vadd.f32 %v3084, %v3113
      %3115 = vdwg.mxu0
      %3116 = vmatpush.msra.mxu0 0.0
      %3117 = vmatpush.msra.mxu0 0.0
      %3118 = vmatpush.msra.mxu0 0.0
      %3119 = vmatpush.msra.mxu0 0.0
      %3120 = vmatpush.msra.mxu0 0.0
      %3121 = vmatpush.msra.mxu0 0.0
      %3122 = vmatpush.msra.mxu0 0.0
      %3123 = vmatpush.msra.mxu0 0.0
      %3124 = vmatpush.msra.mxu0 0.0
      %3125 = vmatpush.msra.mxu0 0.0
      %3126 = vmatpush.msra.mxu0 0.0
      %3127 = vmatpush.msra.mxu0 0.0
      %3128 = vmatpush.msra.mxu0 0.0
      %3129 = vmatpush.msra.mxu0 0.0
      %3130 = vmatpush.msra.mxu0 0.0
      %v3131 = vand.u32 %v3050, 4294901760
      %v3132 = vsub.f32 %v3050, %v3131
      %3133 = vmatpush.msra.mxu0 %v3132
      %v3134 = vand.u32 %v3043, 4294901760
      %v3135 = vsub.f32 %v3043, %v3134
      %3136 = vmatmul.f32.gmra.mxu0 %v3135
      %v3137 = vpop.f32.mrf.mxu0
      %v3138 = vadd.f32 %v3110, %v3137
      %v3139 = vand.u32 %v3046, 4294901760
      %v3140 = vsub.f32 %v3046, %v3139
      %3141 = vmatmul.f32.gmra.mxu0 %v3140
      %v3142 = vpop.f32.mrf.mxu0
      %v3143 = vadd.f32 %v3114, %v3142
      %3144 = vdwg.mxu0
      %3145 = vmatpush.msra.mxu0 0.0
      %3146 = vmatpush.msra.mxu0 0.0
      %3147 = vmatpush.msra.mxu0 0.0
      %3148 = vmatpush.msra.mxu0 0.0
      %3149 = vmatpush.msra.mxu0 0.0
      %3150 = vmatpush.msra.mxu0 0.0
      %3151 = vmatpush.msra.mxu0 0.0
      %3152 = vmatpush.msra.mxu0 0.0
      %3153 = vmatpush.msra.mxu0 0.0
      %3154 = vmatpush.msra.mxu0 0.0
      %3155 = vmatpush.msra.mxu0 0.0
      %3156 = vmatpush.msra.mxu0 0.0
      %3157 = vmatpush.msra.mxu0 0.0
      %3158 = vmatpush.msra.mxu0 0.0
      %3159 = vmatpush.msra.mxu0 0.0
      %v3160 = vand.u32 %v3050, 4294901760
      %3161 = vmatpush.msra.mxu0 %v3160
      %v3162 = vand.u32 %v3043, 4294901760
      %v3163 = vsub.f32 %v3043, %v3162
      %v3164 = vand.u32 %v3163, 4294901760
      %3165 = vmatmul.f32.gmra.mxu0 %v3164
      %v3166 = vpop.f32.mrf.mxu0
      %v3167 = vadd.f32 %v3138, %v3166
      %v3168 = vand.u32 %v3046, 4294901760
      %v3169 = vsub.f32 %v3046, %v3168
      %v3170 = vand.u32 %v3169, 4294901760
      %3171 = vmatmul.f32.gmra.mxu0 %v3170
      %v3172 = vpop.f32.mrf.mxu0
      %v3173 = vadd.f32 %v3143, %v3172
      %3174 = vdwg.mxu0
      %3175 = vmatpush.msra.mxu0 0.0
      %3176 = vmatpush.msra.mxu0 0.0
      %3177 = vmatpush.msra.mxu0 0.0
      %3178 = vmatpush.msra.mxu0 0.0
      %3179 = vmatpush.msra.mxu0 0.0
      %3180 = vmatpush.msra.mxu0 0.0
      %3181 = vmatpush.msra.mxu0 0.0
      %3182 = vmatpush.msra.mxu0 0.0
      %3183 = vmatpush.msra.mxu0 0.0
      %3184 = vmatpush.msra.mxu0 0.0
      %3185 = vmatpush.msra.mxu0 0.0
      %3186 = vmatpush.msra.mxu0 0.0
      %3187 = vmatpush.msra.mxu0 0.0
      %3188 = vmatpush.msra.mxu0 0.0
      %3189 = vmatpush.msra.mxu0 0.0
      %v3190 = vand.u32 %v3050, 4294901760
      %v3191 = vsub.f32 %v3050, %v3190
      %v3192 = vand.u32 %v3191, 4294901760
      %3193 = vmatpush.msra.mxu0 %v3192
      %v3194 = vand.u32 %v3043, 4294901760
      %3195 = vmatmul.f32.gmra.mxu0 %v3194
      %v3196 = vpop.f32.mrf.mxu0
      %v3197 = vadd.f32 %v3167, %v3196
      %v3198 = vand.u32 %v3046, 4294901760
      %3199 = vmatmul.f32.gmra.mxu0 %v3198
      %v3200 = vpop.f32.mrf.mxu0
      %v3201 = vadd.f32 %v3173, %v3200
      %3202 = vdwg.mxu0
      %3203 = vmatpush.msra.mxu0 0.0
      %3204 = vmatpush.msra.mxu0 0.0
      %3205 = vmatpush.msra.mxu0 0.0
      %3206 = vmatpush.msra.mxu0 0.0
      %3207 = vmatpush.msra.mxu0 0.0
      %3208 = vmatpush.msra.mxu0 0.0
      %3209 = vmatpush.msra.mxu0 0.0
      %3210 = vmatpush.msra.mxu0 0.0
      %3211 = vmatpush.msra.mxu0 0.0
      %3212 = vmatpush.msra.mxu0 0.0
      %3213 = vmatpush.msra.mxu0 0.0
      %3214 = vmatpush.msra.mxu0 0.0
      %3215 = vmatpush.msra.mxu0 0.0
      %3216 = vmatpush.msra.mxu0 0.0
      %3217 = vmatpush.msra.mxu0 0.0
      %v3218 = vand.u32 %v3050, 4294901760
      %3219 = vmatpush.msra.mxu0 %v3218
      %v3220 = vand.u32 %v3043, 4294901760
      %3221 = vmatmul.f32.gmra.mxu0 %v3220
      %v3222 = vpop.f32.mrf.mxu0
      %v3223 = vadd.f32 %v3197, %v3222
      %v3224 = vand.u32 %v3046, 4294901760
      %3225 = vmatmul.f32.gmra.mxu0 %v3224
      %v3226 = vpop.f32.mrf.mxu0
      %v3227 = vadd.f32 %v3201, %v3226
      %3228 = vdwg.mxu0
      %v3229 = vld [vmem:[#allocation4] sm:$0xff]
      %v3230 = vld [vmem:[#allocation4 + $0x8] sm:$0xff]
      %v3231 = vmul.f32 %v3223, %v3229
      %v3232 = vmul.f32 %v3227, %v3230
      %v3233 = vadd.f32 %v3231, %v3006
      %v3234 = vadd.f32 %v3232, %v3008
      %3235 = vst [vmem:[#allocation4] sm:$0xff] %v3233
      %3236 = vst [vmem:[#allocation4 + $0x8] sm:$0xff] %v3234
      %v3237 = vld [vmem:[%s453] sm:$0xf]
      %v3238 = vld [vmem:[%s453 + $0x4] sm:$0xf]
      %v3239 = vld [vmem:[%s453 + $0x8] sm:$0xf]
      %v3240 = vld [vmem:[%s453 + $0xc] sm:$0xf]
      %v3241 = vld [vmem:[%s453 + $0x10] sm:$0xf]
      %v3242 = vld [vmem:[%s453 + $0x14] sm:$0xf]
      %v3243 = vld [vmem:[%s453 + $0x18] sm:$0xf]
      %v3244 = vld [vmem:[%s453 + $0x1c] sm:$0xf]
      %v3245 = vld [vmem:[%s453 + $0x20] sm:$0xf]
      %v3246 = vld [vmem:[%s453 + $0x24] sm:$0xf]
      %v3247 = vld [vmem:[%s453 + $0x28] sm:$0xf]
      %v3248 = vld [vmem:[%s453 + $0x2c] sm:$0xf]
      %v3249 = vld [vmem:[%s453 + $0x30] sm:$0xf]
      %v3250 = vld [vmem:[%s453 + $0x34] sm:$0xf]
      %v3251 = vld [vmem:[%s453 + $0x38] sm:$0xf]
      %v3252 = vld [vmem:[%s453 + $0x3c] sm:$0xf]
      %v3253 = vld [vmem:[%s453 + $0x40] sm:$0xf]
      %v3254 = vld [vmem:[%s453 + $0x44] sm:$0xf]
      %v3255 = vld [vmem:[%s453 + $0x48] sm:$0xf]
      %v3256 = vld [vmem:[%s453 + $0x4c] sm:$0xf]
      %v3257 = vld [vmem:[%s453 + $0x50] sm:$0xf]
      %v3258 = vld [vmem:[%s453 + $0x54] sm:$0xf]
      %v3259 = vld [vmem:[%s453 + $0x58] sm:$0xf]
      %v3260 = vld [vmem:[%s453 + $0x5c] sm:$0xf]
      %v3261 = vld [vmem:[%s453 + $0x60] sm:$0xf]
      %v3262 = vld [vmem:[%s453 + $0x64] sm:$0xf]
      %v3263 = vld [vmem:[%s453 + $0x68] sm:$0xf]
      %v3264 = vld [vmem:[%s453 + $0x6c] sm:$0xf]
      %v3265 = vld [vmem:[%s453 + $0x70] sm:$0xf]
      %v3266 = vld [vmem:[%s453 + $0x74] sm:$0xf]
      %v3267 = vld [vmem:[%s453 + $0x78] sm:$0xf]
      %v3268 = vld [vmem:[%s453 + $0x7c] sm:$0xf]
      %v3269 = vld [vmem:[#allocation5] sm:$0xf]
      %3271 = vset.pattern.permute.xlu0 0
      %3272 = vperm.xlu0 %3271, %v1179
      %v3273 = vpop.permute.xlu0 %3272
      %3276 = vset.pattern.permute.xlu0 0
      %3277 = vperm.xlu0 %3276, %v1180
      %v3278 = vpop.permute.xlu0 %3277
      %3281 = vset.pattern.permute.xlu0 0
      %3282 = vperm.xlu0 %3281, %v1181
      %v3283 = vpop.permute.xlu0 %3282
      %3286 = vset.pattern.permute.xlu0 0
      %3287 = vperm.xlu0 %3286, %v1182
      %v3288 = vpop.permute.xlu0 %3287
      %3291 = vset.pattern.permute.xlu0 0
      %3292 = vperm.xlu0 %3291, %v1183
      %v3293 = vpop.permute.xlu0 %3292
      %3296 = vset.pattern.permute.xlu0 0
      %3297 = vperm.xlu0 %3296, %v1184
      %v3298 = vpop.permute.xlu0 %3297
      %3301 = vset.pattern.permute.xlu0 0
      %3302 = vperm.xlu0 %3301, %v1185
      %v3303 = vpop.permute.xlu0 %3302
      %3306 = vset.pattern.permute.xlu0 0
      %3307 = vperm.xlu0 %3306, %v1186
      %v3308 = vpop.permute.xlu0 %3307
      %3311 = vset.pattern.permute.xlu0 0
      %3312 = vperm.xlu0 %3311, %v1187
      %v3313 = vpop.permute.xlu0 %3312
      %3316 = vset.pattern.permute.xlu0 0
      %3317 = vperm.xlu0 %3316, %v1188
      %v3318 = vpop.permute.xlu0 %3317
      %3321 = vset.pattern.permute.xlu0 0
      %3322 = vperm.xlu0 %3321, %v1189
      %v3323 = vpop.permute.xlu0 %3322
      %3326 = vset.pattern.permute.xlu0 0
      %3327 = vperm.xlu0 %3326, %v1190
      %v3328 = vpop.permute.xlu0 %3327
      %3331 = vset.pattern.permute.xlu0 0
      %3332 = vperm.xlu0 %3331, %v1191
      %v3333 = vpop.permute.xlu0 %3332
      %3336 = vset.pattern.permute.xlu0 0
      %3337 = vperm.xlu0 %3336, %v1192
      %v3338 = vpop.permute.xlu0 %3337
      %3341 = vset.pattern.permute.xlu0 0
      %3342 = vperm.xlu0 %3341, %v1193
      %v3343 = vpop.permute.xlu0 %3342
      %3346 = vset.pattern.permute.xlu0 0
      %3347 = vperm.xlu0 %3346, %v1194
      %v3348 = vpop.permute.xlu0 %3347
      %3351 = vset.pattern.permute.xlu0 0
      %3352 = vperm.xlu0 %3351, %v1195
      %v3353 = vpop.permute.xlu0 %3352
      %3356 = vset.pattern.permute.xlu0 0
      %3357 = vperm.xlu0 %3356, %v1196
      %v3358 = vpop.permute.xlu0 %3357
      %3361 = vset.pattern.permute.xlu0 0
      %3362 = vperm.xlu0 %3361, %v1197
      %v3363 = vpop.permute.xlu0 %3362
      %3366 = vset.pattern.permute.xlu0 0
      %3367 = vperm.xlu0 %3366, %v1198
      %v3368 = vpop.permute.xlu0 %3367
      %3371 = vset.pattern.permute.xlu0 0
      %3372 = vperm.xlu0 %3371, %v1199
      %v3373 = vpop.permute.xlu0 %3372
      %3376 = vset.pattern.permute.xlu0 0
      %3377 = vperm.xlu0 %3376, %v1200
      %v3378 = vpop.permute.xlu0 %3377
      %3381 = vset.pattern.permute.xlu0 0
      %3382 = vperm.xlu0 %3381, %v1201
      %v3383 = vpop.permute.xlu0 %3382
      %3386 = vset.pattern.permute.xlu0 0
      %3387 = vperm.xlu0 %3386, %v1202
      %v3388 = vpop.permute.xlu0 %3387
      %3391 = vset.pattern.permute.xlu0 0
      %3392 = vperm.xlu0 %3391, %v1203
      %v3393 = vpop.permute.xlu0 %3392
      %3396 = vset.pattern.permute.xlu0 0
      %3397 = vperm.xlu0 %3396, %v1204
      %v3398 = vpop.permute.xlu0 %3397
      %3401 = vset.pattern.permute.xlu0 0
      %3402 = vperm.xlu0 %3401, %v1205
      %v3403 = vpop.permute.xlu0 %3402
      %3406 = vset.pattern.permute.xlu0 0
      %3407 = vperm.xlu0 %3406, %v1206
      %v3408 = vpop.permute.xlu0 %3407
      %3411 = vset.pattern.permute.xlu0 0
      %3412 = vperm.xlu0 %3411, %v1207
      %v3413 = vpop.permute.xlu0 %3412
      %3416 = vset.pattern.permute.xlu0 0
      %3417 = vperm.xlu0 %3416, %v1208
      %v3418 = vpop.permute.xlu0 %3417
      %3421 = vset.pattern.permute.xlu0 0
      %3422 = vperm.xlu0 %3421, %v1209
      %v3423 = vpop.permute.xlu0 %3422
      %3426 = vset.pattern.permute.xlu0 0
      %3427 = vperm.xlu0 %3426, %v1210
      %v3428 = vpop.permute.xlu0 %3427
      %v3430 = vsel %vm651, %v3273, -1.2676506e+30
      %v3431 = vsel %vm652, %v3278, -1.2676506e+30
      %v3432 = vsel %vm653, %v3283, -1.2676506e+30
      %v3433 = vsel %vm654, %v3288, -1.2676506e+30
      %v3434 = vsel %vm655, %v3293, -1.2676506e+30
      %v3435 = vsel %vm656, %v3298, -1.2676506e+30
      %v3436 = vsel %vm657, %v3303, -1.2676506e+30
      %v3437 = vsel %vm658, %v3308, -1.2676506e+30
      %v3438 = vsel %vm659, %v3313, -1.2676506e+30
      %v3439 = vsel %vm660, %v3318, -1.2676506e+30
      %v3440 = vsel %vm661, %v3323, -1.2676506e+30
      %v3441 = vsel %vm662, %v3328, -1.2676506e+30
      %v3442 = vsel %vm663, %v3333, -1.2676506e+30
      %v3443 = vsel %vm664, %v3338, -1.2676506e+30
      %v3444 = vsel %vm665, %v3343, -1.2676506e+30
      %v3445 = vsel %vm666, %v3348, -1.2676506e+30
      %v3446 = vsel %vm667, %v3353, -1.2676506e+30
      %v3447 = vsel %vm668, %v3358, -1.2676506e+30
      %v3448 = vsel %vm669, %v3363, -1.2676506e+30
      %v3449 = vsel %vm670, %v3368, -1.2676506e+30
      %v3450 = vsel %vm671, %v3373, -1.2676506e+30
      %v3451 = vsel %vm672, %v3378, -1.2676506e+30
      %v3452 = vsel %vm673, %v3383, -1.2676506e+30
      %v3453 = vsel %vm674, %v3388, -1.2676506e+30
      %v3454 = vsel %vm675, %v3393, -1.2676506e+30
      %v3455 = vsel %vm676, %v3398, -1.2676506e+30
      %v3456 = vsel %vm677, %v3403, -1.2676506e+30
      %v3457 = vsel %vm678, %v3408, -1.2676506e+30
      %v3458 = vsel %vm679, %v3413, -1.2676506e+30
      %v3459 = vsel %vm680, %v3418, -1.2676506e+30
      %v3460 = vsel %vm681, %v3423, -1.2676506e+30
      %v3461 = vsel %vm682, %v3428, -1.2676506e+30
      %v3462 = vsel %vm1438, %v3430, -inf
      %v3463 = vsel %vm1438, %v3431, -inf
      %v3464 = vsel %vm1438, %v3432, -inf
      %v3465 = vsel %vm1438, %v3433, -inf
      %v3466 = vsel %vm1438, %v3434, -inf
      %v3467 = vmax.f32 %v3462, %v3466
      %v3468 = vsel %vm1438, %v3435, -inf
      %v3469 = vmax.f32 %v3463, %v3468
      %v3470 = vsel %vm1438, %v3436, -inf
      %v3471 = vmax.f32 %v3464, %v3470
      %v3472 = vsel %vm1438, %v3437, -inf
      %v3473 = vmax.f32 %v3465, %v3472
      %v3474 = vsel %vm1438, %v3438, -inf
      %v3475 = vmax.f32 %v3467, %v3474
      %v3476 = vsel %vm1438, %v3439, -inf
      %v3477 = vmax.f32 %v3469, %v3476
      %v3478 = vsel %vm1438, %v3440, -inf
      %v3479 = vmax.f32 %v3471, %v3478
      %v3480 = vsel %vm1438, %v3441, -inf
      %v3481 = vmax.f32 %v3473, %v3480
      %v3482 = vsel %vm1438, %v3442, -inf
      %v3483 = vmax.f32 %v3475, %v3482
      %v3484 = vsel %vm1438, %v3443, -inf
      %v3485 = vmax.f32 %v3477, %v3484
      %v3486 = vsel %vm1438, %v3444, -inf
      %v3487 = vmax.f32 %v3479, %v3486
      %v3488 = vsel %vm1438, %v3445, -inf
      %v3489 = vmax.f32 %v3481, %v3488
      %v3490 = vsel %vm1438, %v3446, -inf
      %v3491 = vmax.f32 %v3483, %v3490
      %v3492 = vsel %vm1438, %v3447, -inf
      %v3493 = vmax.f32 %v3485, %v3492
      %v3494 = vsel %vm1438, %v3448, -inf
      %v3495 = vmax.f32 %v3487, %v3494
      %v3496 = vsel %vm1438, %v3449, -inf
      %v3497 = vmax.f32 %v3489, %v3496
      %v3498 = vsel %vm1438, %v3450, -inf
      %v3499 = vmax.f32 %v3491, %v3498
      %v3500 = vsel %vm1438, %v3451, -inf
      %v3501 = vmax.f32 %v3493, %v3500
      %v3502 = vsel %vm1438, %v3452, -inf
      %v3503 = vmax.f32 %v3495, %v3502
      %v3504 = vsel %vm1438, %v3453, -inf
      %v3505 = vmax.f32 %v3497, %v3504
      %v3506 = vsel %vm1438, %v3454, -inf
      %v3507 = vmax.f32 %v3499, %v3506
      %v3508 = vsel %vm1438, %v3455, -inf
      %v3509 = vmax.f32 %v3501, %v3508
      %v3510 = vsel %vm1438, %v3456, -inf
      %v3511 = vmax.f32 %v3503, %v3510
      %v3512 = vsel %vm1438, %v3457, -inf
      %v3513 = vmax.f32 %v3505, %v3512
      %v3514 = vsel %vm1438, %v3458, -inf
      %v3515 = vmax.f32 %v3507, %v3514
      %v3516 = vsel %vm1438, %v3459, -inf
      %v3517 = vmax.f32 %v3509, %v3516
      %v3518 = vsel %vm1438, %v3460, -inf
      %v3519 = vmax.f32 %v3511, %v3518
      %v3520 = vsel %vm1438, %v3461, -inf
      %v3521 = vmax.f32 %v3513, %v3520
      %v3522 = vmax.f32 %v3515, %v3517
      %v3523 = vmax.f32 %v3519, %v3521
      %v3524 = vmax.f32 %v3522, %v3523
      %v3525 = vrot.slane %v3524, 4
      %v3526 = vmax.f32 %v3524, %v3525
      %v3527 = vrot.slane %v3526, 2
      %v3528 = vmax.f32 %v3526, %v3527
      %v3529 = vrot.slane %v3528, 1
      %v3530 = vmax.f32 %v3528, %v3529
      %v3531 = vmax.f32 %v3269, %v3530
      %v3532 = vsel %vm1511, %v3531, %v3269
      %3533 = vset.pattern.permute.xlu0 1
      %3534 = vperm.xlu0 %3533, %v1179
      %v3535 = vpop.permute.xlu0 %3534
      %3537 = vset.pattern.permute.xlu0 1
      %3538 = vperm.xlu0 %3537, %v1180
      %v3539 = vpop.permute.xlu0 %3538
      %3541 = vset.pattern.permute.xlu0 1
      %3542 = vperm.xlu0 %3541, %v1181
      %v3543 = vpop.permute.xlu0 %3542
      %3545 = vset.pattern.permute.xlu0 1
      %3546 = vperm.xlu0 %3545, %v1182
      %v3547 = vpop.permute.xlu0 %3546
      %3549 = vset.pattern.permute.xlu0 1
      %3550 = vperm.xlu0 %3549, %v1183
      %v3551 = vpop.permute.xlu0 %3550
      %3553 = vset.pattern.permute.xlu0 1
      %3554 = vperm.xlu0 %3553, %v1184
      %v3555 = vpop.permute.xlu0 %3554
      %3557 = vset.pattern.permute.xlu0 1
      %3558 = vperm.xlu0 %3557, %v1185
      %v3559 = vpop.permute.xlu0 %3558
      %3561 = vset.pattern.permute.xlu0 1
      %3562 = vperm.xlu0 %3561, %v1186
      %v3563 = vpop.permute.xlu0 %3562
      %3565 = vset.pattern.permute.xlu0 1
      %3566 = vperm.xlu0 %3565, %v1187
      %v3567 = vpop.permute.xlu0 %3566
      %3569 = vset.pattern.permute.xlu0 1
      %3570 = vperm.xlu0 %3569, %v1188
      %v3571 = vpop.permute.xlu0 %3570
      %3573 = vset.pattern.permute.xlu0 1
      %3574 = vperm.xlu0 %3573, %v1189
      %v3575 = vpop.permute.xlu0 %3574
      %3577 = vset.pattern.permute.xlu0 1
      %3578 = vperm.xlu0 %3577, %v1190
      %v3579 = vpop.permute.xlu0 %3578
      %3581 = vset.pattern.permute.xlu0 1
      %3582 = vperm.xlu0 %3581, %v1191
      %v3583 = vpop.permute.xlu0 %3582
      %3585 = vset.pattern.permute.xlu0 1
      %3586 = vperm.xlu0 %3585, %v1192
      %v3587 = vpop.permute.xlu0 %3586
      %3589 = vset.pattern.permute.xlu0 1
      %3590 = vperm.xlu0 %3589, %v1193
      %v3591 = vpop.permute.xlu0 %3590
      %3593 = vset.pattern.permute.xlu0 1
      %3594 = vperm.xlu0 %3593, %v1194
      %v3595 = vpop.permute.xlu0 %3594
      %3597 = vset.pattern.permute.xlu0 1
      %3598 = vperm.xlu0 %3597, %v1195
      %v3599 = vpop.permute.xlu0 %3598
      %3601 = vset.pattern.permute.xlu0 1
      %3602 = vperm.xlu0 %3601, %v1196
      %v3603 = vpop.permute.xlu0 %3602
      %3605 = vset.pattern.permute.xlu0 1
      %3606 = vperm.xlu0 %3605, %v1197
      %v3607 = vpop.permute.xlu0 %3606
      %3609 = vset.pattern.permute.xlu0 1
      %3610 = vperm.xlu0 %3609, %v1198
      %v3611 = vpop.permute.xlu0 %3610
      %3613 = vset.pattern.permute.xlu0 1
      %3614 = vperm.xlu0 %3613, %v1199
      %v3615 = vpop.permute.xlu0 %3614
      %3617 = vset.pattern.permute.xlu0 1
      %3618 = vperm.xlu0 %3617, %v1200
      %v3619 = vpop.permute.xlu0 %3618
      %3621 = vset.pattern.permute.xlu0 1
      %3622 = vperm.xlu0 %3621, %v1201
      %v3623 = vpop.permute.xlu0 %3622
      %3625 = vset.pattern.permute.xlu0 1
      %3626 = vperm.xlu0 %3625, %v1202
      %v3627 = vpop.permute.xlu0 %3626
      %3629 = vset.pattern.permute.xlu0 1
      %3630 = vperm.xlu0 %3629, %v1203
      %v3631 = vpop.permute.xlu0 %3630
      %3633 = vset.pattern.permute.xlu0 1
      %3634 = vperm.xlu0 %3633, %v1204
      %v3635 = vpop.permute.xlu0 %3634
      %3637 = vset.pattern.permute.xlu0 1
      %3638 = vperm.xlu0 %3637, %v1205
      %v3639 = vpop.permute.xlu0 %3638
      %3641 = vset.pattern.permute.xlu0 1
      %3642 = vperm.xlu0 %3641, %v1206
      %v3643 = vpop.permute.xlu0 %3642
      %3645 = vset.pattern.permute.xlu0 1
      %3646 = vperm.xlu0 %3645, %v1207
      %v3647 = vpop.permute.xlu0 %3646
      %3649 = vset.pattern.permute.xlu0 1
      %3650 = vperm.xlu0 %3649, %v1208
      %v3651 = vpop.permute.xlu0 %3650
      %3653 = vset.pattern.permute.xlu0 1
      %3654 = vperm.xlu0 %3653, %v1209
      %v3655 = vpop.permute.xlu0 %3654
      %3657 = vset.pattern.permute.xlu0 1
      %3658 = vperm.xlu0 %3657, %v1210
      %v3659 = vpop.permute.xlu0 %3658
      %v3661 = vsel %vm651, %v3535, -1.2676506e+30
      %v3662 = vsel %vm652, %v3539, -1.2676506e+30
      %v3663 = vsel %vm653, %v3543, -1.2676506e+30
      %v3664 = vsel %vm654, %v3547, -1.2676506e+30
      %v3665 = vsel %vm655, %v3551, -1.2676506e+30
      %v3666 = vsel %vm656, %v3555, -1.2676506e+30
      %v3667 = vsel %vm657, %v3559, -1.2676506e+30
      %v3668 = vsel %vm658, %v3563, -1.2676506e+30
      %v3669 = vsel %vm659, %v3567, -1.2676506e+30
      %v3670 = vsel %vm660, %v3571, -1.2676506e+30
      %v3671 = vsel %vm661, %v3575, -1.2676506e+30
      %v3672 = vsel %vm662, %v3579, -1.2676506e+30
      %v3673 = vsel %vm663, %v3583, -1.2676506e+30
      %v3674 = vsel %vm664, %v3587, -1.2676506e+30
      %v3675 = vsel %vm665, %v3591, -1.2676506e+30
      %v3676 = vsel %vm666, %v3595, -1.2676506e+30
      %v3677 = vsel %vm667, %v3599, -1.2676506e+30
      %v3678 = vsel %vm668, %v3603, -1.2676506e+30
      %v3679 = vsel %vm669, %v3607, -1.2676506e+30
      %v3680 = vsel %vm670, %v3611, -1.2676506e+30
      %v3681 = vsel %vm671, %v3615, -1.2676506e+30
      %v3682 = vsel %vm672, %v3619, -1.2676506e+30
      %v3683 = vsel %vm673, %v3623, -1.2676506e+30
      %v3684 = vsel %vm674, %v3627, -1.2676506e+30
      %v3685 = vsel %vm675, %v3631, -1.2676506e+30
      %v3686 = vsel %vm676, %v3635, -1.2676506e+30
      %v3687 = vsel %vm677, %v3639, -1.2676506e+30
      %v3688 = vsel %vm678, %v3643, -1.2676506e+30
      %v3689 = vsel %vm679, %v3647, -1.2676506e+30
      %v3690 = vsel %vm680, %v3651, -1.2676506e+30
      %v3691 = vsel %vm681, %v3655, -1.2676506e+30
      %v3692 = vsel %vm682, %v3659, -1.2676506e+30
      %v3693 = vsel %vm1438, %v3661, -inf
      %v3694 = vsel %vm1438, %v3662, -inf
      %v3695 = vsel %vm1438, %v3663, -inf
      %v3696 = vsel %vm1438, %v3664, -inf
      %v3697 = vsel %vm1438, %v3665, -inf
      %v3698 = vmax.f32 %v3693, %v3697
      %v3699 = vsel %vm1438, %v3666, -inf
      %v3700 = vmax.f32 %v3694, %v3699
      %v3701 = vsel %vm1438, %v3667, -inf
      %v3702 = vmax.f32 %v3695, %v3701
      %v3703 = vsel %vm1438, %v3668, -inf
      %v3704 = vmax.f32 %v3696, %v3703
      %v3705 = vsel %vm1438, %v3669, -inf
      %v3706 = vmax.f32 %v3698, %v3705
      %v3707 = vsel %vm1438, %v3670, -inf
      %v3708 = vmax.f32 %v3700, %v3707
      %v3709 = vsel %vm1438, %v3671, -inf
      %v3710 = vmax.f32 %v3702, %v3709
      %v3711 = vsel %vm1438, %v3672, -inf
      %v3712 = vmax.f32 %v3704, %v3711
      %v3713 = vsel %vm1438, %v3673, -inf
      %v3714 = vmax.f32 %v3706, %v3713
      %v3715 = vsel %vm1438, %v3674, -inf
      %v3716 = vmax.f32 %v3708, %v3715
      %v3717 = vsel %vm1438, %v3675, -inf
      %v3718 = vmax.f32 %v3710, %v3717
      %v3719 = vsel %vm1438, %v3676, -inf
      %v3720 = vmax.f32 %v3712, %v3719
      %v3721 = vsel %vm1438, %v3677, -inf
      %v3722 = vmax.f32 %v3714, %v3721
      %v3723 = vsel %vm1438, %v3678, -inf
      %v3724 = vmax.f32 %v3716, %v3723
      %v3725 = vsel %vm1438, %v3679, -inf
      %v3726 = vmax.f32 %v3718, %v3725
      %v3727 = vsel %vm1438, %v3680, -inf
      %v3728 = vmax.f32 %v3720, %v3727
      %v3729 = vsel %vm1438, %v3681, -inf
      %v3730 = vmax.f32 %v3722, %v3729
      %v3731 = vsel %vm1438, %v3682, -inf
      %v3732 = vmax.f32 %v3724, %v3731
      %v3733 = vsel %vm1438, %v3683, -inf
      %v3734 = vmax.f32 %v3726, %v3733
      %v3735 = vsel %vm1438, %v3684, -inf
      %v3736 = vmax.f32 %v3728, %v3735
      %v3737 = vsel %vm1438, %v3685, -inf
      %v3738 = vmax.f32 %v3730, %v3737
      %v3739 = vsel %vm1438, %v3686, -inf
      %v3740 = vmax.f32 %v3732, %v3739
      %v3741 = vsel %vm1438, %v3687, -inf
      %v3742 = vmax.f32 %v3734, %v3741
      %v3743 = vsel %vm1438, %v3688, -inf
      %v3744 = vmax.f32 %v3736, %v3743
      %v3745 = vsel %vm1438, %v3689, -inf
      %v3746 = vmax.f32 %v3738, %v3745
      %v3747 = vsel %vm1438, %v3690, -inf
      %v3748 = vmax.f32 %v3740, %v3747
      %v3749 = vsel %vm1438, %v3691, -inf
      %v3750 = vmax.f32 %v3742, %v3749
      %v3751 = vsel %vm1438, %v3692, -inf
      %v3752 = vmax.f32 %v3744, %v3751
      %v3753 = vmax.f32 %v3746, %v3748
      %v3754 = vmax.f32 %v3750, %v3752
      %v3755 = vmax.f32 %v3753, %v3754
      %v3756 = vrot.slane %v3755, 4
      %v3757 = vmax.f32 %v3755, %v3756
      %v3758 = vrot.slane %v3757, 2
      %v3759 = vmax.f32 %v3757, %v3758
      %v3760 = vrot.slane %v3759, 1
      %v3761 = vmax.f32 %v3759, %v3760
      %v3762 = vmax.f32 %v3532, %v3761
      %v3763 = vsel %vm1745, %v3762, %v3532
      %3764 = vset.pattern.permute.xlu0 2
      %3765 = vperm.xlu0 %3764, %v1179
      %v3766 = vpop.permute.xlu0 %3765
      %3768 = vset.pattern.permute.xlu0 2
      %3769 = vperm.xlu0 %3768, %v1180
      %v3770 = vpop.permute.xlu0 %3769
      %3772 = vset.pattern.permute.xlu0 2
      %3773 = vperm.xlu0 %3772, %v1181
      %v3774 = vpop.permute.xlu0 %3773
      %3776 = vset.pattern.permute.xlu0 2
      %3777 = vperm.xlu0 %3776, %v1182
      %v3778 = vpop.permute.xlu0 %3777
      %3780 = vset.pattern.permute.xlu0 2
      %3781 = vperm.xlu0 %3780, %v1183
      %v3782 = vpop.permute.xlu0 %3781
      %3784 = vset.pattern.permute.xlu0 2
      %3785 = vperm.xlu0 %3784, %v1184
      %v3786 = vpop.permute.xlu0 %3785
      %3788 = vset.pattern.permute.xlu0 2
      %3789 = vperm.xlu0 %3788, %v1185
      %v3790 = vpop.permute.xlu0 %3789
      %3792 = vset.pattern.permute.xlu0 2
      %3793 = vperm.xlu0 %3792, %v1186
      %v3794 = vpop.permute.xlu0 %3793
      %3796 = vset.pattern.permute.xlu0 2
      %3797 = vperm.xlu0 %3796, %v1187
      %v3798 = vpop.permute.xlu0 %3797
      %3800 = vset.pattern.permute.xlu0 2
      %3801 = vperm.xlu0 %3800, %v1188
      %v3802 = vpop.permute.xlu0 %3801
      %3804 = vset.pattern.permute.xlu0 2
      %3805 = vperm.xlu0 %3804, %v1189
      %v3806 = vpop.permute.xlu0 %3805
      %3808 = vset.pattern.permute.xlu0 2
      %3809 = vperm.xlu0 %3808, %v1190
      %v3810 = vpop.permute.xlu0 %3809
      %3812 = vset.pattern.permute.xlu0 2
      %3813 = vperm.xlu0 %3812, %v1191
      %v3814 = vpop.permute.xlu0 %3813
      %3816 = vset.pattern.permute.xlu0 2
      %3817 = vperm.xlu0 %3816, %v1192
      %v3818 = vpop.permute.xlu0 %3817
      %3820 = vset.pattern.permute.xlu0 2
      %3821 = vperm.xlu0 %3820, %v1193
      %v3822 = vpop.permute.xlu0 %3821
      %3824 = vset.pattern.permute.xlu0 2
      %3825 = vperm.xlu0 %3824, %v1194
      %v3826 = vpop.permute.xlu0 %3825
      %3828 = vset.pattern.permute.xlu0 2
      %3829 = vperm.xlu0 %3828, %v1195
      %v3830 = vpop.permute.xlu0 %3829
      %3832 = vset.pattern.permute.xlu0 2
      %3833 = vperm.xlu0 %3832, %v1196
      %v3834 = vpop.permute.xlu0 %3833
      %3836 = vset.pattern.permute.xlu0 2
      %3837 = vperm.xlu0 %3836, %v1197
      %v3838 = vpop.permute.xlu0 %3837
      %3840 = vset.pattern.permute.xlu0 2
      %3841 = vperm.xlu0 %3840, %v1198
      %v3842 = vpop.permute.xlu0 %3841
      %3844 = vset.pattern.permute.xlu0 2
      %3845 = vperm.xlu0 %3844, %v1199
      %v3846 = vpop.permute.xlu0 %3845
      %3848 = vset.pattern.permute.xlu0 2
      %3849 = vperm.xlu0 %3848, %v1200
      %v3850 = vpop.permute.xlu0 %3849
      %3852 = vset.pattern.permute.xlu0 2
      %3853 = vperm.xlu0 %3852, %v1201
      %v3854 = vpop.permute.xlu0 %3853
      %3856 = vset.pattern.permute.xlu0 2
      %3857 = vperm.xlu0 %3856, %v1202
      %v3858 = vpop.permute.xlu0 %3857
      %3860 = vset.pattern.permute.xlu0 2
      %3861 = vperm.xlu0 %3860, %v1203
      %v3862 = vpop.permute.xlu0 %3861
      %3864 = vset.pattern.permute.xlu0 2
      %3865 = vperm.xlu0 %3864, %v1204
      %v3866 = vpop.permute.xlu0 %3865
      %3868 = vset.pattern.permute.xlu0 2
      %3869 = vperm.xlu0 %3868, %v1205
      %v3870 = vpop.permute.xlu0 %3869
      %3872 = vset.pattern.permute.xlu0 2
      %3873 = vperm.xlu0 %3872, %v1206
      %v3874 = vpop.permute.xlu0 %3873
      %3876 = vset.pattern.permute.xlu0 2
      %3877 = vperm.xlu0 %3876, %v1207
      %v3878 = vpop.permute.xlu0 %3877
      %3880 = vset.pattern.permute.xlu0 2
      %3881 = vperm.xlu0 %3880, %v1208
      %v3882 = vpop.permute.xlu0 %3881
      %3884 = vset.pattern.permute.xlu0 2
      %3885 = vperm.xlu0 %3884, %v1209
      %v3886 = vpop.permute.xlu0 %3885
      %3888 = vset.pattern.permute.xlu0 2
      %3889 = vperm.xlu0 %3888, %v1210
      %v3890 = vpop.permute.xlu0 %3889
      %v3892 = vsel %vm651, %v3766, -1.2676506e+30
      %v3893 = vsel %vm652, %v3770, -1.2676506e+30
      %v3894 = vsel %vm653, %v3774, -1.2676506e+30
      %v3895 = vsel %vm654, %v3778, -1.2676506e+30
      %v3896 = vsel %vm655, %v3782, -1.2676506e+30
      %v3897 = vsel %vm656, %v3786, -1.2676506e+30
      %v3898 = vsel %vm657, %v3790, -1.2676506e+30
      %v3899 = vsel %vm658, %v3794, -1.2676506e+30
      %v3900 = vsel %vm659, %v3798, -1.2676506e+30
      %v3901 = vsel %vm660, %v3802, -1.2676506e+30
      %v3902 = vsel %vm661, %v3806, -1.2676506e+30
      %v3903 = vsel %vm662, %v3810, -1.2676506e+30
      %v3904 = vsel %vm663, %v3814, -1.2676506e+30
      %v3905 = vsel %vm664, %v3818, -1.2676506e+30
      %v3906 = vsel %vm665, %v3822, -1.2676506e+30
      %v3907 = vsel %vm666, %v3826, -1.2676506e+30
      %v3908 = vsel %vm667, %v3830, -1.2676506e+30
      %v3909 = vsel %vm668, %v3834, -1.2676506e+30
      %v3910 = vsel %vm669, %v3838, -1.2676506e+30
      %v3911 = vsel %vm670, %v3842, -1.2676506e+30
      %v3912 = vsel %vm671, %v3846, -1.2676506e+30
      %v3913 = vsel %vm672, %v3850, -1.2676506e+30
      %v3914 = vsel %vm673, %v3854, -1.2676506e+30
      %v3915 = vsel %vm674, %v3858, -1.2676506e+30
      %v3916 = vsel %vm675, %v3862, -1.2676506e+30
      %v3917 = vsel %vm676, %v3866, -1.2676506e+30
      %v3918 = vsel %vm677, %v3870, -1.2676506e+30
      %v3919 = vsel %vm678, %v3874, -1.2676506e+30
      %v3920 = vsel %vm679, %v3878, -1.2676506e+30
      %v3921 = vsel %vm680, %v3882, -1.2676506e+30
      %v3922 = vsel %vm681, %v3886, -1.2676506e+30
      %v3923 = vsel %vm682, %v3890, -1.2676506e+30
      %v3924 = vsel %vm1438, %v3892, -inf
      %v3925 = vsel %vm1438, %v3893, -inf
      %v3926 = vsel %vm1438, %v3894, -inf
      %v3927 = vsel %vm1438, %v3895, -inf
      %v3928 = vsel %vm1438, %v3896, -inf
      %v3929 = vmax.f32 %v3924, %v3928
      %v3930 = vsel %vm1438, %v3897, -inf
      %v3931 = vmax.f32 %v3925, %v3930
      %v3932 = vsel %vm1438, %v3898, -inf
      %v3933 = vmax.f32 %v3926, %v3932
      %v3934 = vsel %vm1438, %v3899, -inf
      %v3935 = vmax.f32 %v3927, %v3934
      %v3936 = vsel %vm1438, %v3900, -inf
      %v3937 = vmax.f32 %v3929, %v3936
      %v3938 = vsel %vm1438, %v3901, -inf
      %v3939 = vmax.f32 %v3931, %v3938
      %v3940 = vsel %vm1438, %v3902, -inf
      %v3941 = vmax.f32 %v3933, %v3940
      %v3942 = vsel %vm1438, %v3903, -inf
      %v3943 = vmax.f32 %v3935, %v3942
      %v3944 = vsel %vm1438, %v3904, -inf
      %v3945 = vmax.f32 %v3937, %v3944
      %v3946 = vsel %vm1438, %v3905, -inf
      %v3947 = vmax.f32 %v3939, %v3946
      %v3948 = vsel %vm1438, %v3906, -inf
      %v3949 = vmax.f32 %v3941, %v3948
      %v3950 = vsel %vm1438, %v3907, -inf
      %v3951 = vmax.f32 %v3943, %v3950
      %v3952 = vsel %vm1438, %v3908, -inf
      %v3953 = vmax.f32 %v3945, %v3952
      %v3954 = vsel %vm1438, %v3909, -inf
      %v3955 = vmax.f32 %v3947, %v3954
      %v3956 = vsel %vm1438, %v3910, -inf
      %v3957 = vmax.f32 %v3949, %v3956
      %v3958 = vsel %vm1438, %v3911, -inf
      %v3959 = vmax.f32 %v3951, %v3958
      %v3960 = vsel %vm1438, %v3912, -inf
      %v3961 = vmax.f32 %v3953, %v3960
      %v3962 = vsel %vm1438, %v3913, -inf
      %v3963 = vmax.f32 %v3955, %v3962
      %v3964 = vsel %vm1438, %v3914, -inf
      %v3965 = vmax.f32 %v3957, %v3964
      %v3966 = vsel %vm1438, %v3915, -inf
      %v3967 = vmax.f32 %v3959, %v3966
      %v3968 = vsel %vm1438, %v3916, -inf
      %v3969 = vmax.f32 %v3961, %v3968
      %v3970 = vsel %vm1438, %v3917, -inf
      %v3971 = vmax.f32 %v3963, %v3970
      %v3972 = vsel %vm1438, %v3918, -inf
      %v3973 = vmax.f32 %v3965, %v3972
      %v3974 = vsel %vm1438, %v3919, -inf
      %v3975 = vmax.f32 %v3967, %v3974
      %v3976 = vsel %vm1438, %v3920, -inf
      %v3977 = vmax.f32 %v3969, %v3976
      %v3978 = vsel %vm1438, %v3921, -inf
      %v3979 = vmax.f32 %v3971, %v3978
      %v3980 = vsel %vm1438, %v3922, -inf
      %v3981 = vmax.f32 %v3973, %v3980
      %v3982 = vsel %vm1438, %v3923, -inf
      %v3983 = vmax.f32 %v3975, %v3982
      %v3984 = vmax.f32 %v3977, %v3979
      %v3985 = vmax.f32 %v3981, %v3983
      %v3986 = vmax.f32 %v3984, %v3985
      %v3987 = vrot.slane %v3986, 4
      %v3988 = vmax.f32 %v3986, %v3987
      %v3989 = vrot.slane %v3988, 2
      %v3990 = vmax.f32 %v3988, %v3989
      %v3991 = vrot.slane %v3990, 1
      %v3992 = vmax.f32 %v3990, %v3991
      %v3993 = vmax.f32 %v3763, %v3992
      %v3994 = vsel %vm1979, %v3993, %v3763
      %3995 = vset.pattern.permute.xlu0 3
      %3996 = vperm.xlu0 %3995, %v1179
      %v3997 = vpop.permute.xlu0 %3996
      %3999 = vset.pattern.permute.xlu0 3
      %4000 = vperm.xlu0 %3999, %v1180
      %v4001 = vpop.permute.xlu0 %4000
      %4003 = vset.pattern.permute.xlu0 3
      %4004 = vperm.xlu0 %4003, %v1181
      %v4005 = vpop.permute.xlu0 %4004
      %4007 = vset.pattern.permute.xlu0 3
      %4008 = vperm.xlu0 %4007, %v1182
      %v4009 = vpop.permute.xlu0 %4008
      %4011 = vset.pattern.permute.xlu0 3
      %4012 = vperm.xlu0 %4011, %v1183
      %v4013 = vpop.permute.xlu0 %4012
      %4015 = vset.pattern.permute.xlu0 3
      %4016 = vperm.xlu0 %4015, %v1184
      %v4017 = vpop.permute.xlu0 %4016
      %4019 = vset.pattern.permute.xlu0 3
      %4020 = vperm.xlu0 %4019, %v1185
      %v4021 = vpop.permute.xlu0 %4020
      %4023 = vset.pattern.permute.xlu0 3
      %4024 = vperm.xlu0 %4023, %v1186
      %v4025 = vpop.permute.xlu0 %4024
      %4027 = vset.pattern.permute.xlu0 3
      %4028 = vperm.xlu0 %4027, %v1187
      %v4029 = vpop.permute.xlu0 %4028
      %4031 = vset.pattern.permute.xlu0 3
      %4032 = vperm.xlu0 %4031, %v1188
      %v4033 = vpop.permute.xlu0 %4032
      %4035 = vset.pattern.permute.xlu0 3
      %4036 = vperm.xlu0 %4035, %v1189
      %v4037 = vpop.permute.xlu0 %4036
      %4039 = vset.pattern.permute.xlu0 3
      %4040 = vperm.xlu0 %4039, %v1190
      %v4041 = vpop.permute.xlu0 %4040
      %4043 = vset.pattern.permute.xlu0 3
      %4044 = vperm.xlu0 %4043, %v1191
      %v4045 = vpop.permute.xlu0 %4044
      %4047 = vset.pattern.permute.xlu0 3
      %4048 = vperm.xlu0 %4047, %v1192
      %v4049 = vpop.permute.xlu0 %4048
      %4051 = vset.pattern.permute.xlu0 3
      %4052 = vperm.xlu0 %4051, %v1193
      %v4053 = vpop.permute.xlu0 %4052
      %4055 = vset.pattern.permute.xlu0 3
      %4056 = vperm.xlu0 %4055, %v1194
      %v4057 = vpop.permute.xlu0 %4056
      %4059 = vset.pattern.permute.xlu0 3
      %4060 = vperm.xlu0 %4059, %v1195
      %v4061 = vpop.permute.xlu0 %4060
      %4063 = vset.pattern.permute.xlu0 3
      %4064 = vperm.xlu0 %4063, %v1196
      %v4065 = vpop.permute.xlu0 %4064
      %4067 = vset.pattern.permute.xlu0 3
      %4068 = vperm.xlu0 %4067, %v1197
      %v4069 = vpop.permute.xlu0 %4068
      %4071 = vset.pattern.permute.xlu0 3
      %4072 = vperm.xlu0 %4071, %v1198
      %v4073 = vpop.permute.xlu0 %4072
      %4075 = vset.pattern.permute.xlu0 3
      %4076 = vperm.xlu0 %4075, %v1199
      %v4077 = vpop.permute.xlu0 %4076
      %4079 = vset.pattern.permute.xlu0 3
      %4080 = vperm.xlu0 %4079, %v1200
      %v4081 = vpop.permute.xlu0 %4080
      %4083 = vset.pattern.permute.xlu0 3
      %4084 = vperm.xlu0 %4083, %v1201
      %v4085 = vpop.permute.xlu0 %4084
      %4087 = vset.pattern.permute.xlu0 3
      %4088 = vperm.xlu0 %4087, %v1202
      %v4089 = vpop.permute.xlu0 %4088
      %4091 = vset.pattern.permute.xlu0 3
      %4092 = vperm.xlu0 %4091, %v1203
      %v4093 = vpop.permute.xlu0 %4092
      %4095 = vset.pattern.permute.xlu0 3
      %4096 = vperm.xlu0 %4095, %v1204
      %v4097 = vpop.permute.xlu0 %4096
      %4099 = vset.pattern.permute.xlu0 3
      %4100 = vperm.xlu0 %4099, %v1205
      %v4101 = vpop.permute.xlu0 %4100
      %4103 = vset.pattern.permute.xlu0 3
      %4104 = vperm.xlu0 %4103, %v1206
      %v4105 = vpop.permute.xlu0 %4104
      %4107 = vset.pattern.permute.xlu0 3
      %4108 = vperm.xlu0 %4107, %v1207
      %v4109 = vpop.permute.xlu0 %4108
      %4111 = vset.pattern.permute.xlu0 3
      %4112 = vperm.xlu0 %4111, %v1208
      %v4113 = vpop.permute.xlu0 %4112
      %4115 = vset.pattern.permute.xlu0 3
      %4116 = vperm.xlu0 %4115, %v1209
      %v4117 = vpop.permute.xlu0 %4116
      %4119 = vset.pattern.permute.xlu0 3
      %4120 = vperm.xlu0 %4119, %v1210
      %v4121 = vpop.permute.xlu0 %4120
      %v4123 = vsel %vm651, %v3997, -1.2676506e+30
      %v4124 = vsel %vm652, %v4001, -1.2676506e+30
      %v4125 = vsel %vm653, %v4005, -1.2676506e+30
      %v4126 = vsel %vm654, %v4009, -1.2676506e+30
      %v4127 = vsel %vm655, %v4013, -1.2676506e+30
      %v4128 = vsel %vm656, %v4017, -1.2676506e+30
      %v4129 = vsel %vm657, %v4021, -1.2676506e+30
      %v4130 = vsel %vm658, %v4025, -1.2676506e+30
      %v4131 = vsel %vm659, %v4029, -1.2676506e+30
      %v4132 = vsel %vm660, %v4033, -1.2676506e+30
      %v4133 = vsel %vm661, %v4037, -1.2676506e+30
      %v4134 = vsel %vm662, %v4041, -1.2676506e+30
      %v4135 = vsel %vm663, %v4045, -1.2676506e+30
      %v4136 = vsel %vm664, %v4049, -1.2676506e+30
      %v4137 = vsel %vm665, %v4053, -1.2676506e+30
      %v4138 = vsel %vm666, %v4057, -1.2676506e+30
      %v4139 = vsel %vm667, %v4061, -1.2676506e+30
      %v4140 = vsel %vm668, %v4065, -1.2676506e+30
      %v4141 = vsel %vm669, %v4069, -1.2676506e+30
      %v4142 = vsel %vm670, %v4073, -1.2676506e+30
      %v4143 = vsel %vm671, %v4077, -1.2676506e+30
      %v4144 = vsel %vm672, %v4081, -1.2676506e+30
      %v4145 = vsel %vm673, %v4085, -1.2676506e+30
      %v4146 = vsel %vm674, %v4089, -1.2676506e+30
      %v4147 = vsel %vm675, %v4093, -1.2676506e+30
      %v4148 = vsel %vm676, %v4097, -1.2676506e+30
      %v4149 = vsel %vm677, %v4101, -1.2676506e+30
      %v4150 = vsel %vm678, %v4105, -1.2676506e+30
      %v4151 = vsel %vm679, %v4109, -1.2676506e+30
      %v4152 = vsel %vm680, %v4113, -1.2676506e+30
      %v4153 = vsel %vm681, %v4117, -1.2676506e+30
      %v4154 = vsel %vm682, %v4121, -1.2676506e+30
      %v4155 = vsel %vm1438, %v4123, -inf
      %v4156 = vsel %vm1438, %v4124, -inf
      %v4157 = vsel %vm1438, %v4125, -inf
      %v4158 = vsel %vm1438, %v4126, -inf
      %v4159 = vsel %vm1438, %v4127, -inf
      %v4160 = vmax.f32 %v4155, %v4159
      %v4161 = vsel %vm1438, %v4128, -inf
      %v4162 = vmax.f32 %v4156, %v4161
      %v4163 = vsel %vm1438, %v4129, -inf
      %v4164 = vmax.f32 %v4157, %v4163
      %v4165 = vsel %vm1438, %v4130, -inf
      %v4166 = vmax.f32 %v4158, %v4165
      %v4167 = vsel %vm1438, %v4131, -inf
      %v4168 = vmax.f32 %v4160, %v4167
      %v4169 = vsel %vm1438, %v4132, -inf
      %v4170 = vmax.f32 %v4162, %v4169
      %v4171 = vsel %vm1438, %v4133, -inf
      %v4172 = vmax.f32 %v4164, %v4171
      %v4173 = vsel %vm1438, %v4134, -inf
      %v4174 = vmax.f32 %v4166, %v4173
      %v4175 = vsel %vm1438, %v4135, -inf
      %v4176 = vmax.f32 %v4168, %v4175
      %v4177 = vsel %vm1438, %v4136, -inf
      %v4178 = vmax.f32 %v4170, %v4177
      %v4179 = vsel %vm1438, %v4137, -inf
      %v4180 = vmax.f32 %v4172, %v4179
      %v4181 = vsel %vm1438, %v4138, -inf
      %v4182 = vmax.f32 %v4174, %v4181
      %v4183 = vsel %vm1438, %v4139, -inf
      %v4184 = vmax.f32 %v4176, %v4183
      %v4185 = vsel %vm1438, %v4140, -inf
      %v4186 = vmax.f32 %v4178, %v4185
      %v4187 = vsel %vm1438, %v4141, -inf
      %v4188 = vmax.f32 %v4180, %v4187
      %v4189 = vsel %vm1438, %v4142, -inf
      %v4190 = vmax.f32 %v4182, %v4189
      %v4191 = vsel %vm1438, %v4143, -inf
      %v4192 = vmax.f32 %v4184, %v4191
      %v4193 = vsel %vm1438, %v4144, -inf
      %v4194 = vmax.f32 %v4186, %v4193
      %v4195 = vsel %vm1438, %v4145, -inf
      %v4196 = vmax.f32 %v4188, %v4195
      %v4197 = vsel %vm1438, %v4146, -inf
      %v4198 = vmax.f32 %v4190, %v4197
      %v4199 = vsel %vm1438, %v4147, -inf
      %v4200 = vmax.f32 %v4192, %v4199
      %v4201 = vsel %vm1438, %v4148, -inf
      %v4202 = vmax.f32 %v4194, %v4201
      %v4203 = vsel %vm1438, %v4149, -inf
      %v4204 = vmax.f32 %v4196, %v4203
      %v4205 = vsel %vm1438, %v4150, -inf
      %v4206 = vmax.f32 %v4198, %v4205
      %v4207 = vsel %vm1438, %v4151, -inf
      %v4208 = vmax.f32 %v4200, %v4207
      %v4209 = vsel %vm1438, %v4152, -inf
      %v4210 = vmax.f32 %v4202, %v4209
      %v4211 = vsel %vm1438, %v4153, -inf
      %v4212 = vmax.f32 %v4204, %v4211
      %v4213 = vsel %vm1438, %v4154, -inf
      %v4214 = vmax.f32 %v4206, %v4213
      %v4215 = vmax.f32 %v4208, %v4210
      %v4216 = vmax.f32 %v4212, %v4214
      %v4217 = vmax.f32 %v4215, %v4216
      %v4218 = vrot.slane %v4217, 4
      %v4219 = vmax.f32 %v4217, %v4218
      %v4220 = vrot.slane %v4219, 2
      %v4221 = vmax.f32 %v4219, %v4220
      %v4222 = vrot.slane %v4221, 1
      %v4223 = vmax.f32 %v4221, %v4222
      %v4224 = vmax.f32 %v3994, %v4223
      %v4225 = vsel %vm2213, %v4224, %v3994
      %v4226 = vpack.c.bf16 %v4225, %v4225
      %v4227 = vunpack.c.l.bf16 %v4226
      %4228 = vst.msk [vmem:[#allocation5] sm:$0xf] %vm2217, %v4227
      %v4229 = vsub.f32 %v3269, %v4227
      %v4230 = vmul.f32 %v4229, 1.442695
      %v4231 = vpow.pop %v4230
      %v4233 = vsel %vm1438, %v4226, 0
      %4235 = vmatpush.bf16.xpose.msra.mxu0 0
      %4236 = vmatpush.bf16.xpose.msra.mxu0 0
      %4237 = vmatpush.bf16.xpose.msra.mxu0 0
      %4238 = vmatpush.bf16.xpose.msra.mxu0 0
      %4239 = vmatpush.bf16.xpose.msra.mxu0 0
      %4240 = vmatpush.bf16.xpose.msra.mxu0 0
      %4241 = vmatpush.bf16.xpose.msra.mxu0 0
      %4242 = vmatpush.bf16.xpose.msra.mxu0 %v4233
      %4243 = vmatmul.bf16.gmra.mxu0 %v2223
      %v4244 = vpop.f32.mrf.mxu0
      %v4245 = vadd.f32 0.0, %v4244
      %v4246 = vpop.f32.mrf.mxu0
      %v4247 = vadd.f32 0.0, %v4246
      %4248 = vmatmul.bf16.gmra.mxu0 %v2226
      %v4249 = vpop.f32.mrf.mxu0
      %v4250 = vadd.f32 0.0, %v4249
      %v4251 = vpop.f32.mrf.mxu0
      %v4252 = vadd.f32 0.0, %v4251
      %4253 = vmatmul.bf16.gmra.mxu0 %v2229
      %v4254 = vpop.f32.mrf.mxu0
      %v4255 = vadd.f32 0.0, %v4254
      %v4256 = vpop.f32.mrf.mxu0
      %v4257 = vadd.f32 0.0, %v4256
      %4258 = vmatmul.bf16.gmra.mxu0 %v2232
      %v4259 = vpop.f32.mrf.mxu0
      %v4260 = vadd.f32 0.0, %v4259
      %v4261 = vpop.f32.mrf.mxu0
      %v4262 = vadd.f32 0.0, %v4261
      %4263 = vmatmul.bf16.gmra.mxu0 %v2235
      %v4264 = vpop.f32.mrf.mxu0
      %v4265 = vadd.f32 0.0, %v4264
      %v4266 = vpop.f32.mrf.mxu0
      %v4267 = vadd.f32 0.0, %v4266
      %4268 = vmatmul.bf16.gmra.mxu0 %v2238
      %v4269 = vpop.f32.mrf.mxu0
      %v4270 = vadd.f32 0.0, %v4269
      %v4271 = vpop.f32.mrf.mxu0
      %v4272 = vadd.f32 0.0, %v4271
      %4273 = vmatmul.bf16.gmra.mxu0 %v2241
      %v4274 = vpop.f32.mrf.mxu0
      %v4275 = vadd.f32 0.0, %v4274
      %v4276 = vpop.f32.mrf.mxu0
      %v4277 = vadd.f32 0.0, %v4276
      %4278 = vmatmul.bf16.gmra.mxu0 %v2244
      %v4279 = vpop.f32.mrf.mxu0
      %v4280 = vadd.f32 0.0, %v4279
      %v4281 = vpop.f32.mrf.mxu0
      %v4282 = vadd.f32 0.0, %v4281
      %4283 = vmatmul.bf16.gmra.mxu0 %v2247
      %v4284 = vpop.f32.mrf.mxu0
      %v4285 = vadd.f32 0.0, %v4284
      %v4286 = vpop.f32.mrf.mxu0
      %v4287 = vadd.f32 0.0, %v4286
      %4288 = vmatmul.bf16.gmra.mxu0 %v2250
      %v4289 = vpop.f32.mrf.mxu0
      %v4290 = vadd.f32 0.0, %v4289
      %v4291 = vpop.f32.mrf.mxu0
      %v4292 = vadd.f32 0.0, %v4291
      %4293 = vmatmul.bf16.gmra.mxu0 %v2253
      %v4294 = vpop.f32.mrf.mxu0
      %v4295 = vadd.f32 0.0, %v4294
      %v4296 = vpop.f32.mrf.mxu0
      %v4297 = vadd.f32 0.0, %v4296
      %4298 = vmatmul.bf16.gmra.mxu0 %v2256
      %v4299 = vpop.f32.mrf.mxu0
      %v4300 = vadd.f32 0.0, %v4299
      %v4301 = vpop.f32.mrf.mxu0
      %v4302 = vadd.f32 0.0, %v4301
      %4303 = vmatmul.bf16.gmra.mxu0 %v2259
      %v4304 = vpop.f32.mrf.mxu0
      %v4305 = vadd.f32 0.0, %v4304
      %v4306 = vpop.f32.mrf.mxu0
      %v4307 = vadd.f32 0.0, %v4306
      %4308 = vmatmul.bf16.gmra.mxu0 %v2262
      %v4309 = vpop.f32.mrf.mxu0
      %v4310 = vadd.f32 0.0, %v4309
      %v4311 = vpop.f32.mrf.mxu0
      %v4312 = vadd.f32 0.0, %v4311
      %4313 = vmatmul.bf16.gmra.mxu0 %v2265
      %v4314 = vpop.f32.mrf.mxu0
      %v4315 = vadd.f32 0.0, %v4314
      %v4316 = vpop.f32.mrf.mxu0
      %v4317 = vadd.f32 0.0, %v4316
      %4318 = vmatmul.bf16.gmra.mxu0 %v2268
      %v4319 = vpop.f32.mrf.mxu0
      %v4320 = vadd.f32 0.0, %v4319
      %v4321 = vpop.f32.mrf.mxu0
      %v4322 = vadd.f32 0.0, %v4321
      %4323 = vdwg.mxu0
      %v4324 = vsub.f32 %v1179, %v4245
      %v4325 = vsub.f32 %v1180, %v4247
      %v4326 = vsub.f32 %v1181, %v4250
      %v4327 = vsub.f32 %v1182, %v4252
      %v4328 = vsub.f32 %v1183, %v4255
      %v4329 = vsub.f32 %v1184, %v4257
      %v4330 = vsub.f32 %v1185, %v4260
      %v4331 = vsub.f32 %v1186, %v4262
      %v4332 = vsub.f32 %v1187, %v4265
      %v4333 = vsub.f32 %v1188, %v4267
      %v4334 = vsub.f32 %v1189, %v4270
      %v4335 = vsub.f32 %v1190, %v4272
      %v4336 = vsub.f32 %v1191, %v4275
      %v4337 = vsub.f32 %v1192, %v4277
      %v4338 = vsub.f32 %v1193, %v4280
      %v4339 = vsub.f32 %v1194, %v4282
      %v4340 = vsub.f32 %v1195, %v4285
      %v4341 = vsub.f32 %v1196, %v4287
      %v4342 = vsub.f32 %v1197, %v4290
      %v4343 = vsub.f32 %v1198, %v4292
      %v4344 = vsub.f32 %v1199, %v4295
      %v4345 = vsub.f32 %v1200, %v4297
      %v4346 = vsub.f32 %v1201, %v4300
      %v4347 = vsub.f32 %v1202, %v4302
      %v4348 = vsub.f32 %v1203, %v4305
      %v4349 = vsub.f32 %v1204, %v4307
      %v4350 = vsub.f32 %v1205, %v4310
      %v4351 = vsub.f32 %v1206, %v4312
      %v4352 = vsub.f32 %v1207, %v4315
      %v4353 = vsub.f32 %v1208, %v4317
      %v4354 = vsub.f32 %v1209, %v4320
      %v4355 = vsub.f32 %v1210, %v4322
      %v4356 = vsel %vm2522, %v4324, -1.2676506e+30
      %v4357 = vsel %vm2523, %v4325, -1.2676506e+30
      %v4358 = vsel %vm2524, %v4326, -1.2676506e+30
      %v4359 = vsel %vm2525, %v4327, -1.2676506e+30
      %v4360 = vsel %vm2526, %v4328, -1.2676506e+30
      %v4361 = vsel %vm2527, %v4329, -1.2676506e+30
      %v4362 = vsel %vm2528, %v4330, -1.2676506e+30
      %v4363 = vsel %vm2529, %v4331, -1.2676506e+30
      %v4364 = vsel %vm2530, %v4332, -1.2676506e+30
      %v4365 = vsel %vm2531, %v4333, -1.2676506e+30
      %v4366 = vsel %vm2532, %v4334, -1.2676506e+30
      %v4367 = vsel %vm2533, %v4335, -1.2676506e+30
      %v4368 = vsel %vm2534, %v4336, -1.2676506e+30
      %v4369 = vsel %vm2535, %v4337, -1.2676506e+30
      %v4370 = vsel %vm2536, %v4338, -1.2676506e+30
      %v4371 = vsel %vm2537, %v4339, -1.2676506e+30
      %v4372 = vsel %vm2538, %v4340, -1.2676506e+30
      %v4373 = vsel %vm2539, %v4341, -1.2676506e+30
      %v4374 = vsel %vm2540, %v4342, -1.2676506e+30
      %v4375 = vsel %vm2541, %v4343, -1.2676506e+30
      %v4376 = vsel %vm2542, %v4344, -1.2676506e+30
      %v4377 = vsel %vm2543, %v4345, -1.2676506e+30
      %v4378 = vsel %vm2544, %v4346, -1.2676506e+30
      %v4379 = vsel %vm2545, %v4347, -1.2676506e+30
      %v4380 = vsel %vm2546, %v4348, -1.2676506e+30
      %v4381 = vsel %vm2547, %v4349, -1.2676506e+30
      %v4382 = vsel %vm2548, %v4350, -1.2676506e+30
      %v4383 = vsel %vm2549, %v4351, -1.2676506e+30
      %v4384 = vsel %vm2550, %v4352, -1.2676506e+30
      %v4385 = vsel %vm2551, %v4353, -1.2676506e+30
      %v4386 = vsel %vm2552, %v4354, -1.2676506e+30
      %v4387 = vsel %vm2553, %v4355, -1.2676506e+30
      %v4388 = vmul.f32 %v4356, 1.442695
      %v4389 = vpow.pop %v4388
      %v4390 = vmul.f32 %v4357, 1.442695
      %v4391 = vpow.pop %v4390
      %v4392 = vmul.f32 %v4358, 1.442695
      %v4393 = vpow.pop %v4392
      %v4394 = vmul.f32 %v4359, 1.442695
      %v4395 = vpow.pop %v4394
      %v4396 = vmul.f32 %v4360, 1.442695
      %v4397 = vpow.pop %v4396
      %v4398 = vmul.f32 %v4361, 1.442695
      %v4399 = vpow.pop %v4398
      %v4400 = vmul.f32 %v4362, 1.442695
      %v4401 = vpow.pop %v4400
      %v4402 = vmul.f32 %v4363, 1.442695
      %v4403 = vpow.pop %v4402
      %v4404 = vmul.f32 %v4364, 1.442695
      %v4405 = vpow.pop %v4404
      %v4406 = vmul.f32 %v4365, 1.442695
      %v4407 = vpow.pop %v4406
      %v4408 = vmul.f32 %v4366, 1.442695
      %v4409 = vpow.pop %v4408
      %v4410 = vmul.f32 %v4367, 1.442695
      %v4411 = vpow.pop %v4410
      %v4412 = vmul.f32 %v4368, 1.442695
      %v4413 = vpow.pop %v4412
      %v4414 = vmul.f32 %v4369, 1.442695
      %v4415 = vpow.pop %v4414
      %v4416 = vmul.f32 %v4370, 1.442695
      %v4417 = vpow.pop %v4416
      %v4418 = vmul.f32 %v4371, 1.442695
      %v4419 = vpow.pop %v4418
      %v4420 = vmul.f32 %v4372, 1.442695
      %v4421 = vpow.pop %v4420
      %v4422 = vmul.f32 %v4373, 1.442695
      %v4423 = vpow.pop %v4422
      %v4424 = vmul.f32 %v4374, 1.442695
      %v4425 = vpow.pop %v4424
      %v4426 = vmul.f32 %v4375, 1.442695
      %v4427 = vpow.pop %v4426
      %v4428 = vmul.f32 %v4376, 1.442695
      %v4429 = vpow.pop %v4428
      %v4430 = vmul.f32 %v4377, 1.442695
      %v4431 = vpow.pop %v4430
      %v4432 = vmul.f32 %v4378, 1.442695
      %v4433 = vpow.pop %v4432
      %v4434 = vmul.f32 %v4379, 1.442695
      %v4435 = vpow.pop %v4434
      %v4436 = vmul.f32 %v4380, 1.442695
      %v4437 = vpow.pop %v4436
      %v4438 = vmul.f32 %v4381, 1.442695
      %v4439 = vpow.pop %v4438
      %v4440 = vmul.f32 %v4382, 1.442695
      %v4441 = vpow.pop %v4440
      %v4442 = vmul.f32 %v4383, 1.442695
      %v4443 = vpow.pop %v4442
      %v4444 = vmul.f32 %v4384, 1.442695
      %v4445 = vpow.pop %v4444
      %v4446 = vmul.f32 %v4385, 1.442695
      %v4447 = vpow.pop %v4446
      %v4448 = vmul.f32 %v4386, 1.442695
      %v4449 = vpow.pop %v4448
      %v4450 = vmul.f32 %v4387, 1.442695
      %v4451 = vpow.pop %v4450
      %v4452 = vpack.c.bf16 %v4391, %v4389
      %v4453 = vpack.c.bf16 %v4395, %v4393
      %v4454 = vpack.c.bf16 %v4399, %v4397
      %v4455 = vpack.c.bf16 %v4403, %v4401
      %v4456 = vpack.c.bf16 %v4407, %v4405
      %v4457 = vpack.c.bf16 %v4411, %v4409
      %v4458 = vpack.c.bf16 %v4415, %v4413
      %v4459 = vpack.c.bf16 %v4419, %v4417
      %v4460 = vpack.c.bf16 %v4423, %v4421
      %v4461 = vpack.c.bf16 %v4427, %v4425
      %v4462 = vpack.c.bf16 %v4431, %v4429
      %v4463 = vpack.c.bf16 %v4435, %v4433
      %v4464 = vpack.c.bf16 %v4439, %v4437
      %v4465 = vpack.c.bf16 %v4443, %v4441
      %v4466 = vpack.c.bf16 %v4447, %v4445
      %v4467 = vpack.c.bf16 %v4451, %v4449
      %4468 = vxpose.xlu0.c.b16.start [1/8] %v4452, 128
      %4469 = vxpose.xlu0.c.b16.cont [2/8] %v4453, 128
      %4470 = vxpose.xlu0.c.b16.cont [3/8] %v4454, 128
      %4471 = vxpose.xlu0.c.b16.cont [4/8] %v4455, 128
      %4472 = vxpose.xlu0.c.b16.cont [5/8] %v4456, 128
      %4473 = vxpose.xlu0.c.b16.cont [6/8] %v4457, 128
      %4474 = vxpose.xlu0.c.b16.cont [7/8] %v4458, 128
      %4475 = vxpose.xlu0.c.b16.end [8/8] %v4459, 128
      %v4476 = vpop.trf.xlu0
      %v4477 = vpop.trf.xlu0
      %v4478 = vpop.trf.xlu0
      %v4479 = vpop.trf.xlu0
      %v4480 = vpop.trf.xlu0
      %v4481 = vpop.trf.xlu0
      %v4482 = vpop.trf.xlu0
      %v4483 = vpop.trf.xlu0
      %4484 = vxpose.xlu0.c.b16.start [1/8] %v4460, 128
      %4485 = vxpose.xlu0.c.b16.cont [2/8] %v4461, 128
      %4486 = vxpose.xlu0.c.b16.cont [3/8] %v4462, 128
      %4487 = vxpose.xlu0.c.b16.cont [4/8] %v4463, 128
      %4488 = vxpose.xlu0.c.b16.cont [5/8] %v4464, 128
      %4489 = vxpose.xlu0.c.b16.cont [6/8] %v4465, 128
      %4490 = vxpose.xlu0.c.b16.cont [7/8] %v4466, 128
      %4491 = vxpose.xlu0.c.b16.end [8/8] %v4467, 128
      %v4492 = vpop.trf.xlu0
      %v4493 = vpop.trf.xlu0
      %v4494 = vpop.trf.xlu0
      %v4495 = vpop.trf.xlu0
      %v4496 = vpop.trf.xlu0
      %v4497 = vpop.trf.xlu0
      %v4498 = vpop.trf.xlu0
      %v4499 = vpop.trf.xlu0
      %4500 = vmatpush.bf16.msra.mxu0 %v754
      %4501 = vmatpush.bf16.msra.mxu0 %v753
      %4502 = vmatpush.bf16.msra.mxu0 %v752
      %4503 = vmatpush.bf16.msra.mxu0 %v751
      %4504 = vmatpush.bf16.msra.mxu0 %v750
      %4505 = vmatpush.bf16.msra.mxu0 %v749
      %4506 = vmatpush.bf16.msra.mxu0 %v748
      %4507 = vmatpush.bf16.msra.mxu0 %v747
      %4508 = vmatmul.bf16.gmra.mxu0 %v4476
      %v4509 = vpop.f32.mrf.mxu0
      %v4510 = vadd.f32 0.0, %v4509
      %v4511 = vpop.f32.mrf.mxu0
      %4512 = vdwg.mxu0
      %4513 = vmatpush.bf16.msra.mxu0 %v762
      %4514 = vmatpush.bf16.msra.mxu0 %v761
      %4515 = vmatpush.bf16.msra.mxu0 %v760
      %4516 = vmatpush.bf16.msra.mxu0 %v759
      %4517 = vmatpush.bf16.msra.mxu0 %v758
      %4518 = vmatpush.bf16.msra.mxu0 %v757
      %4519 = vmatpush.bf16.msra.mxu0 %v756
      %4520 = vmatpush.bf16.msra.mxu0 %v755
      %4521 = vmatmul.bf16.gmra.mxu0 %v4492
      %v4522 = vpop.f32.mrf.mxu0
      %v4523 = vadd.f32 %v4510, %v4522
      %v4524 = vpop.f32.mrf.mxu0
      %4525 = vdwg.mxu0
      %v4526 = vld [vmem:[#allocation6] sm:$0xf]
      %v4527 = vmul.f32 %v4231, %v4526
      %v4528 = vadd.f32 %v4527, %v4523
      %4529 = vst.msk [vmem:[#allocation6] sm:$0xf] %vm2217, %v4528
      %v4531 = vsel %vm2728, %v4452, 0
      %v4534 = vsel %vm2728, %v4453, 0
      %v4537 = vsel %vm2728, %v4454, 0
      %v4540 = vsel %vm2728, %v4455, 0
      %v4543 = vsel %vm2728, %v4456, 0
      %v4546 = vsel %vm2728, %v4457, 0
      %v4549 = vsel %vm2728, %v4458, 0
      %v4552 = vsel %vm2728, %v4459, 0
      %v4555 = vsel %vm2728, %v4460, 0
      %v4558 = vsel %vm2728, %v4461, 0
      %v4561 = vsel %vm2728, %v4462, 0
      %v4564 = vsel %vm2728, %v4463, 0
      %v4567 = vsel %vm2728, %v4464, 0
      %v4570 = vsel %vm2728, %v4465, 0
      %v4573 = vsel %vm2728, %v4466, 0
      %v4576 = vsel %vm2728, %v4467, 0
      %4578 = vmatpush.bf16.msra.mxu0 0
      %4579 = vmatpush.bf16.msra.mxu0 0
      %4580 = vmatpush.bf16.msra.mxu0 0
      %4581 = vmatpush.bf16.msra.mxu0 0
      %4582 = vmatpush.bf16.msra.mxu0 0
      %4583 = vmatpush.bf16.msra.mxu0 0
      %4584 = vmatpush.bf16.msra.mxu0 0
      %4585 = vmatpush.bf16.msra.mxu0 %v2779
      %4586 = vmatmul.bf16.gmra.mxu0 %v4531
      %v4587 = vpop.f32.mrf.mxu0
      %v4588 = vadd.f32 0.0, %v4587
      %v4589 = vpop.f32.mrf.mxu0
      %v4590 = vadd.f32 0.0, %v4589
      %4591 = vmatmul.bf16.gmra.mxu0 %v4534
      %v4592 = vpop.f32.mrf.mxu0
      %v4593 = vadd.f32 0.0, %v4592
      %v4594 = vpop.f32.mrf.mxu0
      %v4595 = vadd.f32 0.0, %v4594
      %4596 = vmatmul.bf16.gmra.mxu0 %v4537
      %v4597 = vpop.f32.mrf.mxu0
      %v4598 = vadd.f32 0.0, %v4597
      %v4599 = vpop.f32.mrf.mxu0
      %v4600 = vadd.f32 0.0, %v4599
      %4601 = vmatmul.bf16.gmra.mxu0 %v4540
      %v4602 = vpop.f32.mrf.mxu0
      %v4603 = vadd.f32 0.0, %v4602
      %v4604 = vpop.f32.mrf.mxu0
      %v4605 = vadd.f32 0.0, %v4604
      %4606 = vmatmul.bf16.gmra.mxu0 %v4543
      %v4607 = vpop.f32.mrf.mxu0
      %v4608 = vadd.f32 0.0, %v4607
      %v4609 = vpop.f32.mrf.mxu0
      %v4610 = vadd.f32 0.0, %v4609
      %4611 = vmatmul.bf16.gmra.mxu0 %v4546
      %v4612 = vpop.f32.mrf.mxu0
      %v4613 = vadd.f32 0.0, %v4612
      %v4614 = vpop.f32.mrf.mxu0
      %v4615 = vadd.f32 0.0, %v4614
      %4616 = vmatmul.bf16.gmra.mxu0 %v4549
      %v4617 = vpop.f32.mrf.mxu0
      %v4618 = vadd.f32 0.0, %v4617
      %v4619 = vpop.f32.mrf.mxu0
      %v4620 = vadd.f32 0.0, %v4619
      %4621 = vmatmul.bf16.gmra.mxu0 %v4552
      %v4622 = vpop.f32.mrf.mxu0
      %v4623 = vadd.f32 0.0, %v4622
      %v4624 = vpop.f32.mrf.mxu0
      %v4625 = vadd.f32 0.0, %v4624
      %4626 = vmatmul.bf16.gmra.mxu0 %v4555
      %v4627 = vpop.f32.mrf.mxu0
      %v4628 = vadd.f32 0.0, %v4627
      %v4629 = vpop.f32.mrf.mxu0
      %v4630 = vadd.f32 0.0, %v4629
      %4631 = vmatmul.bf16.gmra.mxu0 %v4558
      %v4632 = vpop.f32.mrf.mxu0
      %v4633 = vadd.f32 0.0, %v4632
      %v4634 = vpop.f32.mrf.mxu0
      %v4635 = vadd.f32 0.0, %v4634
      %4636 = vmatmul.bf16.gmra.mxu0 %v4561
      %v4637 = vpop.f32.mrf.mxu0
      %v4638 = vadd.f32 0.0, %v4637
      %v4639 = vpop.f32.mrf.mxu0
      %v4640 = vadd.f32 0.0, %v4639
      %4641 = vmatmul.bf16.gmra.mxu0 %v4564
      %v4642 = vpop.f32.mrf.mxu0
      %v4643 = vadd.f32 0.0, %v4642
      %v4644 = vpop.f32.mrf.mxu0
      %v4645 = vadd.f32 0.0, %v4644
      %4646 = vmatmul.bf16.gmra.mxu0 %v4567
      %v4647 = vpop.f32.mrf.mxu0
      %v4648 = vadd.f32 0.0, %v4647
      %v4649 = vpop.f32.mrf.mxu0
      %v4650 = vadd.f32 0.0, %v4649
      %4651 = vmatmul.bf16.gmra.mxu0 %v4570
      %v4652 = vpop.f32.mrf.mxu0
      %v4653 = vadd.f32 0.0, %v4652
      %v4654 = vpop.f32.mrf.mxu0
      %v4655 = vadd.f32 0.0, %v4654
      %4656 = vmatmul.bf16.gmra.mxu0 %v4573
      %v4657 = vpop.f32.mrf.mxu0
      %v4658 = vadd.f32 0.0, %v4657
      %v4659 = vpop.f32.mrf.mxu0
      %v4660 = vadd.f32 0.0, %v4659
      %4661 = vmatmul.bf16.gmra.mxu0 %v4576
      %v4662 = vpop.f32.mrf.mxu0
      %v4663 = vadd.f32 0.0, %v4662
      %v4664 = vpop.f32.mrf.mxu0
      %v4665 = vadd.f32 0.0, %v4664
      %4666 = vdwg.mxu0
      %v4667 = vunpack.c.l.bf16 %v3237
      %v4668 = vunpack.c.l.bf16 %v3238
      %v4669 = vunpack.c.l.bf16 %v3239
      %v4670 = vunpack.c.l.bf16 %v3240
      %v4671 = vunpack.c.l.bf16 %v3241
      %v4672 = vunpack.c.l.bf16 %v3242
      %v4673 = vunpack.c.l.bf16 %v3243
      %v4674 = vunpack.c.l.bf16 %v3244
      %v4675 = vunpack.c.l.bf16 %v3245
      %v4676 = vunpack.c.l.bf16 %v3246
      %v4677 = vunpack.c.l.bf16 %v3247
      %v4678 = vunpack.c.l.bf16 %v3248
      %v4679 = vunpack.c.l.bf16 %v3249
      %v4680 = vunpack.c.l.bf16 %v3250
      %v4681 = vunpack.c.l.bf16 %v3251
      %v4682 = vunpack.c.l.bf16 %v3252
      %v4683 = vunpack.c.l.bf16 %v3253
      %v4684 = vunpack.c.l.bf16 %v3254
      %v4685 = vunpack.c.l.bf16 %v3255
      %v4686 = vunpack.c.l.bf16 %v3256
      %v4687 = vunpack.c.l.bf16 %v3257
      %v4688 = vunpack.c.l.bf16 %v3258
      %v4689 = vunpack.c.l.bf16 %v3259
      %v4690 = vunpack.c.l.bf16 %v3260
      %v4691 = vunpack.c.l.bf16 %v3261
      %v4692 = vunpack.c.l.bf16 %v3262
      %v4693 = vunpack.c.l.bf16 %v3263
      %v4694 = vunpack.c.l.bf16 %v3264
      %v4695 = vunpack.c.l.bf16 %v3265
      %v4696 = vunpack.c.l.bf16 %v3266
      %v4697 = vunpack.c.l.bf16 %v3267
      %v4698 = vunpack.c.l.bf16 %v3268
      %v4699 = vmul.f32 %v4588, %v4667
      %v4700 = vmul.f32 %v4590, %v4668
      %v4701 = vmul.f32 %v4593, %v4669
      %v4702 = vmul.f32 %v4595, %v4670
      %v4703 = vmul.f32 %v4598, %v4671
      %v4704 = vmul.f32 %v4600, %v4672
      %v4705 = vmul.f32 %v4603, %v4673
      %v4706 = vmul.f32 %v4605, %v4674
      %v4707 = vmul.f32 %v4608, %v4675
      %v4708 = vmul.f32 %v4610, %v4676
      %v4709 = vmul.f32 %v4613, %v4677
      %v4710 = vmul.f32 %v4615, %v4678
      %v4711 = vmul.f32 %v4618, %v4679
      %v4712 = vmul.f32 %v4620, %v4680
      %v4713 = vmul.f32 %v4623, %v4681
      %v4714 = vmul.f32 %v4625, %v4682
      %v4715 = vmul.f32 %v4628, %v4683
      %v4716 = vmul.f32 %v4630, %v4684
      %v4717 = vmul.f32 %v4633, %v4685
      %v4718 = vmul.f32 %v4635, %v4686
      %v4719 = vmul.f32 %v4638, %v4687
      %v4720 = vmul.f32 %v4640, %v4688
      %v4721 = vmul.f32 %v4643, %v4689
      %v4722 = vmul.f32 %v4645, %v4690
      %v4723 = vmul.f32 %v4648, %v4691
      %v4724 = vmul.f32 %v4650, %v4692
      %v4725 = vmul.f32 %v4653, %v4693
      %v4726 = vmul.f32 %v4655, %v4694
      %v4727 = vmul.f32 %v4658, %v4695
      %v4728 = vmul.f32 %v4660, %v4696
      %v4729 = vmul.f32 %v4663, %v4697
      %v4730 = vmul.f32 %v4665, %v4698
      %v4731 = vpack.c.bf16 %v4700, %v4699
      %v4732 = vpack.c.bf16 %v4702, %v4701
      %v4733 = vpack.c.bf16 %v4704, %v4703
      %v4734 = vpack.c.bf16 %v4706, %v4705
      %v4735 = vpack.c.bf16 %v4708, %v4707
      %v4736 = vpack.c.bf16 %v4710, %v4709
      %v4737 = vpack.c.bf16 %v4712, %v4711
      %v4738 = vpack.c.bf16 %v4714, %v4713
      %v4739 = vpack.c.bf16 %v4716, %v4715
      %v4740 = vpack.c.bf16 %v4718, %v4717
      %v4741 = vpack.c.bf16 %v4720, %v4719
      %v4742 = vpack.c.bf16 %v4722, %v4721
      %v4743 = vpack.c.bf16 %v4724, %v4723
      %v4744 = vpack.c.bf16 %v4726, %v4725
      %v4745 = vpack.c.bf16 %v4728, %v4727
      %v4746 = vpack.c.bf16 %v4730, %v4729
      %4747 = vmatpush.bf16.msra.mxu0 %v4738
      %4748 = vmatpush.bf16.msra.mxu0 %v4737
      %4749 = vmatpush.bf16.msra.mxu0 %v4736
      %4750 = vmatpush.bf16.msra.mxu0 %v4735
      %4751 = vmatpush.bf16.msra.mxu0 %v4734
      %4752 = vmatpush.bf16.msra.mxu0 %v4733
      %4753 = vmatpush.bf16.msra.mxu0 %v4732
      %4754 = vmatpush.bf16.msra.mxu0 %v4731
      %4755 = vmatmul.bf16.gmra.mxu0 %v2958
      %v4756 = vpop.f32.mrf.mxu0
      %v4757 = vadd.f32 0.0, %v4756
      %v4758 = vpop.f32.mrf.mxu0
      %v4759 = vadd.f32 0.0, %v4758
      %4760 = vdwg.mxu0
      %4761 = vmatpush.bf16.msra.mxu0 %v4746
      %4762 = vmatpush.bf16.msra.mxu0 %v4745
      %4763 = vmatpush.bf16.msra.mxu0 %v4744
      %4764 = vmatpush.bf16.msra.mxu0 %v4743
      %4765 = vmatpush.bf16.msra.mxu0 %v4742
      %4766 = vmatpush.bf16.msra.mxu0 %v4741
      %4767 = vmatpush.bf16.msra.mxu0 %v4740
      %4768 = vmatpush.bf16.msra.mxu0 %v4739
      %4769 = vmatmul.bf16.gmra.mxu0 %v2974
      %v4770 = vpop.f32.mrf.mxu0
      %v4771 = vadd.f32 %v4757, %v4770
      %v4772 = vpop.f32.mrf.mxu0
      %v4773 = vadd.f32 %v4759, %v4772
      %4774 = vdwg.mxu0
      %4775 = vxpose.xlu0.b32.start [1/16] %v4231, 128
      %4776 = vxpose.xlu0.b32.cont [2/16] 0.0, 128
      %4777 = vxpose.xlu0.b32.cont [3/16] 0.0, 128
      %4778 = vxpose.xlu0.b32.cont [4/16] 0.0, 128
      %4779 = vxpose.xlu0.b32.cont [5/16] 0.0, 128
      %4780 = vxpose.xlu0.b32.cont [6/16] 0.0, 128
      %4781 = vxpose.xlu0.b32.cont [7/16] 0.0, 128
      %4782 = vxpose.xlu0.b32.cont [8/16] 0.0, 128
      %4783 = vxpose.xlu0.b32.cont [9/16] 0.0, 128
      %4784 = vxpose.xlu0.b32.cont [10/16] 0.0, 128
      %4785 = vxpose.xlu0.b32.cont [11/16] 0.0, 128
      %4786 = vxpose.xlu0.b32.cont [12/16] 0.0, 128
      %4787 = vxpose.xlu0.b32.cont [13/16] 0.0, 128
      %4788 = vxpose.xlu0.b32.cont [14/16] 0.0, 128
      %4789 = vxpose.xlu0.b32.cont [15/16] 0.0, 128
      %4790 = vxpose.xlu0.b32.end [16/16] 0.0, 128
      %v4791 = vpop.trf.xlu0
      %v4792 = vpop.trf.xlu0
      %v4793 = vpop.trf.xlu0
      %v4794 = vpop.trf.xlu0
      %v4795 = vpop.trf.xlu0
      %v4796 = vpop.trf.xlu0
      %v4797 = vpop.trf.xlu0
      %v4798 = vpop.trf.xlu0
      %v4799 = vpop.trf.xlu0
      %v4800 = vpop.trf.xlu0
      %v4801 = vpop.trf.xlu0
      %v4802 = vpop.trf.xlu0
      %v4803 = vpop.trf.xlu0
      %v4804 = vpop.trf.xlu0
      %v4805 = vpop.trf.xlu0
      %v4806 = vpop.trf.xlu0
      %v4808 = vsel %vm2728, %v4791, 0
      %v4811 = vsel %vm2728, %v4792, 0
      %4813 = vmatpush.msra.mxu0 0.0
      %4814 = vmatpush.msra.mxu0 0.0
      %4815 = vmatpush.msra.mxu0 0.0
      %4816 = vmatpush.msra.mxu0 0.0
      %4817 = vmatpush.msra.mxu0 0.0
      %4818 = vmatpush.msra.mxu0 0.0
      %4819 = vmatpush.msra.mxu0 0.0
      %4820 = vmatpush.msra.mxu0 0.0
      %4821 = vmatpush.msra.mxu0 0.0
      %4822 = vmatpush.msra.mxu0 0.0
      %4823 = vmatpush.msra.mxu0 0.0
      %4824 = vmatpush.msra.mxu0 0.0
      %4825 = vmatpush.msra.mxu0 0.0
      %4826 = vmatpush.msra.mxu0 0.0
      %4827 = vmatpush.msra.mxu0 0.0
      %v4828 = vand.u32 %v3050, 4294901760
      %4829 = vmatpush.msra.mxu0 %v4828
      %v4830 = vand.u32 %v4808, 4294901760
      %v4831 = vsub.f32 %v4808, %v4830
      %v4832 = vand.u32 %v4831, 4294901760
      %v4833 = vsub.f32 %v4831, %v4832
      %v4834 = vand.u32 %v4833, 4294901760
      %4835 = vmatmul.f32.gmra.mxu0 %v4834
      %v4836 = vpop.f32.mrf.mxu0
      %v4837 = vadd.f32 0.0, %v4836
      %v4838 = vand.u32 %v4811, 4294901760
      %v4839 = vsub.f32 %v4811, %v4838
      %v4840 = vand.u32 %v4839, 4294901760
      %v4841 = vsub.f32 %v4839, %v4840
      %v4842 = vand.u32 %v4841, 4294901760
      %4843 = vmatmul.f32.gmra.mxu0 %v4842
      %v4844 = vpop.f32.mrf.mxu0
      %v4845 = vadd.f32 0.0, %v4844
      %4846 = vdwg.mxu0
      %4847 = vmatpush.msra.mxu0 0.0
      %4848 = vmatpush.msra.mxu0 0.0
      %4849 = vmatpush.msra.mxu0 0.0
      %4850 = vmatpush.msra.mxu0 0.0
      %4851 = vmatpush.msra.mxu0 0.0
      %4852 = vmatpush.msra.mxu0 0.0
      %4853 = vmatpush.msra.mxu0 0.0
      %4854 = vmatpush.msra.mxu0 0.0
      %4855 = vmatpush.msra.mxu0 0.0
      %4856 = vmatpush.msra.mxu0 0.0
      %4857 = vmatpush.msra.mxu0 0.0
      %4858 = vmatpush.msra.mxu0 0.0
      %4859 = vmatpush.msra.mxu0 0.0
      %4860 = vmatpush.msra.mxu0 0.0
      %4861 = vmatpush.msra.mxu0 0.0
      %v4862 = vand.u32 %v3050, 4294901760
      %v4863 = vsub.f32 %v3050, %v4862
      %v4864 = vand.u32 %v4863, 4294901760
      %v4865 = vsub.f32 %v4863, %v4864
      %v4866 = vand.u32 %v4865, 4294901760
      %4867 = vmatpush.msra.mxu0 %v4866
      %v4868 = vand.u32 %v4808, 4294901760
      %4869 = vmatmul.f32.gmra.mxu0 %v4868
      %v4870 = vpop.f32.mrf.mxu0
      %v4871 = vadd.f32 %v4837, %v4870
      %v4872 = vand.u32 %v4811, 4294901760
      %4873 = vmatmul.f32.gmra.mxu0 %v4872
      %v4874 = vpop.f32.mrf.mxu0
      %v4875 = vadd.f32 %v4845, %v4874
      %4876 = vdwg.mxu0
      %4877 = vmatpush.msra.mxu0 0.0
      %4878 = vmatpush.msra.mxu0 0.0
      %4879 = vmatpush.msra.mxu0 0.0
      %4880 = vmatpush.msra.mxu0 0.0
      %4881 = vmatpush.msra.mxu0 0.0
      %4882 = vmatpush.msra.mxu0 0.0
      %4883 = vmatpush.msra.mxu0 0.0
      %4884 = vmatpush.msra.mxu0 0.0
      %4885 = vmatpush.msra.mxu0 0.0
      %4886 = vmatpush.msra.mxu0 0.0
      %4887 = vmatpush.msra.mxu0 0.0
      %4888 = vmatpush.msra.mxu0 0.0
      %4889 = vmatpush.msra.mxu0 0.0
      %4890 = vmatpush.msra.mxu0 0.0
      %4891 = vmatpush.msra.mxu0 0.0
      %v4892 = vand.u32 %v3050, 4294901760
      %v4893 = vsub.f32 %v3050, %v4892
      %4894 = vmatpush.msra.mxu0 %v4893
      %v4895 = vand.u32 %v4808, 4294901760
      %v4896 = vsub.f32 %v4808, %v4895
      %4897 = vmatmul.f32.gmra.mxu0 %v4896
      %v4898 = vpop.f32.mrf.mxu0
      %v4899 = vadd.f32 %v4871, %v4898
      %v4900 = vand.u32 %v4811, 4294901760
      %v4901 = vsub.f32 %v4811, %v4900
      %4902 = vmatmul.f32.gmra.mxu0 %v4901
      %v4903 = vpop.f32.mrf.mxu0
      %v4904 = vadd.f32 %v4875, %v4903
      %4905 = vdwg.mxu0
      %4906 = vmatpush.msra.mxu0 0.0
      %4907 = vmatpush.msra.mxu0 0.0
      %4908 = vmatpush.msra.mxu0 0.0
      %4909 = vmatpush.msra.mxu0 0.0
      %4910 = vmatpush.msra.mxu0 0.0
      %4911 = vmatpush.msra.mxu0 0.0
      %4912 = vmatpush.msra.mxu0 0.0
      %4913 = vmatpush.msra.mxu0 0.0
      %4914 = vmatpush.msra.mxu0 0.0
      %4915 = vmatpush.msra.mxu0 0.0
      %4916 = vmatpush.msra.mxu0 0.0
      %4917 = vmatpush.msra.mxu0 0.0
      %4918 = vmatpush.msra.mxu0 0.0
      %4919 = vmatpush.msra.mxu0 0.0
      %4920 = vmatpush.msra.mxu0 0.0
      %v4921 = vand.u32 %v3050, 4294901760
      %4922 = vmatpush.msra.mxu0 %v4921
      %v4923 = vand.u32 %v4808, 4294901760
      %v4924 = vsub.f32 %v4808, %v4923
      %v4925 = vand.u32 %v4924, 4294901760
      %4926 = vmatmul.f32.gmra.mxu0 %v4925
      %v4927 = vpop.f32.mrf.mxu0
      %v4928 = vadd.f32 %v4899, %v4927
      %v4929 = vand.u32 %v4811, 4294901760
      %v4930 = vsub.f32 %v4811, %v4929
      %v4931 = vand.u32 %v4930, 4294901760
      %4932 = vmatmul.f32.gmra.mxu0 %v4931
      %v4933 = vpop.f32.mrf.mxu0
      %v4934 = vadd.f32 %v4904, %v4933
      %4935 = vdwg.mxu0
      %4936 = vmatpush.msra.mxu0 0.0
      %4937 = vmatpush.msra.mxu0 0.0
      %4938 = vmatpush.msra.mxu0 0.0
      %4939 = vmatpush.msra.mxu0 0.0
      %4940 = vmatpush.msra.mxu0 0.0
      %4941 = vmatpush.msra.mxu0 0.0
      %4942 = vmatpush.msra.mxu0 0.0
      %4943 = vmatpush.msra.mxu0 0.0
      %4944 = vmatpush.msra.mxu0 0.0
      %4945 = vmatpush.msra.mxu0 0.0
      %4946 = vmatpush.msra.mxu0 0.0
      %4947 = vmatpush.msra.mxu0 0.0
      %4948 = vmatpush.msra.mxu0 0.0
      %4949 = vmatpush.msra.mxu0 0.0
      %4950 = vmatpush.msra.mxu0 0.0
      %v4951 = vand.u32 %v3050, 4294901760
      %v4952 = vsub.f32 %v3050, %v4951
      %v4953 = vand.u32 %v4952, 4294901760
      %4954 = vmatpush.msra.mxu0 %v4953
      %v4955 = vand.u32 %v4808, 4294901760
      %4956 = vmatmul.f32.gmra.mxu0 %v4955
      %v4957 = vpop.f32.mrf.mxu0
      %v4958 = vadd.f32 %v4928, %v4957
      %v4959 = vand.u32 %v4811, 4294901760
      %4960 = vmatmul.f32.gmra.mxu0 %v4959
      %v4961 = vpop.f32.mrf.mxu0
      %v4962 = vadd.f32 %v4934, %v4961
      %4963 = vdwg.mxu0
      %4964 = vmatpush.msra.mxu0 0.0
      %4965 = vmatpush.msra.mxu0 0.0
      %4966 = vmatpush.msra.mxu0 0.0
      %4967 = vmatpush.msra.mxu0 0.0
      %4968 = vmatpush.msra.mxu0 0.0
      %4969 = vmatpush.msra.mxu0 0.0
      %4970 = vmatpush.msra.mxu0 0.0
      %4971 = vmatpush.msra.mxu0 0.0
      %4972 = vmatpush.msra.mxu0 0.0
      %4973 = vmatpush.msra.mxu0 0.0
      %4974 = vmatpush.msra.mxu0 0.0
      %4975 = vmatpush.msra.mxu0 0.0
      %4976 = vmatpush.msra.mxu0 0.0
      %4977 = vmatpush.msra.mxu0 0.0
      %4978 = vmatpush.msra.mxu0 0.0
      %v4979 = vand.u32 %v3050, 4294901760
      %4980 = vmatpush.msra.mxu0 %v4979
      %v4981 = vand.u32 %v4808, 4294901760
      %4982 = vmatmul.f32.gmra.mxu0 %v4981
      %v4983 = vpop.f32.mrf.mxu0
      %v4984 = vadd.f32 %v4958, %v4983
      %v4985 = vand.u32 %v4811, 4294901760
      %4986 = vmatmul.f32.gmra.mxu0 %v4985
      %v4987 = vpop.f32.mrf.mxu0
      %v4988 = vadd.f32 %v4962, %v4987
      %4989 = vdwg.mxu0
      %v4990 = vld [vmem:[#allocation7] sm:$0xff]
      %v4991 = vld [vmem:[#allocation7 + $0x8] sm:$0xff]
      %v4992 = vmul.f32 %v4984, %v4990
      %v4993 = vmul.f32 %v4988, %v4991
      %v4994 = vadd.f32 %v4992, %v4771
      %v4995 = vadd.f32 %v4993, %v4773
      %4996 = vst [vmem:[#allocation7] sm:$0xff] %v4994
      %4997 = vst [vmem:[#allocation7 + $0x8] sm:$0xff] %v4995
    $region41: #{tpu_custom_call.1} parent=1 // pred_fallthru
      _
    // Predicated region
    $region42: #{tpu_custom_call.1} parent=1 // pred_check
      %p4998 = pneg %p467
    $region43: #{tpu_custom_call.1} parent=1 // pred_check_branch
      %5000 = sbr.rel (%p4998) target = $region45
    $region44: #{tpu_custom_call.1} parent=1 // pred_region
      %v5001 = vld [vmem:[%s9] sm:$0xf]
      %v5002 = vld [vmem:[%s8] sm:$0xff]
      %v5003 = vld [vmem:[%s8 + $0x8] sm:$0xff]
      %v5004 = vld [vmem:[#allocation3] sm:$0xf]
      %vm5005 = vcmp.gt.f32.partialorder %v5004, 0.0
      %v5006 = vrcp.pop %v5004
      %v5007 = vmul.f32 %v5004, %v5006
      %v5008 = vsub.f32 1.0, %v5007
      %v5009 = vmul.f32 %v5006, %v5008
      %v5010 = vadd.f32 %v5006, %v5009
      %vm5011 = vweird.f32 %v5004
      %vm5012 = vweird.f32 %v5006
      %vm5013 = vmor %vm5011, %vm5012
      %v5014 = vsel %vm5013, %v5006, %v5010
      %v5015 = vand.u32 2147483647, %v5004
      %vm5016 = vcmp.eq.f32.partialorder %v5015, 8.507059e+37
      %v5017 = vand.u32 %v5004, 2147483648
      %v5018 = vor.u32 1.1754944e-38, %v5017
      %v5019 = vsel %vm5016, %v5018, %v5014
      %v5020 = vmul.f32 1.0, %v5019
      %v5021 = vsel %vm5005, %v5020, 0.0
      %5022 = vxpose.xlu0.b32.start [1/16] %v5021, 128
      %5023 = vxpose.xlu0.b32.cont [2/16] 0.0, 128
      %5024 = vxpose.xlu0.b32.cont [3/16] 0.0, 128
      %5025 = vxpose.xlu0.b32.cont [4/16] 0.0, 128
      %5026 = vxpose.xlu0.b32.cont [5/16] 0.0, 128
      %5027 = vxpose.xlu0.b32.cont [6/16] 0.0, 128
      %5028 = vxpose.xlu0.b32.cont [7/16] 0.0, 128
      %5029 = vxpose.xlu0.b32.cont [8/16] 0.0, 128
      %5030 = vxpose.xlu0.b32.cont [9/16] 0.0, 128
      %5031 = vxpose.xlu0.b32.cont [10/16] 0.0, 128
      %5032 = vxpose.xlu0.b32.cont [11/16] 0.0, 128
      %5033 = vxpose.xlu0.b32.cont [12/16] 0.0, 128
      %5034 = vxpose.xlu0.b32.cont [13/16] 0.0, 128
      %5035 = vxpose.xlu0.b32.cont [14/16] 0.0, 128
      %5036 = vxpose.xlu0.b32.cont [15/16] 0.0, 128
      %5037 = vxpose.xlu0.b32.end [16/16] 0.0, 128
      %v5038 = vpop.trf.xlu0
      %v5039 = vpop.trf.xlu0
      %v5040 = vpop.trf.xlu0
      %v5041 = vpop.trf.xlu0
      %v5042 = vpop.trf.xlu0
      %v5043 = vpop.trf.xlu0
      %v5044 = vpop.trf.xlu0
      %v5045 = vpop.trf.xlu0
      %v5046 = vpop.trf.xlu0
      %v5047 = vpop.trf.xlu0
      %v5048 = vpop.trf.xlu0
      %v5049 = vpop.trf.xlu0
      %v5050 = vpop.trf.xlu0
      %v5051 = vpop.trf.xlu0
      %v5052 = vpop.trf.xlu0
      %v5053 = vpop.trf.xlu0
      %vm5054 = vcmask 31744
      %v5056 = vsel %vm5054, %v5038, 0
      %v5059 = vsel %vm5054, %v5039, 0
      %vm5061 = vcmask 1043456
      %v5063 = vsel %vm5061, %v5001, 0
      %5065 = vmatpush.msra.mxu0 0.0
      %5066 = vmatpush.msra.mxu0 0.0
      %5067 = vmatpush.msra.mxu0 0.0
      %5068 = vmatpush.msra.mxu0 0.0
      %5069 = vmatpush.msra.mxu0 0.0
      %5070 = vmatpush.msra.mxu0 0.0
      %5071 = vmatpush.msra.mxu0 0.0
      %5072 = vmatpush.msra.mxu0 0.0
      %5073 = vmatpush.msra.mxu0 0.0
      %5074 = vmatpush.msra.mxu0 0.0
      %5075 = vmatpush.msra.mxu0 0.0
      %5076 = vmatpush.msra.mxu0 0.0
      %5077 = vmatpush.msra.mxu0 0.0
      %5078 = vmatpush.msra.mxu0 0.0
      %5079 = vmatpush.msra.mxu0 0.0
      %v5080 = vand.u32 %v5063, 4294901760
      %5081 = vmatpush.msra.mxu0 %v5080
      %v5082 = vand.u32 %v5056, 4294901760
      %v5083 = vsub.f32 %v5056, %v5082
      %v5084 = vand.u32 %v5083, 4294901760
      %v5085 = vsub.f32 %v5083, %v5084
      %v5086 = vand.u32 %v5085, 4294901760
      %5087 = vmatmul.f32.gmra.mxu0 %v5086
      %v5088 = vpop.f32.mrf.mxu0
      %v5089 = vadd.f32 0.0, %v5088
      %v5090 = vand.u32 %v5059, 4294901760
      %v5091 = vsub.f32 %v5059, %v5090
      %v5092 = vand.u32 %v5091, 4294901760
      %v5093 = vsub.f32 %v5091, %v5092
      %v5094 = vand.u32 %v5093, 4294901760
      %5095 = vmatmul.f32.gmra.mxu0 %v5094
      %v5096 = vpop.f32.mrf.mxu0
      %v5097 = vadd.f32 0.0, %v5096
      %5098 = vdwg.mxu0
      %5099 = vmatpush.msra.mxu0 0.0
      %5100 = vmatpush.msra.mxu0 0.0
      %5101 = vmatpush.msra.mxu0 0.0
      %5102 = vmatpush.msra.mxu0 0.0
      %5103 = vmatpush.msra.mxu0 0.0
      %5104 = vmatpush.msra.mxu0 0.0
      %5105 = vmatpush.msra.mxu0 0.0
      %5106 = vmatpush.msra.mxu0 0.0
      %5107 = vmatpush.msra.mxu0 0.0
      %5108 = vmatpush.msra.mxu0 0.0
      %5109 = vmatpush.msra.mxu0 0.0
      %5110 = vmatpush.msra.mxu0 0.0
      %5111 = vmatpush.msra.mxu0 0.0
      %5112 = vmatpush.msra.mxu0 0.0
      %5113 = vmatpush.msra.mxu0 0.0
      %v5114 = vand.u32 %v5063, 4294901760
      %v5115 = vsub.f32 %v5063, %v5114
      %v5116 = vand.u32 %v5115, 4294901760
      %v5117 = vsub.f32 %v5115, %v5116
      %v5118 = vand.u32 %v5117, 4294901760
      %5119 = vmatpush.msra.mxu0 %v5118
      %v5120 = vand.u32 %v5056, 4294901760
      %5121 = vmatmul.f32.gmra.mxu0 %v5120
      %v5122 = vpop.f32.mrf.mxu0
      %v5123 = vadd.f32 %v5089, %v5122
      %v5124 = vand.u32 %v5059, 4294901760
      %5125 = vmatmul.f32.gmra.mxu0 %v5124
      %v5126 = vpop.f32.mrf.mxu0
      %v5127 = vadd.f32 %v5097, %v5126
      %5128 = vdwg.mxu0
      %5129 = vmatpush.msra.mxu0 0.0
      %5130 = vmatpush.msra.mxu0 0.0
      %5131 = vmatpush.msra.mxu0 0.0
      %5132 = vmatpush.msra.mxu0 0.0
      %5133 = vmatpush.msra.mxu0 0.0
      %5134 = vmatpush.msra.mxu0 0.0
      %5135 = vmatpush.msra.mxu0 0.0
      %5136 = vmatpush.msra.mxu0 0.0
      %5137 = vmatpush.msra.mxu0 0.0
      %5138 = vmatpush.msra.mxu0 0.0
      %5139 = vmatpush.msra.mxu0 0.0
      %5140 = vmatpush.msra.mxu0 0.0
      %5141 = vmatpush.msra.mxu0 0.0
      %5142 = vmatpush.msra.mxu0 0.0
      %5143 = vmatpush.msra.mxu0 0.0
      %v5144 = vand.u32 %v5063, 4294901760
      %v5145 = vsub.f32 %v5063, %v5144
      %5146 = vmatpush.msra.mxu0 %v5145
      %v5147 = vand.u32 %v5056, 4294901760
      %v5148 = vsub.f32 %v5056, %v5147
      %5149 = vmatmul.f32.gmra.mxu0 %v5148
      %v5150 = vpop.f32.mrf.mxu0
      %v5151 = vadd.f32 %v5123, %v5150
      %v5152 = vand.u32 %v5059, 4294901760
      %v5153 = vsub.f32 %v5059, %v5152
      %5154 = vmatmul.f32.gmra.mxu0 %v5153
      %v5155 = vpop.f32.mrf.mxu0
      %v5156 = vadd.f32 %v5127, %v5155
      %5157 = vdwg.mxu0
      %5158 = vmatpush.msra.mxu0 0.0
      %5159 = vmatpush.msra.mxu0 0.0
      %5160 = vmatpush.msra.mxu0 0.0
      %5161 = vmatpush.msra.mxu0 0.0
      %5162 = vmatpush.msra.mxu0 0.0
      %5163 = vmatpush.msra.mxu0 0.0
      %5164 = vmatpush.msra.mxu0 0.0
      %5165 = vmatpush.msra.mxu0 0.0
      %5166 = vmatpush.msra.mxu0 0.0
      %5167 = vmatpush.msra.mxu0 0.0
      %5168 = vmatpush.msra.mxu0 0.0
      %5169 = vmatpush.msra.mxu0 0.0
      %5170 = vmatpush.msra.mxu0 0.0
      %5171 = vmatpush.msra.mxu0 0.0
      %5172 = vmatpush.msra.mxu0 0.0
      %v5173 = vand.u32 %v5063, 4294901760
      %5174 = vmatpush.msra.mxu0 %v5173
      %v5175 = vand.u32 %v5056, 4294901760
      %v5176 = vsub.f32 %v5056, %v5175
      %v5177 = vand.u32 %v5176, 4294901760
      %5178 = vmatmul.f32.gmra.mxu0 %v5177
      %v5179 = vpop.f32.mrf.mxu0
      %v5180 = vadd.f32 %v5151, %v5179
      %v5181 = vand.u32 %v5059, 4294901760
      %v5182 = vsub.f32 %v5059, %v5181
      %v5183 = vand.u32 %v5182, 4294901760
      %5184 = vmatmul.f32.gmra.mxu0 %v5183
      %v5185 = vpop.f32.mrf.mxu0
      %v5186 = vadd.f32 %v5156, %v5185
      %5187 = vdwg.mxu0
      %5188 = vmatpush.msra.mxu0 0.0
      %5189 = vmatpush.msra.mxu0 0.0
      %5190 = vmatpush.msra.mxu0 0.0
      %5191 = vmatpush.msra.mxu0 0.0
      %5192 = vmatpush.msra.mxu0 0.0
      %5193 = vmatpush.msra.mxu0 0.0
      %5194 = vmatpush.msra.mxu0 0.0
      %5195 = vmatpush.msra.mxu0 0.0
      %5196 = vmatpush.msra.mxu0 0.0
      %5197 = vmatpush.msra.mxu0 0.0
      %5198 = vmatpush.msra.mxu0 0.0
      %5199 = vmatpush.msra.mxu0 0.0
      %5200 = vmatpush.msra.mxu0 0.0
      %5201 = vmatpush.msra.mxu0 0.0
      %5202 = vmatpush.msra.mxu0 0.0
      %v5203 = vand.u32 %v5063, 4294901760
      %v5204 = vsub.f32 %v5063, %v5203
      %v5205 = vand.u32 %v5204, 4294901760
      %5206 = vmatpush.msra.mxu0 %v5205
      %v5207 = vand.u32 %v5056, 4294901760
      %5208 = vmatmul.f32.gmra.mxu0 %v5207
      %v5209 = vpop.f32.mrf.mxu0
      %v5210 = vadd.f32 %v5180, %v5209
      %v5211 = vand.u32 %v5059, 4294901760
      %5212 = vmatmul.f32.gmra.mxu0 %v5211
      %v5213 = vpop.f32.mrf.mxu0
      %v5214 = vadd.f32 %v5186, %v5213
      %5215 = vdwg.mxu0
      %5216 = vmatpush.msra.mxu0 0.0
      %5217 = vmatpush.msra.mxu0 0.0
      %5218 = vmatpush.msra.mxu0 0.0
      %5219 = vmatpush.msra.mxu0 0.0
      %5220 = vmatpush.msra.mxu0 0.0
      %5221 = vmatpush.msra.mxu0 0.0
      %5222 = vmatpush.msra.mxu0 0.0
      %5223 = vmatpush.msra.mxu0 0.0
      %5224 = vmatpush.msra.mxu0 0.0
      %5225 = vmatpush.msra.mxu0 0.0
      %5226 = vmatpush.msra.mxu0 0.0
      %5227 = vmatpush.msra.mxu0 0.0
      %5228 = vmatpush.msra.mxu0 0.0
      %5229 = vmatpush.msra.mxu0 0.0
      %5230 = vmatpush.msra.mxu0 0.0
      %v5231 = vand.u32 %v5063, 4294901760
      %5232 = vmatpush.msra.mxu0 %v5231
      %v5233 = vand.u32 %v5056, 4294901760
      %5234 = vmatmul.f32.gmra.mxu0 %v5233
      %v5235 = vpop.f32.mrf.mxu0
      %v5236 = vadd.f32 %v5210, %v5235
      %v5237 = vand.u32 %v5059, 4294901760
      %5238 = vmatmul.f32.gmra.mxu0 %v5237
      %v5239 = vpop.f32.mrf.mxu0
      %v5240 = vadd.f32 %v5214, %v5239
      %5241 = vdwg.mxu0
      %v5242 = vld [vmem:[#allocation4] sm:$0xff]
      %v5243 = vld [vmem:[#allocation4 + $0x8] sm:$0xff]
      %v5244 = vmul.f32 %v5242, %v5236
      %v5245 = vmul.f32 %v5243, %v5240
      %v5246 = vadd.f32 %v5002, %v5244
      %v5247 = vadd.f32 %v5003, %v5245
      %v5248 = vld [vmem:[#allocation6] sm:$0xf]
      %vm5249 = vcmp.gt.f32.partialorder %v5248, 0.0
      %v5250 = vrcp.pop %v5248
      %v5251 = vmul.f32 %v5248, %v5250
      %v5252 = vsub.f32 1.0, %v5251
      %v5253 = vmul.f32 %v5250, %v5252
      %v5254 = vadd.f32 %v5250, %v5253
      %vm5255 = vweird.f32 %v5248
      %vm5256 = vweird.f32 %v5250
      %vm5257 = vmor %vm5255, %vm5256
      %v5258 = vsel %vm5257, %v5250, %v5254
      %v5259 = vand.u32 2147483647, %v5248
      %vm5260 = vcmp.eq.f32.partialorder %v5259, 8.507059e+37
      %v5261 = vand.u32 %v5248, 2147483648
      %v5262 = vor.u32 1.1754944e-38, %v5261
      %v5263 = vsel %vm5260, %v5262, %v5258
      %v5264 = vmul.f32 1.0, %v5263
      %v5265 = vsel %vm5249, %v5264, 0.0
      %5266 = vxpose.xlu0.b32.start [1/16] %v5265, 128
      %5267 = vxpose.xlu0.b32.cont [2/16] 0.0, 128
      %5268 = vxpose.xlu0.b32.cont [3/16] 0.0, 128
      %5269 = vxpose.xlu0.b32.cont [4/16] 0.0, 128
      %5270 = vxpose.xlu0.b32.cont [5/16] 0.0, 128
      %5271 = vxpose.xlu0.b32.cont [6/16] 0.0, 128
      %5272 = vxpose.xlu0.b32.cont [7/16] 0.0, 128
      %5273 = vxpose.xlu0.b32.cont [8/16] 0.0, 128
      %5274 = vxpose.xlu0.b32.cont [9/16] 0.0, 128
      %5275 = vxpose.xlu0.b32.cont [10/16] 0.0, 128
      %5276 = vxpose.xlu0.b32.cont [11/16] 0.0, 128
      %5277 = vxpose.xlu0.b32.cont [12/16] 0.0, 128
      %5278 = vxpose.xlu0.b32.cont [13/16] 0.0, 128
      %5279 = vxpose.xlu0.b32.cont [14/16] 0.0, 128
      %5280 = vxpose.xlu0.b32.cont [15/16] 0.0, 128
      %5281 = vxpose.xlu0.b32.end [16/16] 0.0, 128
      %v5282 = vpop.trf.xlu0
      %v5283 = vpop.trf.xlu0
      %v5284 = vpop.trf.xlu0
      %v5285 = vpop.trf.xlu0
      %v5286 = vpop.trf.xlu0
      %v5287 = vpop.trf.xlu0
      %v5288 = vpop.trf.xlu0
      %v5289 = vpop.trf.xlu0
      %v5290 = vpop.trf.xlu0
      %v5291 = vpop.trf.xlu0
      %v5292 = vpop.trf.xlu0
      %v5293 = vpop.trf.xlu0
      %v5294 = vpop.trf.xlu0
      %v5295 = vpop.trf.xlu0
      %v5296 = vpop.trf.xlu0
      %v5297 = vpop.trf.xlu0
      %v5299 = vsel %vm5054, %v5282, 0
      %v5302 = vsel %vm5054, %v5283, 0
      %5304 = vmatpush.msra.mxu0 0.0
      %5305 = vmatpush.msra.mxu0 0.0
      %5306 = vmatpush.msra.mxu0 0.0
      %5307 = vmatpush.msra.mxu0 0.0
      %5308 = vmatpush.msra.mxu0 0.0
      %5309 = vmatpush.msra.mxu0 0.0
      %5310 = vmatpush.msra.mxu0 0.0
      %5311 = vmatpush.msra.mxu0 0.0
      %5312 = vmatpush.msra.mxu0 0.0
      %5313 = vmatpush.msra.mxu0 0.0
      %5314 = vmatpush.msra.mxu0 0.0
      %5315 = vmatpush.msra.mxu0 0.0
      %5316 = vmatpush.msra.mxu0 0.0
      %5317 = vmatpush.msra.mxu0 0.0
      %5318 = vmatpush.msra.mxu0 0.0
      %v5319 = vand.u32 %v5063, 4294901760
      %5320 = vmatpush.msra.mxu0 %v5319
      %v5321 = vand.u32 %v5299, 4294901760
      %v5322 = vsub.f32 %v5299, %v5321
      %v5323 = vand.u32 %v5322, 4294901760
      %v5324 = vsub.f32 %v5322, %v5323
      %v5325 = vand.u32 %v5324, 4294901760
      %5326 = vmatmul.f32.gmra.mxu0 %v5325
      %v5327 = vpop.f32.mrf.mxu0
      %v5328 = vadd.f32 0.0, %v5327
      %v5329 = vand.u32 %v5302, 4294901760
      %v5330 = vsub.f32 %v5302, %v5329
      %v5331 = vand.u32 %v5330, 4294901760
      %v5332 = vsub.f32 %v5330, %v5331
      %v5333 = vand.u32 %v5332, 4294901760
      %5334 = vmatmul.f32.gmra.mxu0 %v5333
      %v5335 = vpop.f32.mrf.mxu0
      %v5336 = vadd.f32 0.0, %v5335
      %5337 = vdwg.mxu0
      %5338 = vmatpush.msra.mxu0 0.0
      %5339 = vmatpush.msra.mxu0 0.0
      %5340 = vmatpush.msra.mxu0 0.0
      %5341 = vmatpush.msra.mxu0 0.0
      %5342 = vmatpush.msra.mxu0 0.0
      %5343 = vmatpush.msra.mxu0 0.0
      %5344 = vmatpush.msra.mxu0 0.0
      %5345 = vmatpush.msra.mxu0 0.0
      %5346 = vmatpush.msra.mxu0 0.0
      %5347 = vmatpush.msra.mxu0 0.0
      %5348 = vmatpush.msra.mxu0 0.0
      %5349 = vmatpush.msra.mxu0 0.0
      %5350 = vmatpush.msra.mxu0 0.0
      %5351 = vmatpush.msra.mxu0 0.0
      %5352 = vmatpush.msra.mxu0 0.0
      %v5353 = vand.u32 %v5063, 4294901760
      %v5354 = vsub.f32 %v5063, %v5353
      %v5355 = vand.u32 %v5354, 4294901760
      %v5356 = vsub.f32 %v5354, %v5355
      %v5357 = vand.u32 %v5356, 4294901760
      %5358 = vmatpush.msra.mxu0 %v5357
      %v5359 = vand.u32 %v5299, 4294901760
      %5360 = vmatmul.f32.gmra.mxu0 %v5359
      %v5361 = vpop.f32.mrf.mxu0
      %v5362 = vadd.f32 %v5328, %v5361
      %v5363 = vand.u32 %v5302, 4294901760
      %5364 = vmatmul.f32.gmra.mxu0 %v5363
      %v5365 = vpop.f32.mrf.mxu0
      %v5366 = vadd.f32 %v5336, %v5365
      %5367 = vdwg.mxu0
      %5368 = vmatpush.msra.mxu0 0.0
      %5369 = vmatpush.msra.mxu0 0.0
      %5370 = vmatpush.msra.mxu0 0.0
      %5371 = vmatpush.msra.mxu0 0.0
      %5372 = vmatpush.msra.mxu0 0.0
      %5373 = vmatpush.msra.mxu0 0.0
      %5374 = vmatpush.msra.mxu0 0.0
      %5375 = vmatpush.msra.mxu0 0.0
      %5376 = vmatpush.msra.mxu0 0.0
      %5377 = vmatpush.msra.mxu0 0.0
      %5378 = vmatpush.msra.mxu0 0.0
      %5379 = vmatpush.msra.mxu0 0.0
      %5380 = vmatpush.msra.mxu0 0.0
      %5381 = vmatpush.msra.mxu0 0.0
      %5382 = vmatpush.msra.mxu0 0.0
      %v5383 = vand.u32 %v5063, 4294901760
      %v5384 = vsub.f32 %v5063, %v5383
      %5385 = vmatpush.msra.mxu0 %v5384
      %v5386 = vand.u32 %v5299, 4294901760
      %v5387 = vsub.f32 %v5299, %v5386
      %5388 = vmatmul.f32.gmra.mxu0 %v5387
      %v5389 = vpop.f32.mrf.mxu0
      %v5390 = vadd.f32 %v5362, %v5389
      %v5391 = vand.u32 %v5302, 4294901760
      %v5392 = vsub.f32 %v5302, %v5391
      %5393 = vmatmul.f32.gmra.mxu0 %v5392
      %v5394 = vpop.f32.mrf.mxu0
      %v5395 = vadd.f32 %v5366, %v5394
      %5396 = vdwg.mxu0
      %5397 = vmatpush.msra.mxu0 0.0
      %5398 = vmatpush.msra.mxu0 0.0
      %5399 = vmatpush.msra.mxu0 0.0
      %5400 = vmatpush.msra.mxu0 0.0
      %5401 = vmatpush.msra.mxu0 0.0
      %5402 = vmatpush.msra.mxu0 0.0
      %5403 = vmatpush.msra.mxu0 0.0
      %5404 = vmatpush.msra.mxu0 0.0
      %5405 = vmatpush.msra.mxu0 0.0
      %5406 = vmatpush.msra.mxu0 0.0
      %5407 = vmatpush.msra.mxu0 0.0
      %5408 = vmatpush.msra.mxu0 0.0
      %5409 = vmatpush.msra.mxu0 0.0
      %5410 = vmatpush.msra.mxu0 0.0
      %5411 = vmatpush.msra.mxu0 0.0
      %v5412 = vand.u32 %v5063, 4294901760
      %5413 = vmatpush.msra.mxu0 %v5412
      %v5414 = vand.u32 %v5299, 4294901760
      %v5415 = vsub.f32 %v5299, %v5414
      %v5416 = vand.u32 %v5415, 4294901760
      %5417 = vmatmul.f32.gmra.mxu0 %v5416
      %v5418 = vpop.f32.mrf.mxu0
      %v5419 = vadd.f32 %v5390, %v5418
      %v5420 = vand.u32 %v5302, 4294901760
      %v5421 = vsub.f32 %v5302, %v5420
      %v5422 = vand.u32 %v5421, 4294901760
      %5423 = vmatmul.f32.gmra.mxu0 %v5422
      %v5424 = vpop.f32.mrf.mxu0
      %v5425 = vadd.f32 %v5395, %v5424
      %5426 = vdwg.mxu0
      %5427 = vmatpush.msra.mxu0 0.0
      %5428 = vmatpush.msra.mxu0 0.0
      %5429 = vmatpush.msra.mxu0 0.0
      %5430 = vmatpush.msra.mxu0 0.0
      %5431 = vmatpush.msra.mxu0 0.0
      %5432 = vmatpush.msra.mxu0 0.0
      %5433 = vmatpush.msra.mxu0 0.0
      %5434 = vmatpush.msra.mxu0 0.0
      %5435 = vmatpush.msra.mxu0 0.0
      %5436 = vmatpush.msra.mxu0 0.0
      %5437 = vmatpush.msra.mxu0 0.0
      %5438 = vmatpush.msra.mxu0 0.0
      %5439 = vmatpush.msra.mxu0 0.0
      %5440 = vmatpush.msra.mxu0 0.0
      %5441 = vmatpush.msra.mxu0 0.0
      %v5442 = vand.u32 %v5063, 4294901760
      %v5443 = vsub.f32 %v5063, %v5442
      %v5444 = vand.u32 %v5443, 4294901760
      %5445 = vmatpush.msra.mxu0 %v5444
      %v5446 = vand.u32 %v5299, 4294901760
      %5447 = vmatmul.f32.gmra.mxu0 %v5446
      %v5448 = vpop.f32.mrf.mxu0
      %v5449 = vadd.f32 %v5419, %v5448
      %v5450 = vand.u32 %v5302, 4294901760
      %5451 = vmatmul.f32.gmra.mxu0 %v5450
      %v5452 = vpop.f32.mrf.mxu0
      %v5453 = vadd.f32 %v5425, %v5452
      %5454 = vdwg.mxu0
      %5455 = vmatpush.msra.mxu0 0.0
      %5456 = vmatpush.msra.mxu0 0.0
      %5457 = vmatpush.msra.mxu0 0.0
      %5458 = vmatpush.msra.mxu0 0.0
      %5459 = vmatpush.msra.mxu0 0.0
      %5460 = vmatpush.msra.mxu0 0.0
      %5461 = vmatpush.msra.mxu0 0.0
      %5462 = vmatpush.msra.mxu0 0.0
      %5463 = vmatpush.msra.mxu0 0.0
      %5464 = vmatpush.msra.mxu0 0.0
      %5465 = vmatpush.msra.mxu0 0.0
      %5466 = vmatpush.msra.mxu0 0.0
      %5467 = vmatpush.msra.mxu0 0.0
      %5468 = vmatpush.msra.mxu0 0.0
      %5469 = vmatpush.msra.mxu0 0.0
      %v5470 = vand.u32 %v5063, 4294901760
      %5471 = vmatpush.msra.mxu0 %v5470
      %v5472 = vand.u32 %v5299, 4294901760
      %5473 = vmatmul.f32.gmra.mxu0 %v5472
      %v5474 = vpop.f32.mrf.mxu0
      %v5475 = vadd.f32 %v5449, %v5474
      %v5476 = vand.u32 %v5302, 4294901760
      %5477 = vmatmul.f32.gmra.mxu0 %v5476
      %v5478 = vpop.f32.mrf.mxu0
      %v5479 = vadd.f32 %v5453, %v5478
      %5480 = vdwg.mxu0
      %v5481 = vld [vmem:[#allocation7] sm:$0xff]
      %v5482 = vld [vmem:[#allocation7 + $0x8] sm:$0xff]
      %v5483 = vmul.f32 %v5481, %v5475
      %v5484 = vmul.f32 %v5482, %v5479
      %v5485 = vadd.f32 %v5246, %v5483
      %v5486 = vadd.f32 %v5247, %v5484
      %5487 = vst [vmem:[#allocation11] sm:$0xff] %v5485
      %5488 = vst [vmem:[#allocation11 + $0x8] sm:$0xff] %v5486
    $region45: #{tpu_custom_call.1} parent=1 // pred_fallthru
      _
    // Predicated region
    $region46: #{tpu_custom_call.1} parent=1 // pred_check
      _
    $region47: #{tpu_custom_call.1} parent=1 // pred_check_branch
      %5490 = sbr.rel (0) target = $region49
    $region48: #{tpu_custom_call.1} parent=1 // pred_region
      %5492 = vsyncadd [#allocation12], 0
      %s5493 = sshll.u32 [#allocation11], 4
      %s5494 = int_to_ptr.vmem [resolvable:$true] %s5493
      %s5495 = sshll.u32 %s10, 4
      %s5496 = int_to_ptr.hbm [resolvable:$true] %s5495
      %5501 = dma.vmem_to_hbm [thread:$0]  %s5494, 256, %s5496, [#allocation12], 128, 128, 8
    $region49: #{tpu_custom_call.1} parent=1 // pred_fallthru
      _
    // Predicated region
    $region50: #{tpu_custom_call.1} parent=1 // pred_check
      _
    $region51: #{tpu_custom_call.1} parent=1 // pred_check_branch
      %5503 = sbr.rel (0) target = $region53
    $region52: #{tpu_custom_call.1} parent=1 // pred_region
      %5505 = dma.done [#allocation12], 256
    $region53: #{tpu_custom_call.1} parent=1 // pred_fallthru
      _
    %5506 = vsyncpa [#allocation12], 1

</llo_original>
